<compile_context>
chip_gen: v6e
topology: v6e:2x2x1
jax: 0.10.0
libtpu: 0.0.40
codegen_flags: <defaults>
</compile_context>

<pallas_src>
import math
import functools

import jax
import jax.numpy as jnp
from jax import lax
from jax.experimental import pallas as pl
from jax.experimental.pallas import tpu as pltpu

# ----------------------- toy KoGPT2 config (lane-dense) -----------------------
VOCAB = 1000          # toy vocab, intentionally NOT a multiple of the tile (real: 50257)
N_CTX = 16            # max positions
D = 128               # hidden size, multiple of 128 (real: 768)
H = 2                 # attention heads (real: 12)
DH = D // H           # head dim
N_LAYER = 2           # transformer blocks (real: 12)
B = 2                 # batch
S = 8                 # sequence length
LN_EPS = 1e-5
TN_VOCAB = 512        # LM-head vocab tile (512..2048 per review)
VOCAB_PAD = pl.cdiv(VOCAB, TN_VOCAB) * TN_VOCAB   # padded vocab for the LM head
VMEM_LIMIT = 32 * 1024 * 1024


# ----------------------------- in-kernel helpers (f32) ---------------------------
def _layernorm_f32(x, g, b):
    mu = jnp.mean(x, axis=-1, keepdims=True)
    var = jnp.mean((x - mu) * (x - mu), axis=-1, keepdims=True)
    return (x - mu) * lax.rsqrt(var + LN_EPS) * g + b


def _gelu_new_f32(x):
    # HF gelu_new: 0.5*x*(1+tanh(sqrt(2/pi)*(x+0.044715*x^3)))
    return 0.5 * x * (1.0 + jnp.tanh(0.7978845608028654 * (x + 0.044715 * x * x * x)))


# ----------------------------- fused transformer block ---------------------------
def block_kernel(x_ref,
                 ln1_g_ref, ln1_b_ref,
                 wqkv_ref, bqkv_ref,
                 wproj_ref, bproj_ref,
                 ln2_g_ref, ln2_b_ref,
                 wfc_ref, bfc_ref, wmp_ref, bmp_ref,
                 lnf_g_ref, lnf_b_ref,
                 o_ref, *, seq, n_heads, head_dim, hidden, final_ln):
    """One GPT-2 block for one batch element; residual stream never leaves VMEM."""
    scale = 1.0 / math.sqrt(head_dim)
    x = x_ref[...].astype(jnp.float32)                        # (S, D), f32 math

    # ---------- attention half ----------
    h = _layernorm_f32(x, ln1_g_ref[...], ln1_b_ref[...]).astype(jnp.bfloat16)
    # dense fused QKV projection: one (S,D)x(D,3D) matmul (lane-dense N)
    qkv = jnp.dot(h, wqkv_ref[...], preferred_element_type=jnp.float32) + bqkv_ref[...]

    def heads(a):  # (S, D) f32 -> (H, S, DH) bf16 via static slices + stack
        return jnp.stack(
            [a[:, i * head_dim:(i + 1) * head_dim] for i in range(n_heads)],
            axis=0).astype(jnp.bfloat16)

    # TODO(synk): at real H=12 / S~1024 move heads to a grid axis and stream KV
    #             tiles flash-style instead of materializing (H,S,S) scores.
    q = heads(qkv[:, :hidden])
    k = heads(qkv[:, hidden:2 * hidden])
    v = heads(qkv[:, 2 * hidden:])

    row = lax.broadcasted_iota(jnp.int32, (seq, seq), 0)
    col = lax.broadcasted_iota(jnp.int32, (seq, seq), 1)
    causal = (col <= row)[None, :, :]                          # (1, S, S)

    s = jnp.einsum("hqd,hkd->hqk", q, k,
                   preferred_element_type=jnp.float32) * scale
    s = jnp.where(causal, s, jnp.float32(-1e9))                # mask + softmax in f32
    m = jnp.max(s, axis=-1, keepdims=True)
    p = jnp.exp(s - m)
    p = p * pl.reciprocal(jnp.sum(p, axis=-1, keepdims=True), approx=True)

    o = jnp.einsum("hqk,hkd->hqd", p.astype(jnp.bfloat16), v,
                   preferred_element_type=jnp.float32)         # (H, S, DH)
    # output projection: per-head weight rows, dense N=D output columns,
    # vectorized over heads (no Python matmul loop) and reduced over heads.
    attn = jnp.sum(
        jnp.einsum("hsd,hdo->hso", o.astype(jnp.bfloat16), wproj_ref[...],
                   preferred_element_type=jnp.float32), axis=0) + bproj_ref[...]
    x = x + attn

    # ---------- MLP half ----------
    # TODO(synk): at real D=768/3072 tile K/N with an f32 VMEM accumulator.
    h2 = _layernorm_f32(x, ln2_g_ref[...], ln2_b_ref[...]).astype(jnp.bfloat16)
    m1 = jnp.dot(h2, wfc_ref[...], preferred_element_type=jnp.float32) + bfc_ref[...]
    m1 = _gelu_new_f32(m1)
    x = x + jnp.dot(m1.astype(jnp.bfloat16), wmp_ref[...],
                    preferred_element_type=jnp.float32) + bmp_ref[...]

    # final LayerNorm fused into the last block (hoisted out of the LM head)
    if final_ln:
        x = _layernorm_f32(x, lnf_g_ref[...], lnf_b_ref[...])

    o_ref[...] = x.astype(o_ref.dtype)


def gpt2_block(x, layer, lnf_g, lnf_b, *, final_ln):
    Bb, Ss, Dd = x.shape
    in_arrays = [
        x,
        layer["ln1_g"], layer["ln1_b"],
        layer["wqkv"], layer["bqkv"],
        layer["wproj"], layer["bproj"],
        layer["ln2_g"], layer["ln2_b"],
        layer["wfc"], layer["bfc"], layer["wmp"], layer["bmp"],
        lnf_g, lnf_b,
    ]

    def const_spec(a):  # weights: constant block index -> stay VMEM-resident
        nd = a.ndim
        return pl.BlockSpec(a.shape, lambda b, nd=nd: (0,) * nd)

    in_specs = [pl.BlockSpec((None, Ss, Dd), lambda b: (b, 0, 0))] \
        + [const_spec(a) for a in in_arrays[1:]]

    kernel = functools.partial(block_kernel, seq=Ss, n_heads=H, head_dim=DH,
                               hidden=Dd, final_ln=final_ln)
    return pl.pallas_call(
        kernel,
        out_shape=jax.ShapeDtypeStruct((Bb, Ss, Dd), jnp.bfloat16),
        grid=(Bb,),                                   # real grid over tokens (batch)
        in_specs=in_specs,
        out_specs=pl.BlockSpec((None, Ss, Dd), lambda b: (b, 0, 0)),
        compiler_params=pltpu.CompilerParams(
            dimension_semantics=("parallel",),        # v7x: split across 2 TCs
            vmem_limit_bytes=VMEM_LIMIT),
    )(*in_arrays)


# ----------------------------- LM head (tied embedding) --------------------------
def lm_head_kernel(x_ref, wte_ref, o_ref):
    # input is already final-layernormed (fused into last block); pure matmul,
    # contracting on the K axis of the UNtransposed (Vtile, D) embedding block.
    logits = lax.dot_general(x_ref[...], wte_ref[...], (((1,), (1,)), ((), ())),
                             preferred_element_type=jnp.float32)
    o_ref[...] = logits.astype(o_ref.dtype)           # bf16 store (no f32 logits)


def lm_head(x_ln, wte_pad):
    Mm, Dd = x_ln.shape
    VP = wte_pad.shape[0]
    TM = min(Mm, 256)
    assert Mm % TM == 0 and VP % TN_VOCAB == 0
    # TODO(synk): when labels are given at real scale, fuse log-softmax + gather
    #             into this kernel and return only the per-token loss.
    return pl.pallas_call(
        lm_head_kernel,
        out_shape=jax.ShapeDtypeStruct((Mm, VP), jnp.bfloat16),
        grid=(Mm // TM, VP // TN_VOCAB),
        in_specs=[
            pl.BlockSpec((TM, Dd), lambda i, j: (i, 0)),          # resident across vocab tiles
            pl.BlockSpec((TN_VOCAB, Dd), lambda i, j: (j, 0)),    # streamed wte tiles
        ],
        out_specs=pl.BlockSpec((TM, TN_VOCAB), lambda i, j: (i, j)),
        compiler_params=pltpu.CompilerParams(
            dimension_semantics=("parallel", "parallel"),
            vmem_limit_bytes=VMEM_LIMIT),
    )(x_ln, wte_pad)


# ----------------------------- parameters & forward --------------------------------
def init_params(key):
    keys = iter(jax.random.split(key, 128))

    def nrm(shape, dtype=jnp.float32):
        return (0.02 * jax.random.normal(next(keys), shape)).astype(dtype)

    wte = nrm((VOCAB, D), jnp.float32)
    wte_pad = jnp.zeros((VOCAB_PAD, D), jnp.float32).at[:VOCAB].set(wte)

    params = {
        "wte": wte_pad.astype(jnp.bfloat16),   # tied embedding, padded to tile multiple
        "wpe": nrm((N_CTX, D)),
        "lnf_g": jnp.ones((1, D), jnp.float32),
        "lnf_b": jnp.zeros((1, D), jnp.float32),
        "layers": [],
    }
    for _ in range(N_LAYER):
        params["layers"].append({
            "ln1_g": jnp.ones((1, D), jnp.float32), "ln1_b": jnp.zeros((1, D), jnp.float32),
            # GPT-2 c_attn fused (D, 3D) — single dense QKV matmul
            "wqkv": nrm((D, 3 * D), jnp.bfloat16), "bqkv": jnp.zeros((1, 3 * D), jnp.float32),
            # c_proj (D, D) split by head rows -> (H, DH, D); dense N=D per head
            "wproj": nrm((H, DH, D), jnp.bfloat16), "bproj": jnp.zeros((1, D), jnp.float32),
            "ln2_g": jnp.ones((1, D), jnp.float32), "ln2_b": jnp.zeros((1, D), jnp.float32),
            "wfc": nrm((D, 4 * D), jnp.bfloat16), "bfc": jnp.zeros((1, 4 * D), jnp.float32),
            "wmp": nrm((4 * D, D), jnp.bfloat16), "bmp": jnp.zeros((1, D), jnp.float32),
        })
    return params


def dialog_kogpt2_forward(params, input_ids, labels=None):
    Bb, Ss = input_ids.shape
    # embedding gather is glue (data-dependent gather; no clean Pallas win here)
    emb = params["wte"][input_ids].astype(jnp.float32) \
        + params["wpe"][jnp.arange(Ss)][None, :, :]
    x = emb.astype(jnp.bfloat16)                               # (B, S, D) bf16 residual

    n = len(params["layers"])
    for li, layer in enumerate(params["layers"]):
        # TODO(synk): cross-call prefetch of layer li+1 weights for decode-size M.
        x = gpt2_block(x, layer, params["lnf_g"], params["lnf_b"],
                       final_ln=(li == n - 1))

    logits_pad = lm_head(x.reshape(Bb * Ss, D), params["wte"])
    logits = logits_pad[:, :VOCAB].reshape(Bb, Ss, VOCAB)      # drop padded vocab cols

    if labels is None:
        return logits

    # HF GPT2LMHeadModel loss: shift + mean cross-entropy (glue, cheap at toy shapes)
    # TODO(synk): real KoGPT2 training masks pad tokens (ignore_index=-100); not modeled.
    shift_logits = logits[:, :-1, :].reshape(-1, VOCAB).astype(jnp.float32)
    shift_labels = labels[:, 1:].reshape(-1)
    logp = jax.nn.log_softmax(shift_logits, axis=-1)
    loss = -jnp.mean(jnp.take_along_axis(logp, shift_labels[:, None], axis=-1))
    return loss, logits


# TODO(synk): generate() (top-k/top-p/temperature sampling loop) is inference decoding,
#             not part of forward(); not implemented as a kernel.

if __name__ == "__main__":
    root = jax.random.PRNGKey(0)
    k_params, k_ids = jax.random.split(root)
    params = init_params(k_params)
    input_ids = jax.random.randint(k_ids, (B, S), 0, VOCAB, dtype=jnp.int32)

    fwd_logits = jax.jit(lambda p, ids: dialog_kogpt2_forward(p, ids))
    fwd_loss = jax.jit(lambda p, ids, lab: dialog_kogpt2_forward(p, ids, lab))

    # forward without labels -> logits (B, S, VOCAB)
    logits = fwd_logits(params, input_ids)
    # forward with labels -> (loss, logits), matching the PyTorch module's label path
    loss, logits2 = fwd_loss(params, input_ids, input_ids)

    jax.block_until_ready((logits, loss, logits2))
    assert logits.shape == (B, S, VOCAB)
    assert logits2.shape == (B, S, VOCAB)
    assert loss.shape == ()
    assert bool(jnp.isfinite(loss))
    print("KERNEL_OK")
</pallas_src>

<mosaic_0001>
module attributes {stable_mosaic.version = 11 : i64} {
  func.func @lm_head_kernel(%arg0: i32, %arg1: i32, %arg2: memref<16x128xbf16, #tpu.memory_space<vmem>>, %arg3: memref<512x128xbf16, #tpu.memory_space<vmem>>, %arg4: memref<16x512xbf16, #tpu.memory_space<vmem>>) attributes {dimension_semantics = [#tpu.dimension_semantics<parallel>, #tpu.dimension_semantics<parallel>], iteration_bounds = array<i64: 1, 2>, scalar_prefetch = 0 : i64, scratch_operands = 0 : i64, tpu.core_type = #tpu.core_type<tc>, window_params = [{transform_indices = @transform_0, window_bounds = array<i64: 16, 128>}, {transform_indices = @transform_1, window_bounds = array<i64: 512, 128>}, {transform_indices = @transform_2, window_bounds = array<i64: 16, 512>}]} {
    %c0 = arith.constant 0 : index
    %c0_0 = arith.constant 0 : index
    %0 = vector.load %arg2[%c0, %c0_0] : memref<16x128xbf16, #tpu.memory_space<vmem>>, vector<16x128xbf16>
    %c0_1 = arith.constant 0 : index
    %c0_2 = arith.constant 0 : index
    %1 = vector.load %arg3[%c0_1, %c0_2] : memref<512x128xbf16, #tpu.memory_space<vmem>>, vector<512x128xbf16>
    %cst = arith.constant dense<0.000000e+00> : vector<16x512xf32>
    %2 = tpu.matmul %0, %1, %cst {dimension_numbers = #tpu.dot_dimension_numbers<[1], [1], [0], [0], [0, 0, 1, 0], [], []>} : vector<16x128xbf16>, vector<512x128xbf16>, vector<16x512xf32> -> vector<16x512xf32>
    %3 = arith.truncf %2 : vector<16x512xf32> to vector<16x512xbf16>
    %c0_3 = arith.constant 0 : index
    %c0_4 = arith.constant 0 : index
    %4 = vector.load %arg4[%c0_3, %c0_4] : memref<16x512xbf16, #tpu.memory_space<vmem>>, vector<16x512xbf16>
    tpu.vector_store %arg4[%c0_3, %c0_4], %3 {strides = array<i32>} : memref<16x512xbf16, #tpu.memory_space<vmem>>, vector<16x512xbf16>,
    return
  }
  func.func @transform_0(%arg0: i32, %arg1: i32) -> (i32, i32) {
    %c0_i32 = arith.constant 0 : i32
    %c0_i32_0 = arith.constant 0 : i32
    return %arg0, %c0_i32 : i32, i32
  }
  func.func @transform_1(%arg0: i32, %arg1: i32) -> (i32, i32) {
    %c0_i32 = arith.constant 0 : i32
    %c0_i32_0 = arith.constant 0 : i32
    return %arg1, %c0_i32 : i32, i32
  }
  func.func @transform_2(%arg0: i32, %arg1: i32) -> (i32, i32) {
    %c0_i32 = arith.constant 0 : i32
    return %arg0, %arg1 : i32, i32
  }
}

module attributes {stable_mosaic.version = 11 : i64} {
  func.func @block_kernel(%arg0: i32, %arg1: memref<1x8x128xbf16, #tpu.memory_space<vmem>>, %arg2: memref<1x128xf32, #tpu.memory_space<vmem>>, %arg3: memref<1x128xf32, #tpu.memory_space<vmem>>, %arg4: memref<128x384xbf16, #tpu.memory_space<vmem>>, %arg5: memref<1x384xf32, #tpu.memory_space<vmem>>, %arg6: memref<2x64x128xbf16, #tpu.memory_space<vmem>>, %arg7: memref<1x128xf32, #tpu.memory_space<vmem>>, %arg8: memref<1x128xf32, #tpu.memory_space<vmem>>, %arg9: memref<1x128xf32, #tpu.memory_space<vmem>>, %arg10: memref<128x512xbf16, #tpu.memory_space<vmem>>, %arg11: memref<1x512xf32, #tpu.memory_space<vmem>>, %arg12: memref<512x128xbf16, #tpu.memory_space<vmem>>, %arg13: memref<1x128xf32, #tpu.memory_space<vmem>>, %arg14: memref<1x128xf32, #tpu.memory_space<vmem>>, %arg15: memref<1x128xf32, #tpu.memory_space<vmem>>, %arg16: memref<1x8x128xbf16, #tpu.memory_space<vmem>>) attributes {dimension_semantics = [#tpu.dimension_semantics<parallel>], iteration_bounds = array<i64: 2>, scalar_prefetch = 0 : i64, scratch_operands = 0 : i64, tpu.core_type = #tpu.core_type<tc>, window_params = [{transform_indices = @transform_0, window_bounds = array<i64: 1, 8, 128>}, {pipeline_mode = #tpu.pipeline_mode<synchronous>, transform_indices = @transform_1, window_bounds = array<i64: 1, 128>}, {pipeline_mode = #tpu.pipeline_mode<synchronous>, transform_indices = @transform_2, window_bounds = array<i64: 1, 128>}, {pipeline_mode = #tpu.pipeline_mode<synchronous>, transform_indices = @transform_3, window_bounds = array<i64: 128, 384>}, {pipeline_mode = #tpu.pipeline_mode<synchronous>, transform_indices = @transform_4, window_bounds = array<i64: 1, 384>}, {pipeline_mode = #tpu.pipeline_mode<synchronous>, transform_indices = @transform_5, window_bounds = array<i64: 2, 64, 128>}, {pipeline_mode = #tpu.pipeline_mode<synchronous>, transform_indices = @transform_6, window_bounds = array<i64: 1, 128>}, {pipeline_mode = #tpu.pipeline_mode<synchronous>, transform_indices = @transform_7, window_bounds = array<i64: 1, 128>}, {pipeline_mode = #tpu.pipeline_mode<synchronous>, transform_indices = @transform_8, window_bounds = array<i64: 1, 128>}, {pipeline_mode = #tpu.pipeline_mode<synchronous>, transform_indices = @transform_9, window_bounds = array<i64: 128, 512>}, {pipeline_mode = #tpu.pipeline_mode<synchronous>, transform_indices = @transform_10, window_bounds = array<i64: 1, 512>}, {pipeline_mode = #tpu.pipeline_mode<synchronous>, transform_indices = @transform_11, window_bounds = array<i64: 512, 128>}, {pipeline_mode = #tpu.pipeline_mode<synchronous>, transform_indices = @transform_12, window_bounds = array<i64: 1, 128>}, {pipeline_mode = #tpu.pipeline_mode<synchronous>, transform_indices = @transform_13, window_bounds = array<i64: 1, 128>}, {pipeline_mode = #tpu.pipeline_mode<synchronous>, transform_indices = @transform_14, window_bounds = array<i64: 1, 128>}, {transform_indices = @transform_15, window_bounds = array<i64: 1, 8, 128>}]} {
    %c0 = arith.constant 0 : index
    %c0_0 = arith.constant 0 : index
    %c0_1 = arith.constant 0 : index
    %0 = vector.load %arg1[%c0, %c0_0, %c0_1] : memref<1x8x128xbf16, #tpu.memory_space<vmem>>, vector<1x8x128xbf16>
    %1 = vector.shape_cast %0 : vector<1x8x128xbf16> to vector<8x128xbf16>
    %2 = arith.extf %1 : vector<8x128xbf16> to vector<8x128xf32>
    %c0_2 = arith.constant 0 : index
    %c0_3 = arith.constant 0 : index
    %3 = vector.load %arg2[%c0_2, %c0_3] : memref<1x128xf32, #tpu.memory_space<vmem>>, vector<1x128xf32>
    %c0_4 = arith.constant 0 : index
    %c0_5 = arith.constant 0 : index
    %4 = vector.load %arg3[%c0_4, %c0_5] : memref<1x128xf32, #tpu.memory_space<vmem>>, vector<1x128xf32>
    %cst = arith.constant dense<0.000000e+00> : vector<8xf32>
    %5 = vector.multi_reduction <add>, %2, %cst [1] : vector<8x128xf32> to vector<8xf32>
    %6 = vector.shape_cast %5 : vector<8xf32> to vector<8x1xf32>
    %cst_6 = arith.constant 1.280000e+02 : f32
    %7 = vector.broadcast %cst_6 : f32 to vector<8x1xf32>
    %8 = arith.divf %6, %7 : vector<8x1xf32>
    %9 = vector.broadcast %8 : vector<8x1xf32> to vector<8x128xf32>
    %10 = arith.subf %2, %9 : vector<8x128xf32>
    %11 = vector.broadcast %8 : vector<8x1xf32> to vector<8x128xf32>
    %12 = arith.subf %2, %11 : vector<8x128xf32>
    %13 = arith.mulf %10, %12 : vector<8x128xf32>
    %cst_7 = arith.constant dense<0.000000e+00> : vector<8xf32>
    %14 = vector.multi_reduction <add>, %13, %cst_7 [1] : vector<8x128xf32> to vector<8xf32>
    %15 = vector.shape_cast %14 : vector<8xf32> to vector<8x1xf32>
    %cst_8 = arith.constant 1.280000e+02 : f32
    %16 = vector.broadcast %cst_8 : f32 to vector<8x1xf32>
    %17 = arith.divf %15, %16 : vector<8x1xf32>
    %18 = vector.broadcast %8 : vector<8x1xf32> to vector<8x128xf32>
    %19 = arith.subf %2, %18 : vector<8x128xf32>
    %cst_9 = arith.constant 9.99999974E-6 : f32
    %20 = vector.broadcast %cst_9 : f32 to vector<8x1xf32>
    %21 = arith.addf %17, %20 : vector<8x1xf32>
    %22 = math.rsqrt %21 : vector<8x1xf32>
    %23 = vector.broadcast %22 : vector<8x1xf32> to vector<8x128xf32>
    %24 = arith.mulf %19, %23 : vector<8x128xf32>
    %25 = vector.broadcast %3 : vector<1x128xf32> to vector<8x128xf32>
    %26 = arith.mulf %24, %25 : vector<8x128xf32>
    %27 = vector.broadcast %4 : vector<1x128xf32> to vector<8x128xf32>
    %28 = arith.addf %26, %27 : vector<8x128xf32>
    %29 = arith.truncf %28 : vector<8x128xf32> to vector<8x128xbf16>
    %c0_10 = arith.constant 0 : index
    %c0_11 = arith.constant 0 : index
    %30 = vector.load %arg4[%c0_10, %c0_11] : memref<128x384xbf16, #tpu.memory_space<vmem>>, vector<128x384xbf16>
    %cst_12 = arith.constant dense<0.000000e+00> : vector<8x384xf32>
    %31 = tpu.matmul %29, %30, %cst_12 {dimension_numbers = #tpu.dot_dimension_numbers<[1], [0], [0], [1], [0, 0, 1, 1], [], []>} : vector<8x128xbf16>, vector<128x384xbf16>, vector<8x384xf32> -> vector<8x384xf32>
    %c0_13 = arith.constant 0 : index
    %c0_14 = arith.constant 0 : index
    %32 = vector.load %arg5[%c0_13, %c0_14] : memref<1x384xf32, #tpu.memory_space<vmem>>, vector<1x384xf32>
    %33 = vector.broadcast %32 : vector<1x384xf32> to vector<8x384xf32>
    %34 = arith.addf %31, %33 : vector<8x384xf32>
    %35 = vector.extract_strided_slice %34 {offsets = [0, 0], sizes = [8, 128], strides = [1, 1]} : vector<8x384xf32> to vector<8x128xf32>
    %36 = vector.extract_strided_slice %35 {offsets = [0, 0], sizes = [8, 64], strides = [1, 1]} : vector<8x128xf32> to vector<8x64xf32>
    %37 = vector.extract_strided_slice %35 {offsets = [0, 64], sizes = [8, 64], strides = [1, 1]} : vector<8x128xf32> to vector<8x64xf32>
    %38 = vector.shape_cast %36 : vector<8x64xf32> to vector<1x8x64xf32>
    %39 = vector.shape_cast %37 : vector<8x64xf32> to vector<1x8x64xf32>
    %40 = tpu.concatenate %38, %39 in 0 : vector<1x8x64xf32>, vector<1x8x64xf32> -> vector<2x8x64xf32>
    %41 = arith.truncf %40 : vector<2x8x64xf32> to vector<2x8x64xbf16>
    %42 = vector.extract_strided_slice %34 {offsets = [0, 128], sizes = [8, 128], strides = [1, 1]} : vector<8x384xf32> to vector<8x128xf32>
    %43 = vector.extract_strided_slice %42 {offsets = [0, 0], sizes = [8, 64], strides = [1, 1]} : vector<8x128xf32> to vector<8x64xf32>
    %44 = vector.extract_strided_slice %42 {offsets = [0, 64], sizes = [8, 64], strides = [1, 1]} : vector<8x128xf32> to vector<8x64xf32>
    %45 = vector.shape_cast %43 : vector<8x64xf32> to vector<1x8x64xf32>
    %46 = vector.shape_cast %44 : vector<8x64xf32> to vector<1x8x64xf32>
    %47 = tpu.concatenate %45, %46 in 0 : vector<1x8x64xf32>, vector<1x8x64xf32> -> vector<2x8x64xf32>
    %48 = arith.truncf %47 : vector<2x8x64xf32> to vector<2x8x64xbf16>
    %49 = vector.extract_strided_slice %34 {offsets = [0, 256], sizes = [8, 128], strides = [1, 1]} : vector<8x384xf32> to vector<8x128xf32>
    %50 = vector.extract_strided_slice %49 {offsets = [0, 0], sizes = [8, 64], strides = [1, 1]} : vector<8x128xf32> to vector<8x64xf32>
    %51 = vector.extract_strided_slice %49 {offsets = [0, 64], sizes = [8, 64], strides = [1, 1]} : vector<8x128xf32> to vector<8x64xf32>
    %52 = vector.shape_cast %50 : vector<8x64xf32> to vector<1x8x64xf32>
    %53 = vector.shape_cast %51 : vector<8x64xf32> to vector<1x8x64xf32>
    %54 = tpu.concatenate %52, %53 in 0 : vector<1x8x64xf32>, vector<1x8x64xf32> -> vector<2x8x64xf32>
    %55 = arith.truncf %54 : vector<2x8x64xf32> to vector<2x8x64xbf16>
    %56 = tpu.iota {dimensions = array<i32: 0>} : vector<8x8xi32>
    %57 = tpu.iota {dimensions = array<i32: 1>} : vector<8x8xi32>
    %58 = arith.cmpi sle, %57, %56 : vector<8x8xi32>
    %59 = vector.shape_cast %58 : vector<8x8xi1> to vector<1x8x8xi1>
    "tpu.trace_start"() <{level = 10 : i32, message = "hqd,hkd->hqk"}> : () -> ()
    %cst_15 = arith.constant dense<0.000000e+00> : vector<2x8x8xf32>
    %60 = tpu.matmul %41, %48, %cst_15 {dimension_numbers = #tpu.dot_dimension_numbers<[2], [2], [1], [1], [0, 0, 0, 1, 1, 1], [0], [0]>} : vector<2x8x64xbf16>, vector<2x8x64xbf16>, vector<2x8x8xf32> -> vector<2x8x8xf32>
    "tpu.trace_stop"() : () -> ()
    %cst_16 = arith.constant 1.250000e-01 : f32
    %61 = vector.broadcast %cst_16 : f32 to vector<2x8x8xf32>
    %62 = arith.mulf %60, %61 : vector<2x8x8xf32>
    %cst_17 = arith.constant -1.000000e+09 : f32
    %63 = vector.shape_cast %59 : vector<1x8x8xi1> to vector<1x8x8xi1>
    %64 = vector.broadcast %63 : vector<1x8x8xi1> to vector<2x8x8xi1>
    %65 = vector.broadcast %cst_17 : f32 to vector<2x8x8xf32>
    %66 = arith.select %64, %62, %65 : vector<2x8x8xi1>, vector<2x8x8xf32>
    %cst_18 = arith.constant dense<0xFF800000> : vector<2x8xf32>
    %67 = vector.multi_reduction <maximumf>, %66, %cst_18 [2] : vector<2x8x8xf32> to vector<2x8xf32>
    %68 = vector.shape_cast %67 : vector<2x8xf32> to vector<2x8x1xf32>
    %69 = vector.broadcast %68 : vector<2x8x1xf32> to vector<2x8x8xf32>
    %70 = arith.subf %66, %69 : vector<2x8x8xf32>
    %71 = math.exp %70 : vector<2x8x8xf32>
    %cst_19 = arith.constant dense<0.000000e+00> : vector<2x8xf32>
    %72 = vector.multi_reduction <add>, %71, %cst_19 [2] : vector<2x8x8xf32> to vector<2x8xf32>
    %73 = vector.shape_cast %72 : vector<2x8xf32> to vector<2x8x1xf32>
    %74 = tpu.reciprocal %73 {approx = true} : vector<2x8x1xf32> -> vector<2x8x1xf32>
    %75 = vector.broadcast %74 : vector<2x8x1xf32> to vector<2x8x8xf32>
    %76 = arith.mulf %71, %75 : vector<2x8x8xf32>
    %77 = arith.truncf %76 : vector<2x8x8xf32> to vector<2x8x8xbf16>
    "tpu.trace_start"() <{level = 10 : i32, message = "hqk,hkd->hqd"}> : () -> ()
    %cst_20 = arith.constant dense<0.000000e+00> : vector<2x8x64xf32>
    %78 = tpu.matmul %77, %55, %cst_20 {dimension_numbers = #tpu.dot_dimension_numbers<[2], [1], [1], [2], [0, 0, 0, 1, 1, 2], [0], [0]>} : vector<2x8x8xbf16>, vector<2x8x64xbf16>, vector<2x8x64xf32> -> vector<2x8x64xf32>
    "tpu.trace_stop"() : () -> ()
    %79 = arith.truncf %78 : vector<2x8x64xf32> to vector<2x8x64xbf16>
    %c0_21 = arith.constant 0 : index
    %c0_22 = arith.constant 0 : index
    %c0_23 = arith.constant 0 : index
    %80 = vector.load %arg6[%c0_21, %c0_22, %c0_23] : memref<2x64x128xbf16, #tpu.memory_space<vmem>>, vector<2x64x128xbf16>
    "tpu.trace_start"() <{level = 10 : i32, message = "hsd,hdo->hso"}> : () -> ()
    %cst_24 = arith.constant dense<0.000000e+00> : vector<2x8x128xf32>
    %81 = tpu.matmul %79, %80, %cst_24 {dimension_numbers = #tpu.dot_dimension_numbers<[2], [1], [1], [2], [0, 0, 0, 1, 1, 2], [0], [0]>} : vector<2x8x64xbf16>, vector<2x64x128xbf16>, vector<2x8x128xf32> -> vector<2x8x128xf32>
    "tpu.trace_stop"() : () -> ()
    %cst_25 = arith.constant dense<0.000000e+00> : vector<8x128xf32>
    %82 = vector.multi_reduction <add>, %81, %cst_25 [0] : vector<2x8x128xf32> to vector<8x128xf32>
    %c0_26 = arith.constant 0 : index
    %c0_27 = arith.constant 0 : index
    %83 = vector.load %arg7[%c0_26, %c0_27] : memref<1x128xf32, #tpu.memory_space<vmem>>, vector<1x128xf32>
    %84 = vector.broadcast %83 : vector<1x128xf32> to vector<8x128xf32>
    %85 = arith.addf %82, %84 : vector<8x128xf32>
    %86 = arith.addf %2, %85 : vector<8x128xf32>
    %c0_28 = arith.constant 0 : index
    %c0_29 = arith.constant 0 : index
    %87 = vector.load %arg8[%c0_28, %c0_29] : memref<1x128xf32, #tpu.memory_space<vmem>>, vector<1x128xf32>
    %c0_30 = arith.constant 0 : index
    %c0_31 = arith.constant 0 : index
    %88 = vector.load %arg9[%c0_30, %c0_31] : memref<1x128xf32, #tpu.memory_space<vmem>>, vector<1x128xf32>
    %cst_32 = arith.constant dense<0.000000e+00> : vector<8xf32>
    %89 = vector.multi_reduction <add>, %86, %cst_32 [1] : vector<8x128xf32> to vector<8xf32>
    %90 = vector.shape_cast %89 : vector<8xf32> to vector<8x1xf32>
    %cst_33 = arith.constant 1.280000e+02 : f32
    %91 = vector.broadcast %cst_33 : f32 to vector<8x1xf32>
    %92 = arith.divf %90, %91 : vector<8x1xf32>
    %93 = vector.broadcast %92 : vector<8x1xf32> to vector<8x128xf32>
    %94 = arith.subf %86, %93 : vector<8x128xf32>
    %95 = vector.broadcast %92 : vector<8x1xf32> to vector<8x128xf32>
    %96 = arith.subf %86, %95 : vector<8x128xf32>
    %97 = arith.mulf %94, %96 : vector<8x128xf32>
    %cst_34 = arith.constant dense<0.000000e+00> : vector<8xf32>
    %98 = vector.multi_reduction <add>, %97, %cst_34 [1] : vector<8x128xf32> to vector<8xf32>
    %99 = vector.shape_cast %98 : vector<8xf32> to vector<8x1xf32>
    %cst_35 = arith.constant 1.280000e+02 : f32
    %100 = vector.broadcast %cst_35 : f32 to vector<8x1xf32>
    %101 = arith.divf %99, %100 : vector<8x1xf32>
    %102 = vector.broadcast %92 : vector<8x1xf32> to vector<8x128xf32>
    %103 = arith.subf %86, %102 : vector<8x128xf32>
    %cst_36 = arith.constant 9.99999974E-6 : f32
    %104 = vector.broadcast %cst_36 : f32 to vector<8x1xf32>
    %105 = arith.addf %101, %104 : vector<8x1xf32>
    %106 = math.rsqrt %105 : vector<8x1xf32>
    %107 = vector.broadcast %106 : vector<8x1xf32> to vector<8x128xf32>
    %108 = arith.mulf %103, %107 : vector<8x128xf32>
    %109 = vector.broadcast %87 : vector<1x128xf32> to vector<8x128xf32>
    %110 = arith.mulf %108, %109 : vector<8x128xf32>
    %111 = vector.broadcast %88 : vector<1x128xf32> to vector<8x128xf32>
    %112 = arith.addf %110, %111 : vector<8x128xf32>
    %113 = arith.truncf %112 : vector<8x128xf32> to vector<8x128xbf16>
    %c0_37 = arith.constant 0 : index
    %c0_38 = arith.constant 0 : index
    %114 = vector.load %arg10[%c0_37, %c0_38] : memref<128x512xbf16, #tpu.memory_space<vmem>>, vector<128x512xbf16>
    %cst_39 = arith.constant dense<0.000000e+00> : vector<8x512xf32>
    %115 = tpu.matmul %113, %114, %cst_39 {dimension_numbers = #tpu.dot_dimension_numbers<[1], [0], [0], [1], [0, 0, 1, 1], [], []>} : vector<8x128xbf16>, vector<128x512xbf16>, vector<8x512xf32> -> vector<8x512xf32>
    %c0_40 = arith.constant 0 : index
    %c0_41 = arith.constant 0 : index
    %116 = vector.load %arg11[%c0_40, %c0_41] : memref<1x512xf32, #tpu.memory_space<vmem>>, vector<1x512xf32>
    %117 = vector.broadcast %116 : vector<1x512xf32> to vector<8x512xf32>
    %118 = arith.addf %115, %117 : vector<8x512xf32>
    %cst_42 = arith.constant 5.000000e-01 : f32
    %119 = vector.broadcast %cst_42 : f32 to vector<8x512xf32>
    %120 = arith.mulf %119, %118 : vector<8x512xf32>
    %cst_43 = arith.constant 4.471500e-02 : f32
    %121 = vector.broadcast %cst_43 : f32 to vector<8x512xf32>
    %122 = arith.mulf %121, %118 : vector<8x512xf32>
    %123 = arith.mulf %122, %118 : vector<8x512xf32>
    %124 = arith.mulf %123, %118 : vector<8x512xf32>
    %125 = arith.addf %118, %124 : vector<8x512xf32>
    %cst_44 = arith.constant 0.797884583 : f32
    %126 = vector.broadcast %cst_44 : f32 to vector<8x512xf32>
    %127 = arith.mulf %126, %125 : vector<8x512xf32>
    %128 = math.tanh %127 : vector<8x512xf32>
    %cst_45 = arith.constant 1.000000e+00 : f32
    %129 = vector.broadcast %cst_45 : f32 to vector<8x512xf32>
    %130 = arith.addf %129, %128 : vector<8x512xf32>
    %131 = arith.mulf %120, %130 : vector<8x512xf32>
    %132 = arith.truncf %131 : vector<8x512xf32> to vector<8x512xbf16>
    %c0_46 = arith.constant 0 : index
    %c0_47 = arith.constant 0 : index
    %133 = vector.load %arg12[%c0_46, %c0_47] : memref<512x128xbf16, #tpu.memory_space<vmem>>, vector<512x128xbf16>
    %cst_48 = arith.constant dense<0.000000e+00> : vector<8x128xf32>
    %134 = tpu.matmul %132, %133, %cst_48 {dimension_numbers = #tpu.dot_dimension_numbers<[1], [0], [0], [1], [0, 0, 1, 1], [], []>} : vector<8x512xbf16>, vector<512x128xbf16>, vector<8x128xf32> -> vector<8x128xf32>
    %135 = arith.addf %86, %134 : vector<8x128xf32>
    %c0_49 = arith.constant 0 : index
    %c0_50 = arith.constant 0 : index
    %136 = vector.load %arg13[%c0_49, %c0_50] : memref<1x128xf32, #tpu.memory_space<vmem>>, vector<1x128xf32>
    %137 = vector.broadcast %136 : vector<1x128xf32> to vector<8x128xf32>
    %138 = arith.addf %135, %137 : vector<8x128xf32>
    %c0_51 = arith.constant 0 : index
    %c0_52 = arith.constant 0 : index
    %139 = vector.load %arg14[%c0_51, %c0_52] : memref<1x128xf32, #tpu.memory_space<vmem>>, vector<1x128xf32>
    %c0_53 = arith.constant 0 : index
    %c0_54 = arith.constant 0 : index
    %140 = vector.load %arg15[%c0_53, %c0_54] : memref<1x128xf32, #tpu.memory_space<vmem>>, vector<1x128xf32>
    %cst_55 = arith.constant dense<0.000000e+00> : vector<8xf32>
    %141 = vector.multi_reduction <add>, %138, %cst_55 [1] : vector<8x128xf32> to vector<8xf32>
    %142 = vector.shape_cast %141 : vector<8xf32> to vector<8x1xf32>
    %cst_56 = arith.constant 1.280000e+02 : f32
    %143 = vector.broadcast %cst_56 : f32 to vector<8x1xf32>
    %144 = arith.divf %142, %143 : vector<8x1xf32>
    %145 = vector.broadcast %144 : vector<8x1xf32> to vector<8x128xf32>
    %146 = arith.subf %138, %145 : vector<8x128xf32>
    %147 = vector.broadcast %144 : vector<8x1xf32> to vector<8x128xf32>
    %148 = arith.subf %138, %147 : vector<8x128xf32>
    %149 = arith.mulf %146, %148 : vector<8x128xf32>
    %cst_57 = arith.constant dense<0.000000e+00> : vector<8xf32>
    %150 = vector.multi_reduction <add>, %149, %cst_57 [1] : vector<8x128xf32> to vector<8xf32>
    %151 = vector.shape_cast %150 : vector<8xf32> to vector<8x1xf32>
    %cst_58 = arith.constant 1.280000e+02 : f32
    %152 = vector.broadcast %cst_58 : f32 to vector<8x1xf32>
    %153 = arith.divf %151, %152 : vector<8x1xf32>
    %154 = vector.broadcast %144 : vector<8x1xf32> to vector<8x128xf32>
    %155 = arith.subf %138, %154 : vector<8x128xf32>
    %cst_59 = arith.constant 9.99999974E-6 : f32
    %156 = vector.broadcast %cst_59 : f32 to vector<8x1xf32>
    %157 = arith.addf %153, %156 : vector<8x1xf32>
    %158 = math.rsqrt %157 : vector<8x1xf32>
    %159 = vector.broadcast %158 : vector<8x1xf32> to vector<8x128xf32>
    %160 = arith.mulf %155, %159 : vector<8x128xf32>
    %161 = vector.broadcast %139 : vector<1x128xf32> to vector<8x128xf32>
    %162 = arith.mulf %160, %161 : vector<8x128xf32>
    %163 = vector.broadcast %140 : vector<1x128xf32> to vector<8x128xf32>
    %164 = arith.addf %162, %163 : vector<8x128xf32>
    %165 = arith.truncf %164 : vector<8x128xf32> to vector<8x128xbf16>
    %c0_60 = arith.constant 0 : index
    %c0_61 = arith.constant 0 : index
    %c0_62 = arith.constant 0 : index
    %166 = vector.load %arg16[%c0_60, %c0_61, %c0_62] : memref<1x8x128xbf16, #tpu.memory_space<vmem>>, vector<1x8x128xbf16>
    %167 = vector.shape_cast %166 : vector<1x8x128xbf16> to vector<8x128xbf16>
    %168 = vector.shape_cast %165 : vector<8x128xbf16> to vector<1x8x128xbf16>
    tpu.vector_store %arg16[%c0_60, %c0_61, %c0_62], %168 {strides = array<i32>} : memref<1x8x128xbf16, #tpu.memory_space<vmem>>, vector<1x8x128xbf16>,
    return
  }
  func.func @transform_0(%arg0: i32) -> (i32, i32, i32) {
    %c0_i32 = arith.constant 0 : i32
    %c0_i32_0 = arith.constant 0 : i32
    %c0_i32_1 = arith.constant 0 : i32
    return %arg0, %c0_i32, %c0_i32_0 : i32, i32, i32
  }
  func.func @transform_1(%arg0: i32) -> (i32, i32) {
    %c0_i32 = arith.constant 0 : i32
    %c0_i32_0 = arith.constant 0 : i32
    %c0_i32_1 = arith.constant 0 : i32
    return %c0_i32, %c0_i32_0 : i32, i32
  }
  func.func @transform_2(%arg0: i32) -> (i32, i32) {
    %c0_i32 = arith.constant 0 : i32
    %c0_i32_0 = arith.constant 0 : i32
    %c0_i32_1 = arith.constant 0 : i32
    return %c0_i32, %c0_i32_0 : i32, i32
  }
  func.func @transform_3(%arg0: i32) -> (i32, i32) {
    %c0_i32 = arith.constant 0 : i32
    %c0_i32_0 = arith.constant 0 : i32
    %c0_i32_1 = arith.constant 0 : i32
    return %c0_i32, %c0_i32_0 : i32, i32
  }
  func.func @transform_4(%arg0: i32) -> (i32, i32) {
    %c0_i32 = arith.constant 0 : i32
    %c0_i32_0 = arith.constant 0 : i32
    %c0_i32_1 = arith.constant 0 : i32
    return %c0_i32, %c0_i32_0 : i32, i32
  }
  func.func @transform_5(%arg0: i32) -> (i32, i32, i32) {
    %c0_i32 = arith.constant 0 : i32
    %c0_i32_0 = arith.constant 0 : i32
    %c0_i32_1 = arith.constant 0 : i32
    %c0_i32_2 = arith.constant 0 : i32
    return %c0_i32, %c0_i32_0, %c0_i32_1 : i32, i32, i32
  }
  func.func @transform_6(%arg0: i32) -> (i32, i32) {
    %c0_i32 = arith.constant 0 : i32
    %c0_i32_0 = arith.constant 0 : i32
    %c0_i32_1 = arith.constant 0 : i32
    return %c0_i32, %c0_i32_0 : i32, i32
  }
  func.func @transform_7(%arg0: i32) -> (i32, i32) {
    %c0_i32 = arith.constant 0 : i32
    %c0_i32_0 = arith.constant 0 : i32
    %c0_i32_1 = arith.constant 0 : i32
    return %c0_i32, %c0_i32_0 : i32, i32
  }
  func.func @transform_8(%arg0: i32) -> (i32, i32) {
    %c0_i32 = arith.constant 0 : i32
    %c0_i32_0 = arith.constant 0 : i32
    %c0_i32_1 = arith.constant 0 : i32
    return %c0_i32, %c0_i32_0 : i32, i32
  }
  func.func @transform_9(%arg0: i32) -> (i32, i32) {
    %c0_i32 = arith.constant 0 : i32
    %c0_i32_0 = arith.constant 0 : i32
    %c0_i32_1 = arith.constant 0 : i32
    return %c0_i32, %c0_i32_0 : i32, i32
  }
  func.func @transform_10(%arg0: i32) -> (i32, i32) {
    %c0_i32 = arith.constant 0 : i32
    %c0_i32_0 = arith.constant 0 : i32
    %c0_i32_1 = arith.constant 0 : i32
    return %c0_i32, %c0_i32_0 : i32, i32
  }
  func.func @transform_11(%arg0: i32) -> (i32, i32) {
    %c0_i32 = arith.constant 0 : i32
    %c0_i32_0 = arith.constant 0 : i32
    %c0_i32_1 = arith.constant 0 : i32
    return %c0_i32, %c0_i32_0 : i32, i32
  }
  func.func @transform_12(%arg0: i32) -> (i32, i32) {
    %c0_i32 = arith.constant 0 : i32
    %c0_i32_0 = arith.constant 0 : i32
    %c0_i32_1 = arith.constant 0 : i32
    return %c0_i32, %c0_i32_0 : i32, i32
  }
  func.func @transform_13(%arg0: i32) -> (i32, i32) {
    %c0_i32 = arith.constant 0 : i32
    %c0_i32_0 = arith.constant 0 : i32
    %c0_i32_1 = arith.constant 0 : i32
    return %c0_i32, %c0_i32_0 : i32, i32
  }
  func.func @transform_14(%arg0: i32) -> (i32, i32) {
    %c0_i32 = arith.constant 0 : i32
    %c0_i32_0 = arith.constant 0 : i32
    %c0_i32_1 = arith.constant 0 : i32
    return %c0_i32, %c0_i32_0 : i32, i32
  }
  func.func @transform_15(%arg0: i32) -> (i32, i32, i32) {
    %c0_i32 = arith.constant 0 : i32
    %c0_i32_0 = arith.constant 0 : i32
    %c0_i32_1 = arith.constant 0 : i32
    return %arg0, %c0_i32, %c0_i32_0 : i32, i32, i32
  }
}

module attributes {stable_mosaic.version = 11 : i64} {
  func.func @block_kernel(%arg0: i32, %arg1: memref<1x8x128xbf16, #tpu.memory_space<vmem>>, %arg2: memref<1x128xf32, #tpu.memory_space<vmem>>, %arg3: memref<1x128xf32, #tpu.memory_space<vmem>>, %arg4: memref<128x384xbf16, #tpu.memory_space<vmem>>, %arg5: memref<1x384xf32, #tpu.memory_space<vmem>>, %arg6: memref<2x64x128xbf16, #tpu.memory_space<vmem>>, %arg7: memref<1x128xf32, #tpu.memory_space<vmem>>, %arg8: memref<1x128xf32, #tpu.memory_space<vmem>>, %arg9: memref<1x128xf32, #tpu.memory_space<vmem>>, %arg10: memref<128x512xbf16, #tpu.memory_space<vmem>>, %arg11: memref<1x512xf32, #tpu.memory_space<vmem>>, %arg12: memref<512x128xbf16, #tpu.memory_space<vmem>>, %arg13: memref<1x128xf32, #tpu.memory_space<vmem>>, %arg14: memref<1x128xf32, #tpu.memory_space<vmem>>, %arg15: memref<1x128xf32, #tpu.memory_space<vmem>>, %arg16: memref<1x8x128xbf16, #tpu.memory_space<vmem>>) attributes {dimension_semantics = [#tpu.dimension_semantics<parallel>], iteration_bounds = array<i64: 2>, scalar_prefetch = 0 : i64, scratch_operands = 0 : i64, tpu.core_type = #tpu.core_type<tc>, window_params = [{transform_indices = @transform_0, window_bounds = array<i64: 1, 8, 128>}, {pipeline_mode = #tpu.pipeline_mode<synchronous>, transform_indices = @transform_1, window_bounds = array<i64: 1, 128>}, {pipeline_mode = #tpu.pipeline_mode<synchronous>, transform_indices = @transform_2, window_bounds = array<i64: 1, 128>}, {pipeline_mode = #tpu.pipeline_mode<synchronous>, transform_indices = @transform_3, window_bounds = array<i64: 128, 384>}, {pipeline_mode = #tpu.pipeline_mode<synchronous>, transform_indices = @transform_4, window_bounds = array<i64: 1, 384>}, {pipeline_mode = #tpu.pipeline_mode<synchronous>, transform_indices = @transform_5, window_bounds = array<i64: 2, 64, 128>}, {pipeline_mode = #tpu.pipeline_mode<synchronous>, transform_indices = @transform_6, window_bounds = array<i64: 1, 128>}, {pipeline_mode = #tpu.pipeline_mode<synchronous>, transform_indices = @transform_7, window_bounds = array<i64: 1, 128>}, {pipeline_mode = #tpu.pipeline_mode<synchronous>, transform_indices = @transform_8, window_bounds = array<i64: 1, 128>}, {pipeline_mode = #tpu.pipeline_mode<synchronous>, transform_indices = @transform_9, window_bounds = array<i64: 128, 512>}, {pipeline_mode = #tpu.pipeline_mode<synchronous>, transform_indices = @transform_10, window_bounds = array<i64: 1, 512>}, {pipeline_mode = #tpu.pipeline_mode<synchronous>, transform_indices = @transform_11, window_bounds = array<i64: 512, 128>}, {pipeline_mode = #tpu.pipeline_mode<synchronous>, transform_indices = @transform_12, window_bounds = array<i64: 1, 128>}, {pipeline_mode = #tpu.pipeline_mode<synchronous>, transform_indices = @transform_13, window_bounds = array<i64: 1, 128>}, {pipeline_mode = #tpu.pipeline_mode<synchronous>, transform_indices = @transform_14, window_bounds = array<i64: 1, 128>}, {transform_indices = @transform_15, window_bounds = array<i64: 1, 8, 128>}]} {
    %c0 = arith.constant 0 : index
    %c0_0 = arith.constant 0 : index
    %c0_1 = arith.constant 0 : index
    %0 = vector.load %arg1[%c0, %c0_0, %c0_1] : memref<1x8x128xbf16, #tpu.memory_space<vmem>>, vector<1x8x128xbf16>
    %1 = vector.shape_cast %0 : vector<1x8x128xbf16> to vector<8x128xbf16>
    %2 = arith.extf %1 : vector<8x128xbf16> to vector<8x128xf32>
    %c0_2 = arith.constant 0 : index
    %c0_3 = arith.constant 0 : index
    %3 = vector.load %arg2[%c0_2, %c0_3] : memref<1x128xf32, #tpu.memory_space<vmem>>, vector<1x128xf32>
    %c0_4 = arith.constant 0 : index
    %c0_5 = arith.constant 0 : index
    %4 = vector.load %arg3[%c0_4, %c0_5] : memref<1x128xf32, #tpu.memory_space<vmem>>, vector<1x128xf32>
    %cst = arith.constant dense<0.000000e+00> : vector<8xf32>
    %5 = vector.multi_reduction <add>, %2, %cst [1] : vector<8x128xf32> to vector<8xf32>
    %6 = vector.shape_cast %5 : vector<8xf32> to vector<8x1xf32>
    %cst_6 = arith.constant 1.280000e+02 : f32
    %7 = vector.broadcast %cst_6 : f32 to vector<8x1xf32>
    %8 = arith.divf %6, %7 : vector<8x1xf32>
    %9 = vector.broadcast %8 : vector<8x1xf32> to vector<8x128xf32>
    %10 = arith.subf %2, %9 : vector<8x128xf32>
    %11 = vector.broadcast %8 : vector<8x1xf32> to vector<8x128xf32>
    %12 = arith.subf %2, %11 : vector<8x128xf32>
    %13 = arith.mulf %10, %12 : vector<8x128xf32>
    %cst_7 = arith.constant dense<0.000000e+00> : vector<8xf32>
    %14 = vector.multi_reduction <add>, %13, %cst_7 [1] : vector<8x128xf32> to vector<8xf32>
    %15 = vector.shape_cast %14 : vector<8xf32> to vector<8x1xf32>
    %cst_8 = arith.constant 1.280000e+02 : f32
    %16 = vector.broadcast %cst_8 : f32 to vector<8x1xf32>
    %17 = arith.divf %15, %16 : vector<8x1xf32>
    %18 = vector.broadcast %8 : vector<8x1xf32> to vector<8x128xf32>
    %19 = arith.subf %2, %18 : vector<8x128xf32>
    %cst_9 = arith.constant 9.99999974E-6 : f32
    %20 = vector.broadcast %cst_9 : f32 to vector<8x1xf32>
    %21 = arith.addf %17, %20 : vector<8x1xf32>
    %22 = math.rsqrt %21 : vector<8x1xf32>
    %23 = vector.broadcast %22 : vector<8x1xf32> to vector<8x128xf32>
    %24 = arith.mulf %19, %23 : vector<8x128xf32>
    %25 = vector.broadcast %3 : vector<1x128xf32> to vector<8x128xf32>
    %26 = arith.mulf %24, %25 : vector<8x128xf32>
    %27 = vector.broadcast %4 : vector<1x128xf32> to vector<8x128xf32>
    %28 = arith.addf %26, %27 : vector<8x128xf32>
    %29 = arith.truncf %28 : vector<8x128xf32> to vector<8x128xbf16>
    %c0_10 = arith.constant 0 : index
    %c0_11 = arith.constant 0 : index
    %30 = vector.load %arg4[%c0_10, %c0_11] : memref<128x384xbf16, #tpu.memory_space<vmem>>, vector<128x384xbf16>
    %cst_12 = arith.constant dense<0.000000e+00> : vector<8x384xf32>
    %31 = tpu.matmul %29, %30, %cst_12 {dimension_numbers = #tpu.dot_dimension_numbers<[1], [0], [0], [1], [0, 0, 1, 1], [], []>} : vector<8x128xbf16>, vector<128x384xbf16>, vector<8x384xf32> -> vector<8x384xf32>
    %c0_13 = arith.constant 0 : index
    %c0_14 = arith.constant 0 : index
    %32 = vector.load %arg5[%c0_13, %c0_14] : memref<1x384xf32, #tpu.memory_space<vmem>>, vector<1x384xf32>
    %33 = vector.broadcast %32 : vector<1x384xf32> to vector<8x384xf32>
    %34 = arith.addf %31, %33 : vector<8x384xf32>
    %35 = vector.extract_strided_slice %34 {offsets = [0, 0], sizes = [8, 128], strides = [1, 1]} : vector<8x384xf32> to vector<8x128xf32>
    %36 = vector.extract_strided_slice %35 {offsets = [0, 0], sizes = [8, 64], strides = [1, 1]} : vector<8x128xf32> to vector<8x64xf32>
    %37 = vector.extract_strided_slice %35 {offsets = [0, 64], sizes = [8, 64], strides = [1, 1]} : vector<8x128xf32> to vector<8x64xf32>
    %38 = vector.shape_cast %36 : vector<8x64xf32> to vector<1x8x64xf32>
    %39 = vector.shape_cast %37 : vector<8x64xf32> to vector<1x8x64xf32>
    %40 = tpu.concatenate %38, %39 in 0 : vector<1x8x64xf32>, vector<1x8x64xf32> -> vector<2x8x64xf32>
    %41 = arith.truncf %40 : vector<2x8x64xf32> to vector<2x8x64xbf16>
    %42 = vector.extract_strided_slice %34 {offsets = [0, 128], sizes = [8, 128], strides = [1, 1]} : vector<8x384xf32> to vector<8x128xf32>
    %43 = vector.extract_strided_slice %42 {offsets = [0, 0], sizes = [8, 64], strides = [1, 1]} : vector<8x128xf32> to vector<8x64xf32>
    %44 = vector.extract_strided_slice %42 {offsets = [0, 64], sizes = [8, 64], strides = [1, 1]} : vector<8x128xf32> to vector<8x64xf32>
    %45 = vector.shape_cast %43 : vector<8x64xf32> to vector<1x8x64xf32>
    %46 = vector.shape_cast %44 : vector<8x64xf32> to vector<1x8x64xf32>
    %47 = tpu.concatenate %45, %46 in 0 : vector<1x8x64xf32>, vector<1x8x64xf32> -> vector<2x8x64xf32>
    %48 = arith.truncf %47 : vector<2x8x64xf32> to vector<2x8x64xbf16>
    %49 = vector.extract_strided_slice %34 {offsets = [0, 256], sizes = [8, 128], strides = [1, 1]} : vector<8x384xf32> to vector<8x128xf32>
    %50 = vector.extract_strided_slice %49 {offsets = [0, 0], sizes = [8, 64], strides = [1, 1]} : vector<8x128xf32> to vector<8x64xf32>
    %51 = vector.extract_strided_slice %49 {offsets = [0, 64], sizes = [8, 64], strides = [1, 1]} : vector<8x128xf32> to vector<8x64xf32>
    %52 = vector.shape_cast %50 : vector<8x64xf32> to vector<1x8x64xf32>
    %53 = vector.shape_cast %51 : vector<8x64xf32> to vector<1x8x64xf32>
    %54 = tpu.concatenate %52, %53 in 0 : vector<1x8x64xf32>, vector<1x8x64xf32> -> vector<2x8x64xf32>
    %55 = arith.truncf %54 : vector<2x8x64xf32> to vector<2x8x64xbf16>
    %56 = tpu.iota {dimensions = array<i32: 0>} : vector<8x8xi32>
    %57 = tpu.iota {dimensions = array<i32: 1>} : vector<8x8xi32>
    %58 = arith.cmpi sle, %57, %56 : vector<8x8xi32>
    %59 = vector.shape_cast %58 : vector<8x8xi1> to vector<1x8x8xi1>
    "tpu.trace_start"() <{level = 10 : i32, message = "hqd,hkd->hqk"}> : () -> ()
    %cst_15 = arith.constant dense<0.000000e+00> : vector<2x8x8xf32>
    %60 = tpu.matmul %41, %48, %cst_15 {dimension_numbers = #tpu.dot_dimension_numbers<[2], [2], [1], [1], [0, 0, 0, 1, 1, 1], [0], [0]>} : vector<2x8x64xbf16>, vector<2x8x64xbf16>, vector<2x8x8xf32> -> vector<2x8x8xf32>
    "tpu.trace_stop"() : () -> ()
    %cst_16 = arith.constant 1.250000e-01 : f32
    %61 = vector.broadcast %cst_16 : f32 to vector<2x8x8xf32>
    %62 = arith.mulf %60, %61 : vector<2x8x8xf32>
    %cst_17 = arith.constant -1.000000e+09 : f32
    %63 = vector.shape_cast %59 : vector<1x8x8xi1> to vector<1x8x8xi1>
    %64 = vector.broadcast %63 : vector<1x8x8xi1> to vector<2x8x8xi1>
    %65 = vector.broadcast %cst_17 : f32 to vector<2x8x8xf32>
    %66 = arith.select %64, %62, %65 : vector<2x8x8xi1>, vector<2x8x8xf32>
    %cst_18 = arith.constant dense<0xFF800000> : vector<2x8xf32>
    %67 = vector.multi_reduction <maximumf>, %66, %cst_18 [2] : vector<2x8x8xf32> to vector<2x8xf32>
    %68 = vector.shape_cast %67 : vector<2x8xf32> to vector<2x8x1xf32>
    %69 = vector.broadcast %68 : vector<2x8x1xf32> to vector<2x8x8xf32>
    %70 = arith.subf %66, %69 : vector<2x8x8xf32>
    %71 = math.exp %70 : vector<2x8x8xf32>
    %cst_19 = arith.constant dense<0.000000e+00> : vector<2x8xf32>
    %72 = vector.multi_reduction <add>, %71, %cst_19 [2] : vector<2x8x8xf32> to vector<2x8xf32>
    %73 = vector.shape_cast %72 : vector<2x8xf32> to vector<2x8x1xf32>
    %74 = tpu.reciprocal %73 {approx = true} : vector<2x8x1xf32> -> vector<2x8x1xf32>
    %75 = vector.broadcast %74 : vector<2x8x1xf32> to vector<2x8x8xf32>
    %76 = arith.mulf %71, %75 : vector<2x8x8xf32>
    %77 = arith.truncf %76 : vector<2x8x8xf32> to vector<2x8x8xbf16>
    "tpu.trace_start"() <{level = 10 : i32, message = "hqk,hkd->hqd"}> : () -> ()
    %cst_20 = arith.constant dense<0.000000e+00> : vector<2x8x64xf32>
    %78 = tpu.matmul %77, %55, %cst_20 {dimension_numbers = #tpu.dot_dimension_numbers<[2], [1], [1], [2], [0, 0, 0, 1, 1, 2], [0], [0]>} : vector<2x8x8xbf16>, vector<2x8x64xbf16>, vector<2x8x64xf32> -> vector<2x8x64xf32>
    "tpu.trace_stop"() : () -> ()
    %79 = arith.truncf %78 : vector<2x8x64xf32> to vector<2x8x64xbf16>
    %c0_21 = arith.constant 0 : index
    %c0_22 = arith.constant 0 : index
    %c0_23 = arith.constant 0 : index
    %80 = vector.load %arg6[%c0_21, %c0_22, %c0_23] : memref<2x64x128xbf16, #tpu.memory_space<vmem>>, vector<2x64x128xbf16>
    "tpu.trace_start"() <{level = 10 : i32, message = "hsd,hdo->hso"}> : () -> ()
    %cst_24 = arith.constant dense<0.000000e+00> : vector<2x8x128xf32>
    %81 = tpu.matmul %79, %80, %cst_24 {dimension_numbers = #tpu.dot_dimension_numbers<[2], [1], [1], [2], [0, 0, 0, 1, 1, 2], [0], [0]>} : vector<2x8x64xbf16>, vector<2x64x128xbf16>, vector<2x8x128xf32> -> vector<2x8x128xf32>
    "tpu.trace_stop"() : () -> ()
    %cst_25 = arith.constant dense<0.000000e+00> : vector<8x128xf32>
    %82 = vector.multi_reduction <add>, %81, %cst_25 [0] : vector<2x8x128xf32> to vector<8x128xf32>
    %c0_26 = arith.constant 0 : index
    %c0_27 = arith.constant 0 : index
    %83 = vector.load %arg7[%c0_26, %c0_27] : memref<1x128xf32, #tpu.memory_space<vmem>>, vector<1x128xf32>
    %84 = vector.broadcast %83 : vector<1x128xf32> to vector<8x128xf32>
    %85 = arith.addf %82, %84 : vector<8x128xf32>
    %86 = arith.addf %2, %85 : vector<8x128xf32>
    %c0_28 = arith.constant 0 : index
    %c0_29 = arith.constant 0 : index
    %87 = vector.load %arg8[%c0_28, %c0_29] : memref<1x128xf32, #tpu.memory_space<vmem>>, vector<1x128xf32>
    %c0_30 = arith.constant 0 : index
    %c0_31 = arith.constant 0 : index
    %88 = vector.load %arg9[%c0_30, %c0_31] : memref<1x128xf32, #tpu.memory_space<vmem>>, vector<1x128xf32>
    %cst_32 = arith.constant dense<0.000000e+00> : vector<8xf32>
    %89 = vector.multi_reduction <add>, %86, %cst_32 [1] : vector<8x128xf32> to vector<8xf32>
    %90 = vector.shape_cast %89 : vector<8xf32> to vector<8x1xf32>
    %cst_33 = arith.constant 1.280000e+02 : f32
    %91 = vector.broadcast %cst_33 : f32 to vector<8x1xf32>
    %92 = arith.divf %90, %91 : vector<8x1xf32>
    %93 = vector.broadcast %92 : vector<8x1xf32> to vector<8x128xf32>
    %94 = arith.subf %86, %93 : vector<8x128xf32>
    %95 = vector.broadcast %92 : vector<8x1xf32> to vector<8x128xf32>
    %96 = arith.subf %86, %95 : vector<8x128xf32>
    %97 = arith.mulf %94, %96 : vector<8x128xf32>
    %cst_34 = arith.constant dense<0.000000e+00> : vector<8xf32>
    %98 = vector.multi_reduction <add>, %97, %cst_34 [1] : vector<8x128xf32> to vector<8xf32>
    %99 = vector.shape_cast %98 : vector<8xf32> to vector<8x1xf32>
    %cst_35 = arith.constant 1.280000e+02 : f32
    %100 = vector.broadcast %cst_35 : f32 to vector<8x1xf32>
    %101 = arith.divf %99, %100 : vector<8x1xf32>
    %102 = vector.broadcast %92 : vector<8x1xf32> to vector<8x128xf32>
    %103 = arith.subf %86, %102 : vector<8x128xf32>
    %cst_36 = arith.constant 9.99999974E-6 : f32
    %104 = vector.broadcast %cst_36 : f32 to vector<8x1xf32>
    %105 = arith.addf %101, %104 : vector<8x1xf32>
    %106 = math.rsqrt %105 : vector<8x1xf32>
    %107 = vector.broadcast %106 : vector<8x1xf32> to vector<8x128xf32>
    %108 = arith.mulf %103, %107 : vector<8x128xf32>
    %109 = vector.broadcast %87 : vector<1x128xf32> to vector<8x128xf32>
    %110 = arith.mulf %108, %109 : vector<8x128xf32>
    %111 = vector.broadcast %88 : vector<1x128xf32> to vector<8x128xf32>
    %112 = arith.addf %110, %111 : vector<8x128xf32>
    %113 = arith.truncf %112 : vector<8x128xf32> to vector<8x128xbf16>
    %c0_37 = arith.constant 0 : index
    %c0_38 = arith.constant 0 : index
    %114 = vector.load %arg10[%c0_37, %c0_38] : memref<128x512xbf16, #tpu.memory_space<vmem>>, vector<128x512xbf16>
    %cst_39 = arith.constant dense<0.000000e+00> : vector<8x512xf32>
    %115 = tpu.matmul %113, %114, %cst_39 {dimension_numbers = #tpu.dot_dimension_numbers<[1], [0], [0], [1], [0, 0, 1, 1], [], []>} : vector<8x128xbf16>, vector<128x512xbf16>, vector<8x512xf32> -> vector<8x512xf32>
    %c0_40 = arith.constant 0 : index
    %c0_41 = arith.constant 0 : index
    %116 = vector.load %arg11[%c0_40, %c0_41] : memref<1x512xf32, #tpu.memory_space<vmem>>, vector<1x512xf32>
    %117 = vector.broadcast %116 : vector<1x512xf32> to vector<8x512xf32>
    %118 = arith.addf %115, %117 : vector<8x512xf32>
    %cst_42 = arith.constant 5.000000e-01 : f32
    %119 = vector.broadcast %cst_42 : f32 to vector<8x512xf32>
    %120 = arith.mulf %119, %118 : vector<8x512xf32>
    %cst_43 = arith.constant 4.471500e-02 : f32
    %121 = vector.broadcast %cst_43 : f32 to vector<8x512xf32>
    %122 = arith.mulf %121, %118 : vector<8x512xf32>
    %123 = arith.mulf %122, %118 : vector<8x512xf32>
    %124 = arith.mulf %123, %118 : vector<8x512xf32>
    %125 = arith.addf %118, %124 : vector<8x512xf32>
    %cst_44 = arith.constant 0.797884583 : f32
    %126 = vector.broadcast %cst_44 : f32 to vector<8x512xf32>
    %127 = arith.mulf %126, %125 : vector<8x512xf32>
    %128 = math.tanh %127 : vector<8x512xf32>
    %cst_45 = arith.constant 1.000000e+00 : f32
    %129 = vector.broadcast %cst_45 : f32 to vector<8x512xf32>
    %130 = arith.addf %129, %128 : vector<8x512xf32>
    %131 = arith.mulf %120, %130 : vector<8x512xf32>
    %132 = arith.truncf %131 : vector<8x512xf32> to vector<8x512xbf16>
    %c0_46 = arith.constant 0 : index
    %c0_47 = arith.constant 0 : index
    %133 = vector.load %arg12[%c0_46, %c0_47] : memref<512x128xbf16, #tpu.memory_space<vmem>>, vector<512x128xbf16>
    %cst_48 = arith.constant dense<0.000000e+00> : vector<8x128xf32>
    %134 = tpu.matmul %132, %133, %cst_48 {dimension_numbers = #tpu.dot_dimension_numbers<[1], [0], [0], [1], [0, 0, 1, 1], [], []>} : vector<8x512xbf16>, vector<512x128xbf16>, vector<8x128xf32> -> vector<8x128xf32>
    %135 = arith.addf %86, %134 : vector<8x128xf32>
    %c0_49 = arith.constant 0 : index
    %c0_50 = arith.constant 0 : index
    %136 = vector.load %arg13[%c0_49, %c0_50] : memref<1x128xf32, #tpu.memory_space<vmem>>, vector<1x128xf32>
    %137 = vector.broadcast %136 : vector<1x128xf32> to vector<8x128xf32>
    %138 = arith.addf %135, %137 : vector<8x128xf32>
    %139 = arith.truncf %138 : vector<8x128xf32> to vector<8x128xbf16>
    %c0_51 = arith.constant 0 : index
    %c0_52 = arith.constant 0 : index
    %c0_53 = arith.constant 0 : index
    %140 = vector.load %arg16[%c0_51, %c0_52, %c0_53] : memref<1x8x128xbf16, #tpu.memory_space<vmem>>, vector<1x8x128xbf16>
    %141 = vector.shape_cast %140 : vector<1x8x128xbf16> to vector<8x128xbf16>
    %142 = vector.shape_cast %139 : vector<8x128xbf16> to vector<1x8x128xbf16>
    tpu.vector_store %arg16[%c0_51, %c0_52, %c0_53], %142 {strides = array<i32>} : memref<1x8x128xbf16, #tpu.memory_space<vmem>>, vector<1x8x128xbf16>,
    return
  }
  func.func @transform_0(%arg0: i32) -> (i32, i32, i32) {
    %c0_i32 = arith.constant 0 : i32
    %c0_i32_0 = arith.constant 0 : i32
    %c0_i32_1 = arith.constant 0 : i32
    return %arg0, %c0_i32, %c0_i32_0 : i32, i32, i32
  }
  func.func @transform_1(%arg0: i32) -> (i32, i32) {
    %c0_i32 = arith.constant 0 : i32
    %c0_i32_0 = arith.constant 0 : i32
    %c0_i32_1 = arith.constant 0 : i32
    return %c0_i32, %c0_i32_0 : i32, i32
  }
  func.func @transform_2(%arg0: i32) -> (i32, i32) {
    %c0_i32 = arith.constant 0 : i32
    %c0_i32_0 = arith.constant 0 : i32
    %c0_i32_1 = arith.constant 0 : i32
    return %c0_i32, %c0_i32_0 : i32, i32
  }
  func.func @transform_3(%arg0: i32) -> (i32, i32) {
    %c0_i32 = arith.constant 0 : i32
    %c0_i32_0 = arith.constant 0 : i32
    %c0_i32_1 = arith.constant 0 : i32
    return %c0_i32, %c0_i32_0 : i32, i32
  }
  func.func @transform_4(%arg0: i32) -> (i32, i32) {
    %c0_i32 = arith.constant 0 : i32
    %c0_i32_0 = arith.constant 0 : i32
    %c0_i32_1 = arith.constant 0 : i32
    return %c0_i32, %c0_i32_0 : i32, i32
  }
  func.func @transform_5(%arg0: i32) -> (i32, i32, i32) {
    %c0_i32 = arith.constant 0 : i32
    %c0_i32_0 = arith.constant 0 : i32
    %c0_i32_1 = arith.constant 0 : i32
    %c0_i32_2 = arith.constant 0 : i32
    return %c0_i32, %c0_i32_0, %c0_i32_1 : i32, i32, i32
  }
  func.func @transform_6(%arg0: i32) -> (i32, i32) {
    %c0_i32 = arith.constant 0 : i32
    %c0_i32_0 = arith.constant 0 : i32
    %c0_i32_1 = arith.constant 0 : i32
    return %c0_i32, %c0_i32_0 : i32, i32
  }
  func.func @transform_7(%arg0: i32) -> (i32, i32) {
    %c0_i32 = arith.constant 0 : i32
    %c0_i32_0 = arith.constant 0 : i32
    %c0_i32_1 = arith.constant 0 : i32
    return %c0_i32, %c0_i32_0 : i32, i32
  }
  func.func @transform_8(%arg0: i32) -> (i32, i32) {
    %c0_i32 = arith.constant 0 : i32
    %c0_i32_0 = arith.constant 0 : i32
    %c0_i32_1 = arith.constant 0 : i32
    return %c0_i32, %c0_i32_0 : i32, i32
  }
  func.func @transform_9(%arg0: i32) -> (i32, i32) {
    %c0_i32 = arith.constant 0 : i32
    %c0_i32_0 = arith.constant 0 : i32
    %c0_i32_1 = arith.constant 0 : i32
    return %c0_i32, %c0_i32_0 : i32, i32
  }
  func.func @transform_10(%arg0: i32) -> (i32, i32) {
    %c0_i32 = arith.constant 0 : i32
    %c0_i32_0 = arith.constant 0 : i32
    %c0_i32_1 = arith.constant 0 : i32
    return %c0_i32, %c0_i32_0 : i32, i32
  }
  func.func @transform_11(%arg0: i32) -> (i32, i32) {
    %c0_i32 = arith.constant 0 : i32
    %c0_i32_0 = arith.constant 0 : i32
    %c0_i32_1 = arith.constant 0 : i32
    return %c0_i32, %c0_i32_0 : i32, i32
  }
  func.func @transform_12(%arg0: i32) -> (i32, i32) {
    %c0_i32 = arith.constant 0 : i32
    %c0_i32_0 = arith.constant 0 : i32
    %c0_i32_1 = arith.constant 0 : i32
    return %c0_i32, %c0_i32_0 : i32, i32
  }
  func.func @transform_13(%arg0: i32) -> (i32, i32) {
    %c0_i32 = arith.constant 0 : i32
    %c0_i32_0 = arith.constant 0 : i32
    %c0_i32_1 = arith.constant 0 : i32
    return %c0_i32, %c0_i32_0 : i32, i32
  }
  func.func @transform_14(%arg0: i32) -> (i32, i32) {
    %c0_i32 = arith.constant 0 : i32
    %c0_i32_0 = arith.constant 0 : i32
    %c0_i32_1 = arith.constant 0 : i32
    return %c0_i32, %c0_i32_0 : i32, i32
  }
  func.func @transform_15(%arg0: i32) -> (i32, i32, i32) {
    %c0_i32 = arith.constant 0 : i32
    %c0_i32_0 = arith.constant 0 : i32
    %c0_i32_1 = arith.constant 0 : i32
    return %arg0, %c0_i32, %c0_i32_0 : i32, i32, i32
  }
}

</mosaic_0001>

<llo_original>
// kernel: _lambda_.5
$region0: #{_lambda_.5}
  #allocation0 [shape = 'u32[]', space=smem, size = 0x4, offset = 0x4, fixed_abs, tag = 'smem constant byte address 0x4 - core index']
  #allocation1 [shape = 'u32[144,128]{1,0:T(1,128)}', space=vmem, size = 0x12000, scoped, tag = 'internal scratch']
  %s0 = inlined_call_operand.vmem [shape: bf16[16,128], index: 0, kind: input, shape index: {}]
  %s1 = inlined_call_operand.vmem [shape: bf16[1024,128], index: 1, kind: input, shape index: {}]
  %s2 = inlined_call_operand.vmem [shape: bf16[16,1024], index: 2, kind: output, shape index: {}]
  %s3 = sld [smem:[#allocation0]]
  $region60: #{_lambda_.5} parent=0
    _
  %s5 = ssub.s32 1, %s3
  %s6 = scalar_select 0, %s5, %s3
  $region1: #{_lambda_.5} parent=0
    #allocation2 [shape = 'u8[32768]{0}', space=vmem, size = 0x8000, scoped, tag = 'output window, operand 0']
    loop: start=0, step=1, limit=4
    $region2: #{_lambda_.5} parent=1 // loop_pre_header
      _
    $region3: #{_lambda_.5} parent=1 // loop_header
      %s8 = sphi 0, %s12
      %p9 = scmp.ge.s32.totalorder %s8, 4
      %s15 = sphi 0, %s27
      %s16 = sphi 0, %s23
      %s17 = sphi 0, %s15
      %s18 = sphi 0, %s16
      %s19 = sphi 0, %s17
      %s20 = sphi 0, %s18
      %s30 = sphi 0, %s32
      %s33 = sphi 0, %s30
      %s34 = sphi 0, %s33
      %s50 = sphi 0, %s34
      %s56 = sphi 0, %s58
      %s59 = sphi 0, %s56
      %s60 = sphi 0, %s59
      %s76 = sphi 0, %s60
      %s84 = sphi 0, %s86
      %s87 = sphi 0, %s84
      %s88 = sphi 0, %s87
      %s104 = sphi 0, %s88
    $region4: #{_lambda_.5} parent=1 // loop_header_branch
      %11 = sbr.rel (%p9) target = $region8
    $region5: #{_lambda_.5} parent=1 // loop_body
      %s13 = ssub.s32 %s8, 1
      %s14 = ssub.s32 %s8, 2
      %s21 = sadd.s32 1, %s16
      %p22 = scmp.ge.s32.totalorder %s21, 2
      %s23 = scalar_select %p22, 0, %s21
      %s24 = sadd.s32 1, %s15
      %s25 = scalar_select %p22, %s24, %s15
      %p26 = scmp.ge.s32.totalorder %s25, 1
      %s27 = scalar_select %p26, 0, %s25
      %s28 = ssub.s32 %s15, %s27
      %p29 = scmp.eq.s32.totalorder %s28, 0
      %s31 = sadd.s32 %s30, 1
      %s32 = scalar_select %p29, %s30, %s31
      %p35 = pneg %p29
      %p36 = scmp.eq.s32.totalorder %s8, 1
      %p37 = por %p35, %p36
      %p38 = scmp.ne.s32.totalorder %s30, %s33
      %p39 = scmp.eq.s32.totalorder %s8, 0
      %p40 = por %p38, %p39
      %p41 = scmp.ne.s32.totalorder %s30, %s33
      %p42 = scmp.eq.s32.totalorder %s13, 1
      %p43 = por %p41, %p42
      %p44 = scmp.ne.s32.totalorder %s33, %s34
      %p45 = scmp.eq.s32.totalorder %s13, 0
      %p46 = por %p44, %p45
      %p47 = scmp.ne.s32.totalorder %s33, %s34
      %p48 = scmp.eq.s32.totalorder %s14, 1
      %p49 = por %p47, %p48
      %p51 = scmp.ne.s32.totalorder %s34, %s50
      %p52 = scmp.eq.s32.totalorder %s14, 0
      %p53 = por %p51, %p52
      %s54 = ssub.s32 %s16, %s23
      %p55 = scmp.eq.s32.totalorder %s54, 0
      %s57 = sadd.s32 %s56, 1
      %s58 = scalar_select %p55, %s56, %s57
      %p61 = pneg %p55
      %p62 = scmp.eq.s32.totalorder %s8, 1
      %p63 = por %p61, %p62
      %p64 = scmp.ne.s32.totalorder %s56, %s59
      %p65 = scmp.eq.s32.totalorder %s8, 0
      %p66 = por %p64, %p65
      %p67 = scmp.ne.s32.totalorder %s56, %s59
      %p68 = scmp.eq.s32.totalorder %s13, 1
      %p69 = por %p67, %p68
      %p70 = scmp.ne.s32.totalorder %s59, %s60
      %p71 = scmp.eq.s32.totalorder %s13, 0
      %p72 = por %p70, %p71
      %p73 = scmp.ne.s32.totalorder %s59, %s60
      %p74 = scmp.eq.s32.totalorder %s14, 1
      %p75 = por %p73, %p74
      %p77 = scmp.ne.s32.totalorder %s60, %s76
      %p78 = scmp.eq.s32.totalorder %s14, 0
      %p79 = por %p77, %p78
      %s80 = ssub.s32 %s15, %s27
      %s81 = ssub.s32 %s16, %s23
      %s82 = sor.u32 %s80, %s81
      %p83 = scmp.eq.s32.totalorder %s82, 0
      %s85 = sadd.s32 %s84, 1
      %s86 = scalar_select %p83, %s84, %s85
      %p89 = pneg %p83
      %p90 = scmp.eq.s32.totalorder %s8, 1
      %p91 = por %p89, %p90
      %p92 = scmp.ne.s32.totalorder %s84, %s87
      %p93 = scmp.eq.s32.totalorder %s8, 0
      %p94 = por %p92, %p93
      %p95 = scmp.ne.s32.totalorder %s84, %s87
      %p96 = scmp.eq.s32.totalorder %s13, 1
      %p97 = por %p95, %p96
      %p98 = scmp.ne.s32.totalorder %s87, %s88
      %p99 = scmp.eq.s32.totalorder %s13, 0
      %p100 = por %p98, %p99
      %p101 = scmp.ne.s32.totalorder %s87, %s88
      %p102 = scmp.eq.s32.totalorder %s14, 1
      %p103 = por %p101, %p102
      %p105 = scmp.ne.s32.totalorder %s88, %s104
      %p106 = scmp.eq.s32.totalorder %s14, 0
      %p107 = por %p105, %p106
      %p108 = scmp.le.s32.totalorder 1, %s8
      %p109 = scmp.lt.s32.totalorder %s8, 3
      %p110 = pnand %p108, %p109
      %p111 = pneg %p110
      // Predicated region
      $region9: #{_lambda_.5} parent=5 // pred_check
        _
      $region10: #{_lambda_.5} parent=5 // pred_check_branch
        %113 = sbr.rel (%p110) target = $region12
      $region11: #{_lambda_.5} parent=5 // pred_region
        %s114 = ssub.s32 %s8, 1
        // Predicated region
        $region13: #{_lambda_.5} parent=11 // pred_check
          %p115 = pneg %p46
        $region14: #{_lambda_.5} parent=11 // pred_check_branch
          %117 = sbr.rel (%p115) target = $region16
        $region15: #{_lambda_.5} parent=11 // pred_region
          %s118 = smul.u32 2, %s17
          %p119 = scmp.lt.s32.totalorder %s118, 1
          %s120 = scalar_select %p119, %s118, 1
          %s121 = smul.addr %s120, 4
          %s122 = scalar_lea.vmem %s0, %s121
          %s123 = smul.u32 2, %s17
        $region16: #{_lambda_.5} parent=11 // pred_fallthru
          _
      $region12: #{_lambda_.5} parent=5 // pred_fallthru
        _
      %p124 = scmp.lt.s32.totalorder %s8, 2
      // Predicated region
      $region17: #{_lambda_.5} parent=5 // pred_check
        %p125 = pneg %p124
      $region18: #{_lambda_.5} parent=5 // pred_check_branch
        %127 = sbr.rel (%p125) target = $region20
      $region19: #{_lambda_.5} parent=5 // pred_region
        // Predicated region
        $region21: #{_lambda_.5} parent=19 // pred_check
          %p128 = pneg %p66
        $region22: #{_lambda_.5} parent=19 // pred_check_branch
          %130 = sbr.rel (%p128) target = $region24
        $region23: #{_lambda_.5} parent=19 // pred_region
          %s131 = smul.u32 64, %s16
          %p132 = scmp.lt.s32.totalorder %s131, 127
          %s133 = scalar_select %p132, %s131, 127
          %s134 = smul.addr %s133, 4
          %s135 = scalar_lea.vmem %s1, %s134
          %s136 = smul.u32 64, %s16
        $region24: #{_lambda_.5} parent=19 // pred_fallthru
          _
      $region20: #{_lambda_.5} parent=5 // pred_fallthru
        _
      %p137 = scmp.le.s32.totalorder 1, %s8
      %p138 = scmp.lt.s32.totalorder %s8, 3
      %p139 = pnand %p137, %p138
      %p140 = pneg %p139
      // Predicated region
      $region25: #{_lambda_.5} parent=5 // pred_check
        _
      $region26: #{_lambda_.5} parent=5 // pred_check_branch
        %142 = sbr.rel (%p139) target = $region28
      $region27: #{_lambda_.5} parent=5 // pred_region
        %s143 = ssub.s32 %s8, 1
        %s144 = smul.u32 2, %s17
        %p145 = scmp.lt.s32.totalorder %s144, 1
        %s146 = scalar_select %p145, %s144, 1
        %s147 = smul.addr %s146, 4
        %s148 = scalar_lea.vmem %s0, %s147
        %p149 = pneg %p46
        %p150 = pneg %p43
        %s151 = smul.u32 64, %s18
        %p152 = scmp.lt.s32.totalorder %s151, 127
        %s153 = scalar_select %p152, %s151, 127
        %s154 = smul.addr %s153, 4
        %s155 = scalar_lea.vmem %s1, %s154
        %p156 = pneg %p72
        %p157 = pneg %p69
        %p158 = pneg %p100
        %p159 = pneg %p97
        %s160 = sand.u32 %s87, 1
        %s161 = sand.u32 %s87, 1
        %s162 = smul.addr %s161, 32
        %s163 = scalar_lea.vmem [#allocation2], %s162
        %s164 = smul.u32 2, %s17
        %p165 = scmp.lt.s32.totalorder %s164, 1
        %s166 = scalar_select %p165, %s164, 1
        %s167 = smul.addr %s166, 4
        %s168 = scalar_lea.vmem %s0, %s167
        %s169 = smul.u32 2, %s17
        %s170 = smul.u32 64, %s18
        %p171 = scmp.lt.s32.totalorder %s170, 127
        %s172 = scalar_select %p171, %s170, 127
        %s173 = smul.addr %s172, 4
        %s174 = scalar_lea.vmem %s1, %s173
        %s175 = smul.u32 64, %s18
        %s176 = smul.u32 2, %s17
        %s177 = smul.u32 4, %s18
        %v179 = vld [vmem:[%s168] sm:$0xf]
        %v180 = vld [vmem:[%s168 + $0x4] sm:$0xf]
        %v181 = vld [vmem:[%s174] sm:$0xf]
        %v182 = vld [vmem:[%s174 + $0x4] sm:$0xf]
        %v183 = vld [vmem:[%s174 + $0x8] sm:$0xf]
        %v184 = vld [vmem:[%s174 + $0xc] sm:$0xf]
        %v185 = vld [vmem:[%s174 + $0x10] sm:$0xf]
        %v186 = vld [vmem:[%s174 + $0x14] sm:$0xf]
        %v187 = vld [vmem:[%s174 + $0x18] sm:$0xf]
        %v188 = vld [vmem:[%s174 + $0x1c] sm:$0xf]
        %v189 = vld [vmem:[%s174 + $0x20] sm:$0xf]
        %v190 = vld [vmem:[%s174 + $0x24] sm:$0xf]
        %v191 = vld [vmem:[%s174 + $0x28] sm:$0xf]
        %v192 = vld [vmem:[%s174 + $0x2c] sm:$0xf]
        %v193 = vld [vmem:[%s174 + $0x30] sm:$0xf]
        %v194 = vld [vmem:[%s174 + $0x34] sm:$0xf]
        %v195 = vld [vmem:[%s174 + $0x38] sm:$0xf]
        %v196 = vld [vmem:[%s174 + $0x3c] sm:$0xf]
        %v197 = vld [vmem:[%s174 + $0x40] sm:$0xf]
        %v198 = vld [vmem:[%s174 + $0x44] sm:$0xf]
        %v199 = vld [vmem:[%s174 + $0x48] sm:$0xf]
        %v200 = vld [vmem:[%s174 + $0x4c] sm:$0xf]
        %v201 = vld [vmem:[%s174 + $0x50] sm:$0xf]
        %v202 = vld [vmem:[%s174 + $0x54] sm:$0xf]
        %v203 = vld [vmem:[%s174 + $0x58] sm:$0xf]
        %v204 = vld [vmem:[%s174 + $0x5c] sm:$0xf]
        %v205 = vld [vmem:[%s174 + $0x60] sm:$0xf]
        %v206 = vld [vmem:[%s174 + $0x64] sm:$0xf]
        %v207 = vld [vmem:[%s174 + $0x68] sm:$0xf]
        %v208 = vld [vmem:[%s174 + $0x6c] sm:$0xf]
        %v209 = vld [vmem:[%s174 + $0x70] sm:$0xf]
        %v210 = vld [vmem:[%s174 + $0x74] sm:$0xf]
        %v211 = vld [vmem:[%s174 + $0x78] sm:$0xf]
        %v212 = vld [vmem:[%s174 + $0x7c] sm:$0xf]
        %v213 = vld [vmem:[%s174 + $0x80] sm:$0xf]
        %v214 = vld [vmem:[%s174 + $0x84] sm:$0xf]
        %v215 = vld [vmem:[%s174 + $0x88] sm:$0xf]
        %v216 = vld [vmem:[%s174 + $0x8c] sm:$0xf]
        %v217 = vld [vmem:[%s174 + $0x90] sm:$0xf]
        %v218 = vld [vmem:[%s174 + $0x94] sm:$0xf]
        %v219 = vld [vmem:[%s174 + $0x98] sm:$0xf]
        %v220 = vld [vmem:[%s174 + $0x9c] sm:$0xf]
        %v221 = vld [vmem:[%s174 + $0xa0] sm:$0xf]
        %v222 = vld [vmem:[%s174 + $0xa4] sm:$0xf]
        %v223 = vld [vmem:[%s174 + $0xa8] sm:$0xf]
        %v224 = vld [vmem:[%s174 + $0xac] sm:$0xf]
        %v225 = vld [vmem:[%s174 + $0xb0] sm:$0xf]
        %v226 = vld [vmem:[%s174 + $0xb4] sm:$0xf]
        %v227 = vld [vmem:[%s174 + $0xb8] sm:$0xf]
        %v228 = vld [vmem:[%s174 + $0xbc] sm:$0xf]
        %v229 = vld [vmem:[%s174 + $0xc0] sm:$0xf]
        %v230 = vld [vmem:[%s174 + $0xc4] sm:$0xf]
        %v231 = vld [vmem:[%s174 + $0xc8] sm:$0xf]
        %v232 = vld [vmem:[%s174 + $0xcc] sm:$0xf]
        %v233 = vld [vmem:[%s174 + $0xd0] sm:$0xf]
        %v234 = vld [vmem:[%s174 + $0xd4] sm:$0xf]
        %v235 = vld [vmem:[%s174 + $0xd8] sm:$0xf]
        %v236 = vld [vmem:[%s174 + $0xdc] sm:$0xf]
        %v237 = vld [vmem:[%s174 + $0xe0] sm:$0xf]
        %v238 = vld [vmem:[%s174 + $0xe4] sm:$0xf]
        %v239 = vld [vmem:[%s174 + $0xe8] sm:$0xf]
        %v240 = vld [vmem:[%s174 + $0xec] sm:$0xf]
        %v241 = vld [vmem:[%s174 + $0xf0] sm:$0xf]
        %v242 = vld [vmem:[%s174 + $0xf4] sm:$0xf]
        %v243 = vld [vmem:[%s174 + $0xf8] sm:$0xf]
        %v244 = vld [vmem:[%s174 + $0xfc] sm:$0xf]
        %v247 = vunpack.c.l.b16 %v179
        %v248 = vunpack.c.l.b16 %v180
        %v249 = vpack.c.b16 %v248, %v247
        %v315 = vunpack.c.l.b16 %v181
        %v316 = vunpack.c.l.b16 %v182
        %v317 = vunpack.c.l.b16 %v183
        %v318 = vunpack.c.l.b16 %v184
        %v319 = vunpack.c.l.b16 %v185
        %v320 = vunpack.c.l.b16 %v186
        %v321 = vunpack.c.l.b16 %v187
        %v322 = vunpack.c.l.b16 %v188
        %v323 = vunpack.c.l.b16 %v189
        %v324 = vunpack.c.l.b16 %v190
        %v325 = vunpack.c.l.b16 %v191
        %v326 = vunpack.c.l.b16 %v192
        %v327 = vunpack.c.l.b16 %v193
        %v328 = vunpack.c.l.b16 %v194
        %v329 = vunpack.c.l.b16 %v195
        %v330 = vunpack.c.l.b16 %v196
        %v331 = vunpack.c.l.b16 %v197
        %v332 = vunpack.c.l.b16 %v198
        %v333 = vunpack.c.l.b16 %v199
        %v334 = vunpack.c.l.b16 %v200
        %v335 = vunpack.c.l.b16 %v201
        %v336 = vunpack.c.l.b16 %v202
        %v337 = vunpack.c.l.b16 %v203
        %v338 = vunpack.c.l.b16 %v204
        %v339 = vunpack.c.l.b16 %v205
        %v340 = vunpack.c.l.b16 %v206
        %v341 = vunpack.c.l.b16 %v207
        %v342 = vunpack.c.l.b16 %v208
        %v343 = vunpack.c.l.b16 %v209
        %v344 = vunpack.c.l.b16 %v210
        %v345 = vunpack.c.l.b16 %v211
        %v346 = vunpack.c.l.b16 %v212
        %v347 = vunpack.c.l.b16 %v213
        %v348 = vunpack.c.l.b16 %v214
        %v349 = vunpack.c.l.b16 %v215
        %v350 = vunpack.c.l.b16 %v216
        %v351 = vunpack.c.l.b16 %v217
        %v352 = vunpack.c.l.b16 %v218
        %v353 = vunpack.c.l.b16 %v219
        %v354 = vunpack.c.l.b16 %v220
        %v355 = vunpack.c.l.b16 %v221
        %v356 = vunpack.c.l.b16 %v222
        %v357 = vunpack.c.l.b16 %v223
        %v358 = vunpack.c.l.b16 %v224
        %v359 = vunpack.c.l.b16 %v225
        %v360 = vunpack.c.l.b16 %v226
        %v361 = vunpack.c.l.b16 %v227
        %v362 = vunpack.c.l.b16 %v228
        %v363 = vunpack.c.l.b16 %v229
        %v364 = vunpack.c.l.b16 %v230
        %v365 = vunpack.c.l.b16 %v231
        %v366 = vunpack.c.l.b16 %v232
        %v367 = vunpack.c.l.b16 %v233
        %v368 = vunpack.c.l.b16 %v234
        %v369 = vunpack.c.l.b16 %v235
        %v370 = vunpack.c.l.b16 %v236
        %v371 = vunpack.c.l.b16 %v237
        %v372 = vunpack.c.l.b16 %v238
        %v373 = vunpack.c.l.b16 %v239
        %v374 = vunpack.c.l.b16 %v240
        %v375 = vunpack.c.l.b16 %v241
        %v376 = vunpack.c.l.b16 %v242
        %v377 = vunpack.c.l.b16 %v243
        %v378 = vunpack.c.l.b16 %v244
        %v379 = vpack.c.b16 %v316, %v315
        %v380 = vpack.c.b16 %v318, %v317
        %v381 = vpack.c.b16 %v320, %v319
        %v382 = vpack.c.b16 %v322, %v321
        %v383 = vpack.c.b16 %v324, %v323
        %v384 = vpack.c.b16 %v326, %v325
        %v385 = vpack.c.b16 %v328, %v327
        %v386 = vpack.c.b16 %v330, %v329
        %v387 = vpack.c.b16 %v332, %v331
        %v388 = vpack.c.b16 %v334, %v333
        %v389 = vpack.c.b16 %v336, %v335
        %v390 = vpack.c.b16 %v338, %v337
        %v391 = vpack.c.b16 %v340, %v339
        %v392 = vpack.c.b16 %v342, %v341
        %v393 = vpack.c.b16 %v344, %v343
        %v394 = vpack.c.b16 %v346, %v345
        %v395 = vpack.c.b16 %v348, %v347
        %v396 = vpack.c.b16 %v350, %v349
        %v397 = vpack.c.b16 %v352, %v351
        %v398 = vpack.c.b16 %v354, %v353
        %v399 = vpack.c.b16 %v356, %v355
        %v400 = vpack.c.b16 %v358, %v357
        %v401 = vpack.c.b16 %v360, %v359
        %v402 = vpack.c.b16 %v362, %v361
        %v403 = vpack.c.b16 %v364, %v363
        %v404 = vpack.c.b16 %v366, %v365
        %v405 = vpack.c.b16 %v368, %v367
        %v406 = vpack.c.b16 %v370, %v369
        %v407 = vpack.c.b16 %v372, %v371
        %v408 = vpack.c.b16 %v374, %v373
        %v409 = vpack.c.b16 %v376, %v375
        %v410 = vpack.c.b16 %v378, %v377
        %443 = vmatprep.subr.bf16.mxu0 0
        %444 = vmatpush1.bf16.xpose.msra.mxu0 %v386
        %445 = vmatprep.subr.bf16.mxu0 0
        %446 = vmatpush1.bf16.xpose.msra.mxu0 %v385
        %447 = vmatprep.subr.bf16.mxu0 0
        %448 = vmatpush1.bf16.xpose.msra.mxu0 %v384
        %449 = vmatprep.subr.bf16.mxu0 0
        %450 = vmatpush1.bf16.xpose.msra.mxu0 %v383
        %451 = vmatprep.subr.bf16.mxu0 0
        %452 = vmatpush1.bf16.xpose.msra.mxu0 %v382
        %453 = vmatprep.subr.bf16.mxu0 0
        %454 = vmatpush1.bf16.xpose.msra.mxu0 %v381
        %455 = vmatprep.subr.bf16.mxu0 0
        %456 = vmatpush1.bf16.xpose.msra.mxu0 %v380
        %457 = vmatprep.subr.bf16.mxu0 0
        %458 = vmatpush1.bf16.xpose.msra.mxu0 %v379
        %459 = vmatprep.subr.bf16.mxu0 0
        %460 = vmatpush2.bf16.xpose.msra.mxu0 %v394
        %461 = vmatprep.subr.bf16.mxu0 0
        %462 = vmatpush2.bf16.xpose.msra.mxu0 %v393
        %463 = vmatprep.subr.bf16.mxu0 0
        %464 = vmatpush2.bf16.xpose.msra.mxu0 %v392
        %465 = vmatprep.subr.bf16.mxu0 0
        %466 = vmatpush2.bf16.xpose.msra.mxu0 %v391
        %467 = vmatprep.subr.bf16.mxu0 0
        %468 = vmatpush2.bf16.xpose.msra.mxu0 %v390
        %469 = vmatprep.subr.bf16.mxu0 0
        %470 = vmatpush2.bf16.xpose.msra.mxu0 %v389
        %471 = vmatprep.subr.bf16.mxu0 0
        %472 = vmatpush2.bf16.xpose.msra.mxu0 %v388
        %473 = vmatprep.subr.bf16.mxu0 0
        %474 = vmatpush2.bf16.xpose.msra.mxu0 %v387
        %475 = vmatprep.mubr.bf16.mxu0 0
        %476 = vmatmul.mubr.bf16.gmra.mxu0 %v249
        %v477 = vpop.f32.mrf.mxu0
        %v478 = vadd.f32 0.0, %v477
        %v479 = vpop.f32.mrf.mxu0
        %v480 = vadd.f32 0.0, %v479
        %v481 = vpop.f32.mrf.mxu0
        %v482 = vadd.f32 0.0, %v481
        %v483 = vpop.f32.mrf.mxu0
        %v484 = vadd.f32 0.0, %v483
        %485 = vdwg.mxu0
        %486 = vmatprep.subr.bf16.mxu0 0
        %487 = vmatpush1.bf16.xpose.msra.mxu0 %v402
        %488 = vmatprep.subr.bf16.mxu0 0
        %489 = vmatpush1.bf16.xpose.msra.mxu0 %v401
        %490 = vmatprep.subr.bf16.mxu0 0
        %491 = vmatpush1.bf16.xpose.msra.mxu0 %v400
        %492 = vmatprep.subr.bf16.mxu0 0
        %493 = vmatpush1.bf16.xpose.msra.mxu0 %v399
        %494 = vmatprep.subr.bf16.mxu0 0
        %495 = vmatpush1.bf16.xpose.msra.mxu0 %v398
        %496 = vmatprep.subr.bf16.mxu0 0
        %497 = vmatpush1.bf16.xpose.msra.mxu0 %v397
        %498 = vmatprep.subr.bf16.mxu0 0
        %499 = vmatpush1.bf16.xpose.msra.mxu0 %v396
        %500 = vmatprep.subr.bf16.mxu0 0
        %501 = vmatpush1.bf16.xpose.msra.mxu0 %v395
        %502 = vmatprep.subr.bf16.mxu0 0
        %503 = vmatpush2.bf16.xpose.msra.mxu0 %v410
        %504 = vmatprep.subr.bf16.mxu0 0
        %505 = vmatpush2.bf16.xpose.msra.mxu0 %v409
        %506 = vmatprep.subr.bf16.mxu0 0
        %507 = vmatpush2.bf16.xpose.msra.mxu0 %v408
        %508 = vmatprep.subr.bf16.mxu0 0
        %509 = vmatpush2.bf16.xpose.msra.mxu0 %v407
        %510 = vmatprep.subr.bf16.mxu0 0
        %511 = vmatpush2.bf16.xpose.msra.mxu0 %v406
        %512 = vmatprep.subr.bf16.mxu0 0
        %513 = vmatpush2.bf16.xpose.msra.mxu0 %v405
        %514 = vmatprep.subr.bf16.mxu0 0
        %515 = vmatpush2.bf16.xpose.msra.mxu0 %v404
        %516 = vmatprep.subr.bf16.mxu0 0
        %517 = vmatpush2.bf16.xpose.msra.mxu0 %v403
        %518 = vmatprep.mubr.bf16.mxu0 0
        %519 = vmatmul.mubr.bf16.gmra.mxu0 %v249
        %v520 = vpop.f32.mrf.mxu0
        %v521 = vadd.f32 0.0, %v520
        %v522 = vpop.f32.mrf.mxu0
        %v523 = vadd.f32 0.0, %v522
        %v524 = vpop.f32.mrf.mxu0
        %v525 = vadd.f32 0.0, %v524
        %v526 = vpop.f32.mrf.mxu0
        %v527 = vadd.f32 0.0, %v526
        %528 = vdwg.mxu0
        %v529 = vpack.c.bf16 %v482, %v478
        %v530 = vpack.c.bf16 %v484, %v480
        %v531 = vpack.c.bf16 %v525, %v521
        %v532 = vpack.c.bf16 %v527, %v523
        %v537 = vunpack.c.l.b16 %v529
        %v538 = vunpack.c.l.b16 %v530
        %v539 = vunpack.c.l.b16 %v531
        %v540 = vunpack.c.l.b16 %v532
        %v541 = vunpack.c.h.b16 %v529
        %v542 = vunpack.c.h.b16 %v530
        %v543 = vunpack.c.h.b16 %v531
        %v544 = vunpack.c.h.b16 %v532
        %v545 = vpack.c.b16 %v538, %v537
        %v546 = vpack.c.b16 %v540, %v539
        %v547 = vpack.c.b16 %v542, %v541
        %v548 = vpack.c.b16 %v544, %v543
        %553 = vst [vmem:[%s163] sm:$0xff] %v545
        %554 = vst [vmem:[%s163 + $0x8] sm:$0xff] %v546
        %555 = vst [vmem:[%s163 + $0x10] sm:$0xff] %v547
        %556 = vst [vmem:[%s163 + $0x18] sm:$0xff] %v548
        %s557 = sand.u32 %s87, 1
        %s558 = sand.u32 %s87, 1
        %s559 = smul.addr %s558, 32
        %s560 = scalar_lea.vmem [#allocation2], %s559
        // Predicated region
        $region29: #{_lambda_.5} parent=27 // pred_check
          %p561 = pneg %p97
        $region30: #{_lambda_.5} parent=27 // pred_check_branch
          %563 = sbr.rel (%p561) target = $region32
        $region31: #{_lambda_.5} parent=27 // pred_region
          %s564 = smul.u32 2, %s17
          %s565 = smul.u32 4, %s18
          %s566 = smul.addr %s564, 8
          %s567 = sadd.s32 %s565, %s566
          %s568 = smul.addr %s567, 4
          %s569 = scalar_lea.vmem %s2, %s568
          // Predicated region
          $region33: #{_lambda_.5} parent=31 // pred_check
            _
          $region34: #{_lambda_.5} parent=31 // pred_check_branch
            %571 = sbr.rel (0) target = $region36
          $region35: #{_lambda_.5} parent=31 // pred_region
            // Predicated region
            $region37: #{_lambda_.5} parent=35 // pred_check
              _
            $region38: #{_lambda_.5} parent=35 // pred_check_branch
              %573 = sbr.rel (0) target = $region40
            $region39: #{_lambda_.5} parent=35 // pred_region
              loop: start=0, step=1, limit=1
              $region41: #{_lambda_.5} parent=39 // loop_pre_header
                _
              $region42: #{_lambda_.5} parent=39 // loop_header
                %s575 = sphi 0, %s579
                %p576 = scmp.ge.s32.totalorder %s575, 1
                %s580 = sphi %s560, %s560
                %s581 = sphi %s569, %s569
              $region43: #{_lambda_.5} parent=39 // loop_header_branch
                %578 = sbr.rel (%p576) target = $region47
              $region44: #{_lambda_.5} parent=39 // loop_body
                %v582 = vld [vmem:[%s580] sm:$0xff]
                %583 = vst [vmem:[%s581] sm:$0xff] %v582
                %v584 = vld [vmem:[%s580 + $0x8] sm:$0xff]
                %585 = vst [vmem:[%s581 + $0x8] sm:$0xff] %v584
                %v586 = vld [vmem:[%s580 + $0x10] sm:$0xff]
                %587 = vst [vmem:[%s581 + $0x20] sm:$0xff] %v586
                %v588 = vld [vmem:[%s580 + $0x18] sm:$0xff]
                %589 = vst [vmem:[%s581 + $0x28] sm:$0xff] %v588
              $region45: #{_lambda_.5} parent=39 // loop_footer
                %s579 = sadd.s32 1, %s575
              $region46: #{_lambda_.5} parent=39 // loop_footer_branch
                %574 = sbr.rel target = $region42
              $region47: #{_lambda_.5} parent=39 // loop_exit
                _
            $region40: #{_lambda_.5} parent=35 // pred_fallthru
              _
            // Predicated region
            $region48: #{_lambda_.5} parent=35 // pred_check
              _
            $region49: #{_lambda_.5} parent=35 // pred_check_branch
              %591 = sbr.rel target = $region51
            $region50: #{_lambda_.5} parent=35 // pred_region
              _
            $region51: #{_lambda_.5} parent=35 // pred_fallthru
              _
          $region36: #{_lambda_.5} parent=31 // pred_fallthru
            _
          %592 = vnop
        $region32: #{_lambda_.5} parent=27 // pred_fallthru
          _
      $region28: #{_lambda_.5} parent=5 // pred_fallthru
        _
      %p593 = scmp.le.s32.totalorder 2, %s8
      // Predicated region
      $region52: #{_lambda_.5} parent=5 // pred_check
        %p594 = pneg %p593
      $region53: #{_lambda_.5} parent=5 // pred_check_branch
        %596 = sbr.rel (%p594) target = $region55
      $region54: #{_lambda_.5} parent=5 // pred_region
        %s597 = ssub.s32 %s8, 2
        // Predicated region
        $region56: #{_lambda_.5} parent=54 // pred_check
          %p598 = pneg %p103
        $region57: #{_lambda_.5} parent=54 // pred_check_branch
          %600 = sbr.rel (%p598) target = $region59
        $region58: #{_lambda_.5} parent=54 // pred_region
          %s601 = sand.u32 %s88, 1
          %s602 = sand.u32 %s88, 1
          %s603 = smul.addr %s602, 32
          %s604 = scalar_lea.vmem [#allocation2], %s603
        $region59: #{_lambda_.5} parent=54 // pred_fallthru
          _
      $region55: #{_lambda_.5} parent=5 // pred_fallthru
        _
    $region6: #{_lambda_.5} parent=1 // loop_footer
      %s12 = sadd.s32 1, %s8
    $region7: #{_lambda_.5} parent=1 // loop_footer_branch
      %7 = sbr.rel target = $region3
    $region8: #{_lambda_.5} parent=1 // loop_exit
      _

// kernel: _lambda_.4
$region0: #{_lambda_.4}
  #allocation0 [shape = 'u32[]', space=smem, size = 0x4, offset = 0x4, fixed_abs, tag = 'smem constant byte address 0x4 - core index']
  #allocation1 [shape = 'u32[144,128]{1,0:T(1,128)}', space=vmem, size = 0x12000, scoped, tag = 'internal scratch']
  %s0 = inlined_call_operand.vmem [shape: bf16[2,8,128], index: 0, kind: input, shape index: {}]
  %s1 = inlined_call_operand.vmem [shape: f32[1,128], index: 1, kind: input, shape index: {}]
  %s2 = inlined_call_operand.vmem [shape: f32[1,128], index: 2, kind: input, shape index: {}]
  %s3 = inlined_call_operand.vmem [shape: bf16[128,384], index: 3, kind: input, shape index: {}]
  %s4 = inlined_call_operand.vmem [shape: f32[1,384], index: 4, kind: input, shape index: {}]
  %s5 = inlined_call_operand.vmem [shape: bf16[2,64,128], index: 5, kind: input, shape index: {}]
  %s6 = inlined_call_operand.vmem [shape: f32[1,128], index: 6, kind: input, shape index: {}]
  %s7 = inlined_call_operand.vmem [shape: f32[1,128], index: 7, kind: input, shape index: {}]
  %s8 = inlined_call_operand.vmem [shape: f32[1,128], index: 8, kind: input, shape index: {}]
  %s9 = inlined_call_operand.vmem [shape: bf16[128,512], index: 9, kind: input, shape index: {}]
  %s10 = inlined_call_operand.vmem [shape: f32[1,512], index: 10, kind: input, shape index: {}]
  %s11 = inlined_call_operand.vmem [shape: bf16[512,128], index: 11, kind: input, shape index: {}]
  %s12 = inlined_call_operand.vmem [shape: f32[1,128], index: 12, kind: input, shape index: {}]
  %s13 = inlined_call_operand.vmem [shape: f32[1,128], index: 13, kind: input, shape index: {}]
  %s14 = inlined_call_operand.vmem [shape: f32[1,128], index: 14, kind: input, shape index: {}]
  %s15 = inlined_call_operand.vmem [shape: bf16[2,8,128], index: 15, kind: output, shape index: {}]
  %s16 = sld [smem:[#allocation0]]
  $region93: #{_lambda_.4} parent=0
    _
  %s18 = ssub.s32 1, %s16
  %s19 = scalar_select 0, %s18, %s16
  loop: start=0, step=1, limit=4
  $region2: #{_lambda_.4} parent=0 // loop_pre_header
    _
  $region3: #{_lambda_.4} parent=0 // loop_header
    %s21 = sphi 0, %s25
    %p22 = scmp.ge.s32.totalorder %s21, 4
    %s31 = sphi 0, %s33
    %s34 = sphi 0, %s31
    %s35 = sphi 0, %s34
    %s51 = sphi 0, %s35
    %s55 = sphi 0, %s55
    %s57 = sphi 0, %s55
    %s58 = sphi 0, %s57
    %s72 = sphi 0, %s58
    %s76 = sphi 0, %s76
    %s78 = sphi 0, %s76
    %s79 = sphi 0, %s78
    %s93 = sphi 0, %s79
    %s97 = sphi 0, %s97
    %s99 = sphi 0, %s97
    %s100 = sphi 0, %s99
    %s114 = sphi 0, %s100
    %s118 = sphi 0, %s118
    %s120 = sphi 0, %s118
    %s121 = sphi 0, %s120
    %s135 = sphi 0, %s121
    %s139 = sphi 0, %s139
    %s141 = sphi 0, %s139
    %s142 = sphi 0, %s141
    %s156 = sphi 0, %s142
    %s160 = sphi 0, %s160
    %s162 = sphi 0, %s160
    %s163 = sphi 0, %s162
    %s177 = sphi 0, %s163
    %s181 = sphi 0, %s181
    %s183 = sphi 0, %s181
    %s184 = sphi 0, %s183
    %s198 = sphi 0, %s184
    %s202 = sphi 0, %s202
    %s204 = sphi 0, %s202
    %s205 = sphi 0, %s204
    %s219 = sphi 0, %s205
    %s223 = sphi 0, %s223
    %s225 = sphi 0, %s223
    %s226 = sphi 0, %s225
    %s240 = sphi 0, %s226
    %s244 = sphi 0, %s244
    %s246 = sphi 0, %s244
    %s247 = sphi 0, %s246
    %s261 = sphi 0, %s247
    %s265 = sphi 0, %s265
    %s267 = sphi 0, %s265
    %s268 = sphi 0, %s267
    %s282 = sphi 0, %s268
    %s286 = sphi 0, %s286
    %s288 = sphi 0, %s286
    %s289 = sphi 0, %s288
    %s303 = sphi 0, %s289
    %s307 = sphi 0, %s307
    %s309 = sphi 0, %s307
    %s310 = sphi 0, %s309
    %s324 = sphi 0, %s310
    %s328 = sphi 0, %s328
    %s330 = sphi 0, %s328
    %s331 = sphi 0, %s330
    %s345 = sphi 0, %s331
    %s351 = sphi 0, %s353
    %s354 = sphi 0, %s351
    %s355 = sphi 0, %s354
    %s371 = sphi 0, %s355
  $region4: #{_lambda_.4} parent=0 // loop_header_branch
    %24 = sbr.rel (%p22) target = $region8
  $region5: #{_lambda_.4} parent=0 // loop_body
    %s26 = ssub.s32 %s21, 1
    %s27 = ssub.s32 %s21, 2
    %s28 = sadd.s32 %s21, 1
    %s29 = ssub.s32 %s21, %s28
    %p30 = scmp.eq.s32.totalorder %s29, 0
    %s32 = sadd.s32 %s31, 1
    %s33 = scalar_select %p30, %s31, %s32
    %p36 = pneg %p30
    %p37 = scmp.eq.s32.totalorder %s21, 1
    %p38 = por %p36, %p37
    %p39 = scmp.ne.s32.totalorder %s31, %s34
    %p40 = scmp.eq.s32.totalorder %s21, 0
    %p41 = por %p39, %p40
    %p42 = scmp.ne.s32.totalorder %s31, %s34
    %p43 = scmp.eq.s32.totalorder %s26, 1
    %p44 = por %p42, %p43
    %p45 = scmp.ne.s32.totalorder %s34, %s35
    %p46 = scmp.eq.s32.totalorder %s26, 0
    %p47 = por %p45, %p46
    %p48 = scmp.ne.s32.totalorder %s34, %s35
    %p49 = scmp.eq.s32.totalorder %s27, 1
    %p50 = por %p48, %p49
    %p52 = scmp.ne.s32.totalorder %s35, %s51
    %p53 = scmp.eq.s32.totalorder %s27, 0
    %p54 = por %p52, %p53
    %s56 = sadd.s32 %s55, 1
    %p59 = scmp.eq.s32.totalorder %s21, 1
    %p60 = scmp.ne.s32.totalorder %s55, %s57
    %p61 = scmp.eq.s32.totalorder %s21, 0
    %p62 = por %p60, %p61
    %p63 = scmp.ne.s32.totalorder %s55, %s57
    %p64 = scmp.eq.s32.totalorder %s26, 1
    %p65 = por %p63, %p64
    %p66 = scmp.ne.s32.totalorder %s57, %s58
    %p67 = scmp.eq.s32.totalorder %s26, 0
    %p68 = por %p66, %p67
    %p69 = scmp.ne.s32.totalorder %s57, %s58
    %p70 = scmp.eq.s32.totalorder %s27, 1
    %p71 = por %p69, %p70
    %p73 = scmp.ne.s32.totalorder %s58, %s72
    %p74 = scmp.eq.s32.totalorder %s27, 0
    %p75 = por %p73, %p74
    %s77 = sadd.s32 %s76, 1
    %p80 = scmp.eq.s32.totalorder %s21, 1
    %p81 = scmp.ne.s32.totalorder %s76, %s78
    %p82 = scmp.eq.s32.totalorder %s21, 0
    %p83 = por %p81, %p82
    %p84 = scmp.ne.s32.totalorder %s76, %s78
    %p85 = scmp.eq.s32.totalorder %s26, 1
    %p86 = por %p84, %p85
    %p87 = scmp.ne.s32.totalorder %s78, %s79
    %p88 = scmp.eq.s32.totalorder %s26, 0
    %p89 = por %p87, %p88
    %p90 = scmp.ne.s32.totalorder %s78, %s79
    %p91 = scmp.eq.s32.totalorder %s27, 1
    %p92 = por %p90, %p91
    %p94 = scmp.ne.s32.totalorder %s79, %s93
    %p95 = scmp.eq.s32.totalorder %s27, 0
    %p96 = por %p94, %p95
    %s98 = sadd.s32 %s97, 1
    %p101 = scmp.eq.s32.totalorder %s21, 1
    %p102 = scmp.ne.s32.totalorder %s97, %s99
    %p103 = scmp.eq.s32.totalorder %s21, 0
    %p104 = por %p102, %p103
    %p105 = scmp.ne.s32.totalorder %s97, %s99
    %p106 = scmp.eq.s32.totalorder %s26, 1
    %p107 = por %p105, %p106
    %p108 = scmp.ne.s32.totalorder %s99, %s100
    %p109 = scmp.eq.s32.totalorder %s26, 0
    %p110 = por %p108, %p109
    %p111 = scmp.ne.s32.totalorder %s99, %s100
    %p112 = scmp.eq.s32.totalorder %s27, 1
    %p113 = por %p111, %p112
    %p115 = scmp.ne.s32.totalorder %s100, %s114
    %p116 = scmp.eq.s32.totalorder %s27, 0
    %p117 = por %p115, %p116
    %s119 = sadd.s32 %s118, 1
    %p122 = scmp.eq.s32.totalorder %s21, 1
    %p123 = scmp.ne.s32.totalorder %s118, %s120
    %p124 = scmp.eq.s32.totalorder %s21, 0
    %p125 = por %p123, %p124
    %p126 = scmp.ne.s32.totalorder %s118, %s120
    %p127 = scmp.eq.s32.totalorder %s26, 1
    %p128 = por %p126, %p127
    %p129 = scmp.ne.s32.totalorder %s120, %s121
    %p130 = scmp.eq.s32.totalorder %s26, 0
    %p131 = por %p129, %p130
    %p132 = scmp.ne.s32.totalorder %s120, %s121
    %p133 = scmp.eq.s32.totalorder %s27, 1
    %p134 = por %p132, %p133
    %p136 = scmp.ne.s32.totalorder %s121, %s135
    %p137 = scmp.eq.s32.totalorder %s27, 0
    %p138 = por %p136, %p137
    %s140 = sadd.s32 %s139, 1
    %p143 = scmp.eq.s32.totalorder %s21, 1
    %p144 = scmp.ne.s32.totalorder %s139, %s141
    %p145 = scmp.eq.s32.totalorder %s21, 0
    %p146 = por %p144, %p145
    %p147 = scmp.ne.s32.totalorder %s139, %s141
    %p148 = scmp.eq.s32.totalorder %s26, 1
    %p149 = por %p147, %p148
    %p150 = scmp.ne.s32.totalorder %s141, %s142
    %p151 = scmp.eq.s32.totalorder %s26, 0
    %p152 = por %p150, %p151
    %p153 = scmp.ne.s32.totalorder %s141, %s142
    %p154 = scmp.eq.s32.totalorder %s27, 1
    %p155 = por %p153, %p154
    %p157 = scmp.ne.s32.totalorder %s142, %s156
    %p158 = scmp.eq.s32.totalorder %s27, 0
    %p159 = por %p157, %p158
    %s161 = sadd.s32 %s160, 1
    %p164 = scmp.eq.s32.totalorder %s21, 1
    %p165 = scmp.ne.s32.totalorder %s160, %s162
    %p166 = scmp.eq.s32.totalorder %s21, 0
    %p167 = por %p165, %p166
    %p168 = scmp.ne.s32.totalorder %s160, %s162
    %p169 = scmp.eq.s32.totalorder %s26, 1
    %p170 = por %p168, %p169
    %p171 = scmp.ne.s32.totalorder %s162, %s163
    %p172 = scmp.eq.s32.totalorder %s26, 0
    %p173 = por %p171, %p172
    %p174 = scmp.ne.s32.totalorder %s162, %s163
    %p175 = scmp.eq.s32.totalorder %s27, 1
    %p176 = por %p174, %p175
    %p178 = scmp.ne.s32.totalorder %s163, %s177
    %p179 = scmp.eq.s32.totalorder %s27, 0
    %p180 = por %p178, %p179
    %s182 = sadd.s32 %s181, 1
    %p185 = scmp.eq.s32.totalorder %s21, 1
    %p186 = scmp.ne.s32.totalorder %s181, %s183
    %p187 = scmp.eq.s32.totalorder %s21, 0
    %p188 = por %p186, %p187
    %p189 = scmp.ne.s32.totalorder %s181, %s183
    %p190 = scmp.eq.s32.totalorder %s26, 1
    %p191 = por %p189, %p190
    %p192 = scmp.ne.s32.totalorder %s183, %s184
    %p193 = scmp.eq.s32.totalorder %s26, 0
    %p194 = por %p192, %p193
    %p195 = scmp.ne.s32.totalorder %s183, %s184
    %p196 = scmp.eq.s32.totalorder %s27, 1
    %p197 = por %p195, %p196
    %p199 = scmp.ne.s32.totalorder %s184, %s198
    %p200 = scmp.eq.s32.totalorder %s27, 0
    %p201 = por %p199, %p200
    %s203 = sadd.s32 %s202, 1
    %p206 = scmp.eq.s32.totalorder %s21, 1
    %p207 = scmp.ne.s32.totalorder %s202, %s204
    %p208 = scmp.eq.s32.totalorder %s21, 0
    %p209 = por %p207, %p208
    %p210 = scmp.ne.s32.totalorder %s202, %s204
    %p211 = scmp.eq.s32.totalorder %s26, 1
    %p212 = por %p210, %p211
    %p213 = scmp.ne.s32.totalorder %s204, %s205
    %p214 = scmp.eq.s32.totalorder %s26, 0
    %p215 = por %p213, %p214
    %p216 = scmp.ne.s32.totalorder %s204, %s205
    %p217 = scmp.eq.s32.totalorder %s27, 1
    %p218 = por %p216, %p217
    %p220 = scmp.ne.s32.totalorder %s205, %s219
    %p221 = scmp.eq.s32.totalorder %s27, 0
    %p222 = por %p220, %p221
    %s224 = sadd.s32 %s223, 1
    %p227 = scmp.eq.s32.totalorder %s21, 1
    %p228 = scmp.ne.s32.totalorder %s223, %s225
    %p229 = scmp.eq.s32.totalorder %s21, 0
    %p230 = por %p228, %p229
    %p231 = scmp.ne.s32.totalorder %s223, %s225
    %p232 = scmp.eq.s32.totalorder %s26, 1
    %p233 = por %p231, %p232
    %p234 = scmp.ne.s32.totalorder %s225, %s226
    %p235 = scmp.eq.s32.totalorder %s26, 0
    %p236 = por %p234, %p235
    %p237 = scmp.ne.s32.totalorder %s225, %s226
    %p238 = scmp.eq.s32.totalorder %s27, 1
    %p239 = por %p237, %p238
    %p241 = scmp.ne.s32.totalorder %s226, %s240
    %p242 = scmp.eq.s32.totalorder %s27, 0
    %p243 = por %p241, %p242
    %s245 = sadd.s32 %s244, 1
    %p248 = scmp.eq.s32.totalorder %s21, 1
    %p249 = scmp.ne.s32.totalorder %s244, %s246
    %p250 = scmp.eq.s32.totalorder %s21, 0
    %p251 = por %p249, %p250
    %p252 = scmp.ne.s32.totalorder %s244, %s246
    %p253 = scmp.eq.s32.totalorder %s26, 1
    %p254 = por %p252, %p253
    %p255 = scmp.ne.s32.totalorder %s246, %s247
    %p256 = scmp.eq.s32.totalorder %s26, 0
    %p257 = por %p255, %p256
    %p258 = scmp.ne.s32.totalorder %s246, %s247
    %p259 = scmp.eq.s32.totalorder %s27, 1
    %p260 = por %p258, %p259
    %p262 = scmp.ne.s32.totalorder %s247, %s261
    %p263 = scmp.eq.s32.totalorder %s27, 0
    %p264 = por %p262, %p263
    %s266 = sadd.s32 %s265, 1
    %p269 = scmp.eq.s32.totalorder %s21, 1
    %p270 = scmp.ne.s32.totalorder %s265, %s267
    %p271 = scmp.eq.s32.totalorder %s21, 0
    %p272 = por %p270, %p271
    %p273 = scmp.ne.s32.totalorder %s265, %s267
    %p274 = scmp.eq.s32.totalorder %s26, 1
    %p275 = por %p273, %p274
    %p276 = scmp.ne.s32.totalorder %s267, %s268
    %p277 = scmp.eq.s32.totalorder %s26, 0
    %p278 = por %p276, %p277
    %p279 = scmp.ne.s32.totalorder %s267, %s268
    %p280 = scmp.eq.s32.totalorder %s27, 1
    %p281 = por %p279, %p280
    %p283 = scmp.ne.s32.totalorder %s268, %s282
    %p284 = scmp.eq.s32.totalorder %s27, 0
    %p285 = por %p283, %p284
    %s287 = sadd.s32 %s286, 1
    %p290 = scmp.eq.s32.totalorder %s21, 1
    %p291 = scmp.ne.s32.totalorder %s286, %s288
    %p292 = scmp.eq.s32.totalorder %s21, 0
    %p293 = por %p291, %p292
    %p294 = scmp.ne.s32.totalorder %s286, %s288
    %p295 = scmp.eq.s32.totalorder %s26, 1
    %p296 = por %p294, %p295
    %p297 = scmp.ne.s32.totalorder %s288, %s289
    %p298 = scmp.eq.s32.totalorder %s26, 0
    %p299 = por %p297, %p298
    %p300 = scmp.ne.s32.totalorder %s288, %s289
    %p301 = scmp.eq.s32.totalorder %s27, 1
    %p302 = por %p300, %p301
    %p304 = scmp.ne.s32.totalorder %s289, %s303
    %p305 = scmp.eq.s32.totalorder %s27, 0
    %p306 = por %p304, %p305
    %s308 = sadd.s32 %s307, 1
    %p311 = scmp.eq.s32.totalorder %s21, 1
    %p312 = scmp.ne.s32.totalorder %s307, %s309
    %p313 = scmp.eq.s32.totalorder %s21, 0
    %p314 = por %p312, %p313
    %p315 = scmp.ne.s32.totalorder %s307, %s309
    %p316 = scmp.eq.s32.totalorder %s26, 1
    %p317 = por %p315, %p316
    %p318 = scmp.ne.s32.totalorder %s309, %s310
    %p319 = scmp.eq.s32.totalorder %s26, 0
    %p320 = por %p318, %p319
    %p321 = scmp.ne.s32.totalorder %s309, %s310
    %p322 = scmp.eq.s32.totalorder %s27, 1
    %p323 = por %p321, %p322
    %p325 = scmp.ne.s32.totalorder %s310, %s324
    %p326 = scmp.eq.s32.totalorder %s27, 0
    %p327 = por %p325, %p326
    %s329 = sadd.s32 %s328, 1
    %p332 = scmp.eq.s32.totalorder %s21, 1
    %p333 = scmp.ne.s32.totalorder %s328, %s330
    %p334 = scmp.eq.s32.totalorder %s21, 0
    %p335 = por %p333, %p334
    %p336 = scmp.ne.s32.totalorder %s328, %s330
    %p337 = scmp.eq.s32.totalorder %s26, 1
    %p338 = por %p336, %p337
    %p339 = scmp.ne.s32.totalorder %s330, %s331
    %p340 = scmp.eq.s32.totalorder %s26, 0
    %p341 = por %p339, %p340
    %p342 = scmp.ne.s32.totalorder %s330, %s331
    %p343 = scmp.eq.s32.totalorder %s27, 1
    %p344 = por %p342, %p343
    %p346 = scmp.ne.s32.totalorder %s331, %s345
    %p347 = scmp.eq.s32.totalorder %s27, 0
    %p348 = por %p346, %p347
    %s349 = ssub.s32 %s21, %s28
    %p350 = scmp.eq.s32.totalorder %s349, 0
    %s352 = sadd.s32 %s351, 1
    %s353 = scalar_select %p350, %s351, %s352
    %p356 = pneg %p350
    %p357 = scmp.eq.s32.totalorder %s21, 1
    %p358 = por %p356, %p357
    %p359 = scmp.ne.s32.totalorder %s351, %s354
    %p360 = scmp.eq.s32.totalorder %s21, 0
    %p361 = por %p359, %p360
    %p362 = scmp.ne.s32.totalorder %s351, %s354
    %p363 = scmp.eq.s32.totalorder %s26, 1
    %p364 = por %p362, %p363
    %p365 = scmp.ne.s32.totalorder %s354, %s355
    %p366 = scmp.eq.s32.totalorder %s26, 0
    %p367 = por %p365, %p366
    %p368 = scmp.ne.s32.totalorder %s354, %s355
    %p369 = scmp.eq.s32.totalorder %s27, 1
    %p370 = por %p368, %p369
    %p372 = scmp.ne.s32.totalorder %s355, %s371
    %p373 = scmp.eq.s32.totalorder %s27, 0
    %p374 = por %p372, %p373
    %p375 = scmp.le.s32.totalorder 1, %s21
    %p376 = scmp.lt.s32.totalorder %s21, 3
    %p377 = pnand %p375, %p376
    %p378 = pneg %p377
    // Predicated region
    $region9: #{_lambda_.4} parent=5 // pred_check
      _
    $region10: #{_lambda_.4} parent=5 // pred_check_branch
      %380 = sbr.rel (%p377) target = $region12
    $region11: #{_lambda_.4} parent=5 // pred_region
      %s381 = ssub.s32 %s21, 1
      // Predicated region
      $region13: #{_lambda_.4} parent=11 // pred_check
        %p382 = pneg %p68
      $region14: #{_lambda_.4} parent=11 // pred_check_branch
        %384 = sbr.rel (%p382) target = $region16
      $region15: #{_lambda_.4} parent=11 // pred_region
        _
      $region16: #{_lambda_.4} parent=11 // pred_fallthru
        _
      // Predicated region
      $region17: #{_lambda_.4} parent=11 // pred_check
        %p385 = pneg %p89
      $region18: #{_lambda_.4} parent=11 // pred_check_branch
        %387 = sbr.rel (%p385) target = $region20
      $region19: #{_lambda_.4} parent=11 // pred_region
        _
      $region20: #{_lambda_.4} parent=11 // pred_fallthru
        _
      // Predicated region
      $region21: #{_lambda_.4} parent=11 // pred_check
        %p388 = pneg %p110
      $region22: #{_lambda_.4} parent=11 // pred_check_branch
        %390 = sbr.rel (%p388) target = $region24
      $region23: #{_lambda_.4} parent=11 // pred_region
        _
      $region24: #{_lambda_.4} parent=11 // pred_fallthru
        _
      // Predicated region
      $region25: #{_lambda_.4} parent=11 // pred_check
        %p391 = pneg %p131
      $region26: #{_lambda_.4} parent=11 // pred_check_branch
        %393 = sbr.rel (%p391) target = $region28
      $region27: #{_lambda_.4} parent=11 // pred_region
        _
      $region28: #{_lambda_.4} parent=11 // pred_fallthru
        _
      // Predicated region
      $region29: #{_lambda_.4} parent=11 // pred_check
        %p394 = pneg %p152
      $region30: #{_lambda_.4} parent=11 // pred_check_branch
        %396 = sbr.rel (%p394) target = $region32
      $region31: #{_lambda_.4} parent=11 // pred_region
        _
      $region32: #{_lambda_.4} parent=11 // pred_fallthru
        _
      // Predicated region
      $region33: #{_lambda_.4} parent=11 // pred_check
        %p397 = pneg %p173
      $region34: #{_lambda_.4} parent=11 // pred_check_branch
        %399 = sbr.rel (%p397) target = $region36
      $region35: #{_lambda_.4} parent=11 // pred_region
        _
      $region36: #{_lambda_.4} parent=11 // pred_fallthru
        _
      // Predicated region
      $region37: #{_lambda_.4} parent=11 // pred_check
        %p400 = pneg %p194
      $region38: #{_lambda_.4} parent=11 // pred_check_branch
        %402 = sbr.rel (%p400) target = $region40
      $region39: #{_lambda_.4} parent=11 // pred_region
        _
      $region40: #{_lambda_.4} parent=11 // pred_fallthru
        _
      // Predicated region
      $region41: #{_lambda_.4} parent=11 // pred_check
        %p403 = pneg %p215
      $region42: #{_lambda_.4} parent=11 // pred_check_branch
        %405 = sbr.rel (%p403) target = $region44
      $region43: #{_lambda_.4} parent=11 // pred_region
        _
      $region44: #{_lambda_.4} parent=11 // pred_fallthru
        _
      // Predicated region
      $region45: #{_lambda_.4} parent=11 // pred_check
        %p406 = pneg %p236
      $region46: #{_lambda_.4} parent=11 // pred_check_branch
        %408 = sbr.rel (%p406) target = $region48
      $region47: #{_lambda_.4} parent=11 // pred_region
        _
      $region48: #{_lambda_.4} parent=11 // pred_fallthru
        _
      // Predicated region
      $region49: #{_lambda_.4} parent=11 // pred_check
        %p409 = pneg %p257
      $region50: #{_lambda_.4} parent=11 // pred_check_branch
        %411 = sbr.rel (%p409) target = $region52
      $region51: #{_lambda_.4} parent=11 // pred_region
        _
      $region52: #{_lambda_.4} parent=11 // pred_fallthru
        _
      // Predicated region
      $region53: #{_lambda_.4} parent=11 // pred_check
        %p412 = pneg %p278
      $region54: #{_lambda_.4} parent=11 // pred_check_branch
        %414 = sbr.rel (%p412) target = $region56
      $region55: #{_lambda_.4} parent=11 // pred_region
        _
      $region56: #{_lambda_.4} parent=11 // pred_fallthru
        _
      // Predicated region
      $region57: #{_lambda_.4} parent=11 // pred_check
        %p415 = pneg %p299
      $region58: #{_lambda_.4} parent=11 // pred_check_branch
        %417 = sbr.rel (%p415) target = $region60
      $region59: #{_lambda_.4} parent=11 // pred_region
        _
      $region60: #{_lambda_.4} parent=11 // pred_fallthru
        _
      // Predicated region
      $region61: #{_lambda_.4} parent=11 // pred_check
        %p418 = pneg %p320
      $region62: #{_lambda_.4} parent=11 // pred_check_branch
        %420 = sbr.rel (%p418) target = $region64
      $region63: #{_lambda_.4} parent=11 // pred_region
        _
      $region64: #{_lambda_.4} parent=11 // pred_fallthru
        _
      // Predicated region
      $region65: #{_lambda_.4} parent=11 // pred_check
        %p421 = pneg %p341
      $region66: #{_lambda_.4} parent=11 // pred_check_branch
        %423 = sbr.rel (%p421) target = $region68
      $region67: #{_lambda_.4} parent=11 // pred_region
        _
      $region68: #{_lambda_.4} parent=11 // pred_fallthru
        _
    $region12: #{_lambda_.4} parent=5 // pred_fallthru
      _
    %p424 = scmp.lt.s32.totalorder %s21, 2
    // Predicated region
    $region69: #{_lambda_.4} parent=5 // pred_check
      %p425 = pneg %p424
    $region70: #{_lambda_.4} parent=5 // pred_check_branch
      %427 = sbr.rel (%p425) target = $region72
    $region71: #{_lambda_.4} parent=5 // pred_region
      // Predicated region
      $region73: #{_lambda_.4} parent=71 // pred_check
        %p428 = pneg %p41
      $region74: #{_lambda_.4} parent=71 // pred_check_branch
        %430 = sbr.rel (%p428) target = $region76
      $region75: #{_lambda_.4} parent=71 // pred_region
        %p431 = scmp.lt.s32.totalorder %s21, 1
        %s432 = scalar_select %p431, %s21, 1
        %s433 = smul.addr %s432, 4
        %s434 = scalar_lea.vmem %s0, %s433
      $region76: #{_lambda_.4} parent=71 // pred_fallthru
        _
    $region72: #{_lambda_.4} parent=5 // pred_fallthru
      _
    %p435 = scmp.le.s32.totalorder 1, %s21
    %p436 = scmp.lt.s32.totalorder %s21, 3
    %p437 = pnand %p435, %p436
    %p438 = pneg %p437
    // Predicated region
    $region77: #{_lambda_.4} parent=5 // pred_check
      _
    $region78: #{_lambda_.4} parent=5 // pred_check_branch
      %440 = sbr.rel (%p437) target = $region80
    $region79: #{_lambda_.4} parent=5 // pred_region
      %s441 = ssub.s32 %s21, 1
      %p442 = scmp.lt.s32.totalorder %s26, 1
      %s443 = scalar_select %p442, %s26, 1
      %s444 = smul.addr %s443, 4
      %s445 = scalar_lea.vmem %s0, %s444
      %p446 = pneg %p47
      %p447 = pneg %p44
      %p448 = pneg %p68
      %p449 = pneg %p65
      %p450 = pneg %p89
      %p451 = pneg %p86
      %p452 = pneg %p110
      %p453 = pneg %p107
      %p454 = pneg %p131
      %p455 = pneg %p128
      %p456 = pneg %p152
      %p457 = pneg %p149
      %p458 = pneg %p173
      %p459 = pneg %p170
      %p460 = pneg %p194
      %p461 = pneg %p191
      %p462 = pneg %p215
      %p463 = pneg %p212
      %p464 = pneg %p236
      %p465 = pneg %p233
      %p466 = pneg %p257
      %p467 = pneg %p254
      %p468 = pneg %p278
      %p469 = pneg %p275
      %p470 = pneg %p299
      %p471 = pneg %p296
      %p472 = pneg %p320
      %p473 = pneg %p317
      %p474 = pneg %p341
      %p475 = pneg %p338
      %p476 = pneg %p367
      %p477 = pneg %p364
      %p478 = scmp.lt.s32.totalorder %s26, 1
      %s479 = scalar_select %p478, %s26, 1
      %s480 = smul.addr %s479, 4
      %s481 = scalar_lea.vmem %s15, %s480
      %p482 = scmp.lt.s32.totalorder %s26, 1
      %s483 = scalar_select %p482, %s26, 1
      %s484 = smul.addr %s483, 4
      %s485 = scalar_lea.vmem %s0, %s484
      %p486 = scmp.lt.s32.totalorder %s26, 1
      %s487 = scalar_select %p486, %s26, 1
      %s488 = smul.addr %s487, 4
      %s489 = scalar_lea.vmem %s15, %s488
      %v491 = vld [vmem:[%s485] sm:$0xf]
      %v492 = vunpack.c.l.bf16 %v491
      %v493 = vld [vmem:[%s1] sm:$0x1]
      %v494 = vld [vmem:[%s2] sm:$0x1]
      %495 = vadd.xlane.f32.xlu0 %v492
      %v496 = vpop.xlane.xlu0 %495
      %v497 = vrcp.pop 128.0
      %v498 = vmul.f32 %v496, %v497
      %v499 = vsub.f32 %v492, %v498
      %v500 = vmul.f32 %v499, %v499
      %501 = vadd.xlane.f32.xlu0 %v500
      %v502 = vpop.xlane.xlu0 %501
      %v503 = vmul.f32 %v502, %v497
      %v504 = vadd.f32 %v503, 1e-05
      %v505 = vrsqrt.pop %v504
      %v506 = vmul.f32 %v499, %v505
      %v508 = vlaneseq
      %v509 = vshrl.u32 %v508, 7
      %v510 = vsub.s32 0, %v509
      %v511 = vrot.slane %v493, %v510
      %v513 = vmul.f32 %v506, %v511
      %v515 = vlaneseq
      %v516 = vshrl.u32 %v515, 7
      %v517 = vsub.s32 0, %v516
      %v518 = vrot.slane %v494, %v517
      %v520 = vadd.f32 %v513, %v518
      %v521 = vpack.c.bf16 %v520, %v520
      %v522 = vld [vmem:[%s3] sm:$0xff]
      %v523 = vld [vmem:[%s3 + $0x8] sm:$0xf]
      %v524 = vld [vmem:[%s3 + $0xc] sm:$0xff]
      %v525 = vld [vmem:[%s3 + $0x14] sm:$0xf]
      %v526 = vld [vmem:[%s3 + $0x18] sm:$0xff]
      %v527 = vld [vmem:[%s3 + $0x20] sm:$0xf]
      %v528 = vld [vmem:[%s3 + $0x24] sm:$0xff]
      %v529 = vld [vmem:[%s3 + $0x2c] sm:$0xf]
      %v530 = vld [vmem:[%s3 + $0x30] sm:$0xff]
      %v531 = vld [vmem:[%s3 + $0x38] sm:$0xf]
      %v532 = vld [vmem:[%s3 + $0x3c] sm:$0xff]
      %v533 = vld [vmem:[%s3 + $0x44] sm:$0xf]
      %v534 = vld [vmem:[%s3 + $0x48] sm:$0xff]
      %v535 = vld [vmem:[%s3 + $0x50] sm:$0xf]
      %v536 = vld [vmem:[%s3 + $0x54] sm:$0xff]
      %v537 = vld [vmem:[%s3 + $0x5c] sm:$0xf]
      %v538 = vld [vmem:[%s3 + $0x60] sm:$0xff]
      %v539 = vld [vmem:[%s3 + $0x68] sm:$0xf]
      %v540 = vld [vmem:[%s3 + $0x6c] sm:$0xff]
      %v541 = vld [vmem:[%s3 + $0x74] sm:$0xf]
      %v542 = vld [vmem:[%s3 + $0x78] sm:$0xff]
      %v543 = vld [vmem:[%s3 + $0x80] sm:$0xf]
      %v544 = vld [vmem:[%s3 + $0x84] sm:$0xff]
      %v545 = vld [vmem:[%s3 + $0x8c] sm:$0xf]
      %v546 = vld [vmem:[%s3 + $0x90] sm:$0xff]
      %v547 = vld [vmem:[%s3 + $0x98] sm:$0xf]
      %v548 = vld [vmem:[%s3 + $0x9c] sm:$0xff]
      %v549 = vld [vmem:[%s3 + $0xa4] sm:$0xf]
      %v550 = vld [vmem:[%s3 + $0xa8] sm:$0xff]
      %v551 = vld [vmem:[%s3 + $0xb0] sm:$0xf]
      %v552 = vld [vmem:[%s3 + $0xb4] sm:$0xff]
      %v553 = vld [vmem:[%s3 + $0xbc] sm:$0xf]
      %v554 = vld [vmem:[%s4] sm:$0x7]
      %v556 = vlaneseq
      %v557 = vshrl.u32 %v556, 7
      %v558 = vsub.s32 0, %v557
      %v559 = vrot.slane %v554, %v558
      %v560 = vlaneseq
      %v561 = vshrl.u32 %v560, 7
      %v562 = vsub.s32 1, %v561
      %v563 = vrot.slane %v554, %v562
      %v564 = vlaneseq
      %v565 = vshrl.u32 %v564, 7
      %v566 = vsub.s32 2, %v565
      %v567 = vrot.slane %v554, %v566
      %v603 = vunpack.c.l.b16 %v522
      %v604 = vunpack.c.h.b16 %v522
      %v605 = vunpack.c.l.b16 %v523
      %v606 = vunpack.c.l.b16 %v524
      %v607 = vunpack.c.h.b16 %v524
      %v608 = vunpack.c.l.b16 %v525
      %v609 = vunpack.c.l.b16 %v526
      %v610 = vunpack.c.h.b16 %v526
      %v611 = vunpack.c.l.b16 %v527
      %v612 = vunpack.c.l.b16 %v528
      %v613 = vunpack.c.h.b16 %v528
      %v614 = vunpack.c.l.b16 %v529
      %v615 = vunpack.c.l.b16 %v530
      %v616 = vunpack.c.h.b16 %v530
      %v617 = vunpack.c.l.b16 %v531
      %v618 = vunpack.c.l.b16 %v532
      %v619 = vunpack.c.h.b16 %v532
      %v620 = vunpack.c.l.b16 %v533
      %v621 = vunpack.c.l.b16 %v534
      %v622 = vunpack.c.h.b16 %v534
      %v623 = vunpack.c.l.b16 %v535
      %v624 = vunpack.c.l.b16 %v536
      %v625 = vunpack.c.h.b16 %v536
      %v626 = vunpack.c.l.b16 %v537
      %v627 = vunpack.c.l.b16 %v538
      %v628 = vunpack.c.h.b16 %v538
      %v629 = vunpack.c.l.b16 %v539
      %v630 = vunpack.c.l.b16 %v540
      %v631 = vunpack.c.h.b16 %v540
      %v632 = vunpack.c.l.b16 %v541
      %v633 = vunpack.c.l.b16 %v542
      %v634 = vunpack.c.h.b16 %v542
      %v635 = vunpack.c.l.b16 %v543
      %v636 = vunpack.c.l.b16 %v544
      %v637 = vunpack.c.h.b16 %v544
      %v638 = vunpack.c.l.b16 %v545
      %v639 = vunpack.c.l.b16 %v546
      %v640 = vunpack.c.h.b16 %v546
      %v641 = vunpack.c.l.b16 %v547
      %v642 = vunpack.c.l.b16 %v548
      %v643 = vunpack.c.h.b16 %v548
      %v644 = vunpack.c.l.b16 %v549
      %v645 = vunpack.c.l.b16 %v550
      %v646 = vunpack.c.h.b16 %v550
      %v647 = vunpack.c.l.b16 %v551
      %v648 = vunpack.c.l.b16 %v552
      %v649 = vunpack.c.h.b16 %v552
      %v650 = vunpack.c.l.b16 %v553
      %v651 = vpack.c.b16 %v606, %v603
      %v652 = vpack.c.b16 %v607, %v604
      %v653 = vpack.c.b16 %v608, %v605
      %v654 = vpack.c.b16 %v612, %v609
      %v655 = vpack.c.b16 %v613, %v610
      %v656 = vpack.c.b16 %v614, %v611
      %v657 = vpack.c.b16 %v618, %v615
      %v658 = vpack.c.b16 %v619, %v616
      %v659 = vpack.c.b16 %v620, %v617
      %v660 = vpack.c.b16 %v624, %v621
      %v661 = vpack.c.b16 %v625, %v622
      %v662 = vpack.c.b16 %v626, %v623
      %v663 = vpack.c.b16 %v630, %v627
      %v664 = vpack.c.b16 %v631, %v628
      %v665 = vpack.c.b16 %v632, %v629
      %v666 = vpack.c.b16 %v636, %v633
      %v667 = vpack.c.b16 %v637, %v634
      %v668 = vpack.c.b16 %v638, %v635
      %v669 = vpack.c.b16 %v642, %v639
      %v670 = vpack.c.b16 %v643, %v640
      %v671 = vpack.c.b16 %v644, %v641
      %v672 = vpack.c.b16 %v648, %v645
      %v673 = vpack.c.b16 %v649, %v646
      %v674 = vpack.c.b16 %v650, %v647
      %699 = vmatprep.subr.bf16.mxu0 %v673
      %700 = vmatpush1.bf16.msra.mxu0 %v672
      %701 = vmatprep.subr.bf16.mxu0 %v670
      %702 = vmatpush1.bf16.msra.mxu0 %v669
      %703 = vmatprep.subr.bf16.mxu0 %v667
      %704 = vmatpush1.bf16.msra.mxu0 %v666
      %705 = vmatprep.subr.bf16.mxu0 %v664
      %706 = vmatpush1.bf16.msra.mxu0 %v663
      %707 = vmatprep.subr.bf16.mxu0 %v661
      %708 = vmatpush1.bf16.msra.mxu0 %v660
      %709 = vmatprep.subr.bf16.mxu0 %v658
      %710 = vmatpush1.bf16.msra.mxu0 %v657
      %711 = vmatprep.subr.bf16.mxu0 %v655
      %712 = vmatpush1.bf16.msra.mxu0 %v654
      %713 = vmatprep.subr.bf16.mxu0 %v652
      %714 = vmatpush1.bf16.msra.mxu0 %v651
      %715 = vmatprep.subr.bf16.mxu0 0
      %716 = vmatpush2.bf16.msra.mxu0 0
      %717 = vmatprep.subr.bf16.mxu0 0
      %718 = vmatpush2.bf16.msra.mxu0 0
      %719 = vmatprep.subr.bf16.mxu0 0
      %720 = vmatpush2.bf16.msra.mxu0 0
      %721 = vmatprep.subr.bf16.mxu0 0
      %722 = vmatpush2.bf16.msra.mxu0 0
      %723 = vmatprep.subr.bf16.mxu0 0
      %724 = vmatpush2.bf16.msra.mxu0 0
      %725 = vmatprep.subr.bf16.mxu0 0
      %726 = vmatpush2.bf16.msra.mxu0 0
      %727 = vmatprep.subr.bf16.mxu0 0
      %728 = vmatpush2.bf16.msra.mxu0 0
      %729 = vmatprep.subr.bf16.mxu0 0
      %730 = vmatpush2.bf16.msra.mxu0 0
      %731 = vmatprep.mubr.bf16.mxu0 0
      %732 = vmatmul.mubr.bf16.gmra.mxu0 %v521
      %v733 = vpop.f32.mrf.mxu0
      %v734 = vadd.f32 %v559, %v733
      %v735 = vpop.f32.mrf.mxu0
      %v736 = vadd.f32 %v563, %v735
      %v737 = vpop.f32.mrf.mxu0
      %v738 = vpop.f32.mrf.mxu0
      %739 = vdwg.mxu0
      %740 = vmatprep.subr.bf16.mxu0 0
      %741 = vmatpush1.bf16.msra.mxu0 %v674
      %742 = vmatprep.subr.bf16.mxu0 0
      %743 = vmatpush1.bf16.msra.mxu0 %v671
      %744 = vmatprep.subr.bf16.mxu0 0
      %745 = vmatpush1.bf16.msra.mxu0 %v668
      %746 = vmatprep.subr.bf16.mxu0 0
      %747 = vmatpush1.bf16.msra.mxu0 %v665
      %748 = vmatprep.subr.bf16.mxu0 0
      %749 = vmatpush1.bf16.msra.mxu0 %v662
      %750 = vmatprep.subr.bf16.mxu0 0
      %751 = vmatpush1.bf16.msra.mxu0 %v659
      %752 = vmatprep.subr.bf16.mxu0 0
      %753 = vmatpush1.bf16.msra.mxu0 %v656
      %754 = vmatprep.subr.bf16.mxu0 0
      %755 = vmatpush1.bf16.msra.mxu0 %v653
      %756 = vmatprep.subr.bf16.mxu0 0
      %757 = vmatpush2.bf16.msra.mxu0 0
      %758 = vmatprep.subr.bf16.mxu0 0
      %759 = vmatpush2.bf16.msra.mxu0 0
      %760 = vmatprep.subr.bf16.mxu0 0
      %761 = vmatpush2.bf16.msra.mxu0 0
      %762 = vmatprep.subr.bf16.mxu0 0
      %763 = vmatpush2.bf16.msra.mxu0 0
      %764 = vmatprep.subr.bf16.mxu0 0
      %765 = vmatpush2.bf16.msra.mxu0 0
      %766 = vmatprep.subr.bf16.mxu0 0
      %767 = vmatpush2.bf16.msra.mxu0 0
      %768 = vmatprep.subr.bf16.mxu0 0
      %769 = vmatpush2.bf16.msra.mxu0 0
      %770 = vmatprep.subr.bf16.mxu0 0
      %771 = vmatpush2.bf16.msra.mxu0 0
      %772 = vmatprep.mubr.bf16.mxu0 0
      %773 = vmatmul.mubr.bf16.gmra.mxu0 %v521
      %v774 = vpop.f32.mrf.mxu0
      %v775 = vadd.f32 %v567, %v774
      %v776 = vpop.f32.mrf.mxu0
      %v777 = vpop.f32.mrf.mxu0
      %v778 = vpop.f32.mrf.mxu0
      %779 = vdwg.mxu0
      %781 = vrot.lane.b32.xlu0 %v734, 64
      %v782 = vpop.permute.xlu0 %781
      %v784 = vpack.c.bf16 %v734, %v734
      %v785 = vpack.c.bf16 %v782, %v782
      %787 = vrot.lane.b32.xlu0 %v736, 64
      %v788 = vpop.permute.xlu0 %787
      %v790 = vpack.c.bf16 %v736, %v736
      %v791 = vpack.c.bf16 %v788, %v788
      %793 = vrot.lane.b32.xlu0 %v775, 64
      %v794 = vpop.permute.xlu0 %793
      %v796 = vpack.c.bf16 %v775, %v775
      %v797 = vpack.c.bf16 %v794, %v794
      %v798 = vlaneseq
      %v799 = vshrl.u32 %v798, 7
      %v800 = vlaneseq
      %v801 = vand.u32 %v800, 127
      %vm802 = vcmp.le.s32.totalorder %v801, %v799
      %vm803 = vcmask 523264
      %v805 = vsel %vm803, %v784, 0
      %v808 = vsel %vm803, %v790, 0
      %810 = vmatprep.subr.bf16.mxu0 0
      %811 = vmatpush1.bf16.xpose.msra.mxu0 0
      %812 = vmatprep.subr.bf16.mxu0 0
      %813 = vmatpush1.bf16.xpose.msra.mxu0 0
      %814 = vmatprep.subr.bf16.mxu0 0
      %815 = vmatpush1.bf16.xpose.msra.mxu0 0
      %816 = vmatprep.subr.bf16.mxu0 0
      %817 = vmatpush1.bf16.xpose.msra.mxu0 0
      %818 = vmatprep.subr.bf16.mxu0 0
      %819 = vmatpush1.bf16.xpose.msra.mxu0 0
      %820 = vmatprep.subr.bf16.mxu0 0
      %821 = vmatpush1.bf16.xpose.msra.mxu0 0
      %822 = vmatprep.subr.bf16.mxu0 0
      %823 = vmatpush1.bf16.xpose.msra.mxu0 0
      %824 = vmatprep.subr.bf16.mxu0 0
      %825 = vmatpush1.bf16.xpose.msra.mxu0 %v808
      %826 = vmatprep.subr.bf16.mxu0 0
      %827 = vmatpush2.bf16.xpose.msra.mxu0 0
      %828 = vmatprep.subr.bf16.mxu0 0
      %829 = vmatpush2.bf16.xpose.msra.mxu0 0
      %830 = vmatprep.subr.bf16.mxu0 0
      %831 = vmatpush2.bf16.xpose.msra.mxu0 0
      %832 = vmatprep.subr.bf16.mxu0 0
      %833 = vmatpush2.bf16.xpose.msra.mxu0 0
      %834 = vmatprep.subr.bf16.mxu0 0
      %835 = vmatpush2.bf16.xpose.msra.mxu0 0
      %836 = vmatprep.subr.bf16.mxu0 0
      %837 = vmatpush2.bf16.xpose.msra.mxu0 0
      %838 = vmatprep.subr.bf16.mxu0 0
      %839 = vmatpush2.bf16.xpose.msra.mxu0 0
      %840 = vmatprep.subr.bf16.mxu0 0
      %841 = vmatpush2.bf16.xpose.msra.mxu0 0
      %842 = vmatprep.mubr.bf16.mxu0 0
      %843 = vmatmul.mubr.bf16.gmra.mxu0 %v805
      %v844 = vpop.f32.mrf.mxu0
      %v845 = vadd.f32 0.0, %v844
      %v846 = vpop.f32.mrf.mxu0
      %v847 = vpop.f32.mrf.mxu0
      %v848 = vpop.f32.mrf.mxu0
      %849 = vdwg.mxu0
      %v851 = vsel %vm803, %v785, 0
      %v854 = vsel %vm803, %v791, 0
      %856 = vmatprep.subr.bf16.mxu0 0
      %857 = vmatpush1.bf16.xpose.msra.mxu0 0
      %858 = vmatprep.subr.bf16.mxu0 0
      %859 = vmatpush1.bf16.xpose.msra.mxu0 0
      %860 = vmatprep.subr.bf16.mxu0 0
      %861 = vmatpush1.bf16.xpose.msra.mxu0 0
      %862 = vmatprep.subr.bf16.mxu0 0
      %863 = vmatpush1.bf16.xpose.msra.mxu0 0
      %864 = vmatprep.subr.bf16.mxu0 0
      %865 = vmatpush1.bf16.xpose.msra.mxu0 0
      %866 = vmatprep.subr.bf16.mxu0 0
      %867 = vmatpush1.bf16.xpose.msra.mxu0 0
      %868 = vmatprep.subr.bf16.mxu0 0
      %869 = vmatpush1.bf16.xpose.msra.mxu0 0
      %870 = vmatprep.subr.bf16.mxu0 0
      %871 = vmatpush1.bf16.xpose.msra.mxu0 %v854
      %872 = vmatprep.subr.bf16.mxu0 0
      %873 = vmatpush2.bf16.xpose.msra.mxu0 0
      %874 = vmatprep.subr.bf16.mxu0 0
      %875 = vmatpush2.bf16.xpose.msra.mxu0 0
      %876 = vmatprep.subr.bf16.mxu0 0
      %877 = vmatpush2.bf16.xpose.msra.mxu0 0
      %878 = vmatprep.subr.bf16.mxu0 0
      %879 = vmatpush2.bf16.xpose.msra.mxu0 0
      %880 = vmatprep.subr.bf16.mxu0 0
      %881 = vmatpush2.bf16.xpose.msra.mxu0 0
      %882 = vmatprep.subr.bf16.mxu0 0
      %883 = vmatpush2.bf16.xpose.msra.mxu0 0
      %884 = vmatprep.subr.bf16.mxu0 0
      %885 = vmatpush2.bf16.xpose.msra.mxu0 0
      %886 = vmatprep.subr.bf16.mxu0 0
      %887 = vmatpush2.bf16.xpose.msra.mxu0 0
      %888 = vmatprep.mubr.bf16.mxu0 0
      %889 = vmatmul.mubr.bf16.gmra.mxu0 %v851
      %v890 = vpop.f32.mrf.mxu0
      %v891 = vadd.f32 0.0, %v890
      %v892 = vpop.f32.mrf.mxu0
      %v893 = vpop.f32.mrf.mxu0
      %v894 = vpop.f32.mrf.mxu0
      %895 = vdwg.mxu0
      %v896 = vmul.f32 %v845, 0.125
      %v897 = vmul.f32 %v891, 0.125
      %v898 = vsel %vm802, 1, 0
      %vm899 = vcmp.eq.s32.totalorder %v898, 1
      %v900 = vsel %vm899, %v896, -1e+09
      %v901 = vsel %vm899, %v897, -1e+09
      %vm902 = vcmask 64512
      %v903 = vsel %vm902, %v900, -inf
      %904 = vmax.xlane.f32.xlu0 %v903
      %v905 = vpop.xlane.xlu0 %904
      %v906 = vsel %vm902, %v901, -inf
      %907 = vmax.xlane.f32.xlu0 %v906
      %v908 = vpop.xlane.xlu0 %907
      %v909 = vsub.f32 %v900, %v905
      %v910 = vsub.f32 %v901, %v908
      %v911 = vmul.f32 %v909, 1.442695
      %v912 = vpow.pop %v911
      %v913 = vmul.f32 %v910, 1.442695
      %v914 = vpow.pop %v913
      %v915 = vsel %vm902, %v912, 0.0
      %916 = vadd.xlane.f32.xlu0 %v915
      %v917 = vpop.xlane.xlu0 %916
      %v918 = vsel %vm902, %v914, 0.0
      %919 = vadd.xlane.f32.xlu0 %v918
      %v920 = vpop.xlane.xlu0 %919
      %v921 = vrcp.pop %v917
      %v922 = vrcp.pop %v920
      %v923 = vmul.f32 %v912, %v921
      %v924 = vmul.f32 %v914, %v922
      %v925 = vpack.c.bf16 %v923, %v923
      %v926 = vpack.c.bf16 %v924, %v924
      %v928 = vsel %vm902, %v925, 0
      %vm930 = vcmask 1043456
      %v932 = vsel %vm930, %v796, 0
      %934 = vmatprep.subr.bf16.mxu0 0
      %935 = vmatpush1.bf16.msra.mxu0 0
      %936 = vmatprep.subr.bf16.mxu0 0
      %937 = vmatpush1.bf16.msra.mxu0 0
      %938 = vmatprep.subr.bf16.mxu0 0
      %939 = vmatpush1.bf16.msra.mxu0 0
      %940 = vmatprep.subr.bf16.mxu0 0
      %941 = vmatpush1.bf16.msra.mxu0 0
      %942 = vmatprep.subr.bf16.mxu0 0
      %943 = vmatpush1.bf16.msra.mxu0 0
      %944 = vmatprep.subr.bf16.mxu0 0
      %945 = vmatpush1.bf16.msra.mxu0 0
      %946 = vmatprep.subr.bf16.mxu0 0
      %947 = vmatpush1.bf16.msra.mxu0 0
      %948 = vmatprep.subr.bf16.mxu0 0
      %949 = vmatpush1.bf16.msra.mxu0 %v932
      %950 = vmatprep.subr.bf16.mxu0 0
      %951 = vmatpush2.bf16.msra.mxu0 0
      %952 = vmatprep.subr.bf16.mxu0 0
      %953 = vmatpush2.bf16.msra.mxu0 0
      %954 = vmatprep.subr.bf16.mxu0 0
      %955 = vmatpush2.bf16.msra.mxu0 0
      %956 = vmatprep.subr.bf16.mxu0 0
      %957 = vmatpush2.bf16.msra.mxu0 0
      %958 = vmatprep.subr.bf16.mxu0 0
      %959 = vmatpush2.bf16.msra.mxu0 0
      %960 = vmatprep.subr.bf16.mxu0 0
      %961 = vmatpush2.bf16.msra.mxu0 0
      %962 = vmatprep.subr.bf16.mxu0 0
      %963 = vmatpush2.bf16.msra.mxu0 0
      %964 = vmatprep.subr.bf16.mxu0 0
      %965 = vmatpush2.bf16.msra.mxu0 0
      %966 = vmatprep.mubr.bf16.mxu0 0
      %967 = vmatmul.mubr.bf16.gmra.mxu0 %v928
      %v968 = vpop.f32.mrf.mxu0
      %v969 = vadd.f32 0.0, %v968
      %v970 = vpop.f32.mrf.mxu0
      %v971 = vpop.f32.mrf.mxu0
      %v972 = vpop.f32.mrf.mxu0
      %973 = vdwg.mxu0
      %v975 = vsel %vm902, %v926, 0
      %v978 = vsel %vm930, %v797, 0
      %980 = vmatprep.subr.bf16.mxu0 0
      %981 = vmatpush1.bf16.msra.mxu0 0
      %982 = vmatprep.subr.bf16.mxu0 0
      %983 = vmatpush1.bf16.msra.mxu0 0
      %984 = vmatprep.subr.bf16.mxu0 0
      %985 = vmatpush1.bf16.msra.mxu0 0
      %986 = vmatprep.subr.bf16.mxu0 0
      %987 = vmatpush1.bf16.msra.mxu0 0
      %988 = vmatprep.subr.bf16.mxu0 0
      %989 = vmatpush1.bf16.msra.mxu0 0
      %990 = vmatprep.subr.bf16.mxu0 0
      %991 = vmatpush1.bf16.msra.mxu0 0
      %992 = vmatprep.subr.bf16.mxu0 0
      %993 = vmatpush1.bf16.msra.mxu0 0
      %994 = vmatprep.subr.bf16.mxu0 0
      %995 = vmatpush1.bf16.msra.mxu0 %v978
      %996 = vmatprep.subr.bf16.mxu0 0
      %997 = vmatpush2.bf16.msra.mxu0 0
      %998 = vmatprep.subr.bf16.mxu0 0
      %999 = vmatpush2.bf16.msra.mxu0 0
      %1000 = vmatprep.subr.bf16.mxu0 0
      %1001 = vmatpush2.bf16.msra.mxu0 0
      %1002 = vmatprep.subr.bf16.mxu0 0
      %1003 = vmatpush2.bf16.msra.mxu0 0
      %1004 = vmatprep.subr.bf16.mxu0 0
      %1005 = vmatpush2.bf16.msra.mxu0 0
      %1006 = vmatprep.subr.bf16.mxu0 0
      %1007 = vmatpush2.bf16.msra.mxu0 0
      %1008 = vmatprep.subr.bf16.mxu0 0
      %1009 = vmatpush2.bf16.msra.mxu0 0
      %1010 = vmatprep.subr.bf16.mxu0 0
      %1011 = vmatpush2.bf16.msra.mxu0 0
      %1012 = vmatprep.mubr.bf16.mxu0 0
      %1013 = vmatmul.mubr.bf16.gmra.mxu0 %v975
      %v1014 = vpop.f32.mrf.mxu0
      %v1015 = vadd.f32 0.0, %v1014
      %v1016 = vpop.f32.mrf.mxu0
      %v1017 = vpop.f32.mrf.mxu0
      %v1018 = vpop.f32.mrf.mxu0
      %1019 = vdwg.mxu0
      %v1020 = vpack.c.bf16 %v969, %v969
      %v1021 = vpack.c.bf16 %v1015, %v1015
      %v1022 = vld [vmem:[%s5] sm:$0xf]
      %v1023 = vld [vmem:[%s5 + $0x4] sm:$0xf]
      %v1024 = vld [vmem:[%s5 + $0x8] sm:$0xf]
      %v1025 = vld [vmem:[%s5 + $0xc] sm:$0xf]
      %v1026 = vld [vmem:[%s5 + $0x10] sm:$0xf]
      %v1027 = vld [vmem:[%s5 + $0x14] sm:$0xf]
      %v1028 = vld [vmem:[%s5 + $0x18] sm:$0xf]
      %v1029 = vld [vmem:[%s5 + $0x1c] sm:$0xf]
      %v1030 = vld [vmem:[%s5 + $0x20] sm:$0xf]
      %v1031 = vld [vmem:[%s5 + $0x24] sm:$0xf]
      %v1032 = vld [vmem:[%s5 + $0x28] sm:$0xf]
      %v1033 = vld [vmem:[%s5 + $0x2c] sm:$0xf]
      %v1034 = vld [vmem:[%s5 + $0x30] sm:$0xf]
      %v1035 = vld [vmem:[%s5 + $0x34] sm:$0xf]
      %v1036 = vld [vmem:[%s5 + $0x38] sm:$0xf]
      %v1037 = vld [vmem:[%s5 + $0x3c] sm:$0xf]
      %v1046 = vunpack.c.l.b16 %v1022
      %v1047 = vunpack.c.l.b16 %v1023
      %v1048 = vunpack.c.l.b16 %v1024
      %v1049 = vunpack.c.l.b16 %v1025
      %v1050 = vunpack.c.l.b16 %v1026
      %v1051 = vunpack.c.l.b16 %v1027
      %v1052 = vunpack.c.l.b16 %v1028
      %v1053 = vunpack.c.l.b16 %v1029
      %v1054 = vpack.c.b16 %v1047, %v1046
      %v1055 = vpack.c.b16 %v1049, %v1048
      %v1056 = vpack.c.b16 %v1051, %v1050
      %v1057 = vpack.c.b16 %v1053, %v1052
      %v1063 = vsel %vm803, %v1020, 0
      %1065 = vmatprep.subr.bf16.mxu0 0
      %1066 = vmatpush1.bf16.msra.mxu0 0
      %1067 = vmatprep.subr.bf16.mxu0 0
      %1068 = vmatpush1.bf16.msra.mxu0 0
      %1069 = vmatprep.subr.bf16.mxu0 0
      %1070 = vmatpush1.bf16.msra.mxu0 0
      %1071 = vmatprep.subr.bf16.mxu0 0
      %1072 = vmatpush1.bf16.msra.mxu0 0
      %1073 = vmatprep.subr.bf16.mxu0 0
      %1074 = vmatpush1.bf16.msra.mxu0 %v1057
      %1075 = vmatprep.subr.bf16.mxu0 0
      %1076 = vmatpush1.bf16.msra.mxu0 %v1056
      %1077 = vmatprep.subr.bf16.mxu0 0
      %1078 = vmatpush1.bf16.msra.mxu0 %v1055
      %1079 = vmatprep.subr.bf16.mxu0 0
      %1080 = vmatpush1.bf16.msra.mxu0 %v1054
      %1081 = vmatprep.subr.bf16.mxu0 0
      %1082 = vmatpush2.bf16.msra.mxu0 0
      %1083 = vmatprep.subr.bf16.mxu0 0
      %1084 = vmatpush2.bf16.msra.mxu0 0
      %1085 = vmatprep.subr.bf16.mxu0 0
      %1086 = vmatpush2.bf16.msra.mxu0 0
      %1087 = vmatprep.subr.bf16.mxu0 0
      %1088 = vmatpush2.bf16.msra.mxu0 0
      %1089 = vmatprep.subr.bf16.mxu0 0
      %1090 = vmatpush2.bf16.msra.mxu0 0
      %1091 = vmatprep.subr.bf16.mxu0 0
      %1092 = vmatpush2.bf16.msra.mxu0 0
      %1093 = vmatprep.subr.bf16.mxu0 0
      %1094 = vmatpush2.bf16.msra.mxu0 0
      %1095 = vmatprep.subr.bf16.mxu0 0
      %1096 = vmatpush2.bf16.msra.mxu0 0
      %1097 = vmatprep.mubr.bf16.mxu0 0
      %1098 = vmatmul.mubr.bf16.gmra.mxu0 %v1063
      %v1099 = vpop.f32.mrf.mxu0
      %v1100 = vadd.f32 0.0, %v1099
      %v1101 = vpop.f32.mrf.mxu0
      %v1102 = vpop.f32.mrf.mxu0
      %v1103 = vpop.f32.mrf.mxu0
      %1104 = vdwg.mxu0
      %v1113 = vunpack.c.l.b16 %v1030
      %v1114 = vunpack.c.l.b16 %v1031
      %v1115 = vunpack.c.l.b16 %v1032
      %v1116 = vunpack.c.l.b16 %v1033
      %v1117 = vunpack.c.l.b16 %v1034
      %v1118 = vunpack.c.l.b16 %v1035
      %v1119 = vunpack.c.l.b16 %v1036
      %v1120 = vunpack.c.l.b16 %v1037
      %v1121 = vpack.c.b16 %v1114, %v1113
      %v1122 = vpack.c.b16 %v1116, %v1115
      %v1123 = vpack.c.b16 %v1118, %v1117
      %v1124 = vpack.c.b16 %v1120, %v1119
      %v1130 = vsel %vm803, %v1021, 0
      %1132 = vmatprep.subr.bf16.mxu0 0
      %1133 = vmatpush1.bf16.msra.mxu0 0
      %1134 = vmatprep.subr.bf16.mxu0 0
      %1135 = vmatpush1.bf16.msra.mxu0 0
      %1136 = vmatprep.subr.bf16.mxu0 0
      %1137 = vmatpush1.bf16.msra.mxu0 0
      %1138 = vmatprep.subr.bf16.mxu0 0
      %1139 = vmatpush1.bf16.msra.mxu0 0
      %1140 = vmatprep.subr.bf16.mxu0 0
      %1141 = vmatpush1.bf16.msra.mxu0 %v1124
      %1142 = vmatprep.subr.bf16.mxu0 0
      %1143 = vmatpush1.bf16.msra.mxu0 %v1123
      %1144 = vmatprep.subr.bf16.mxu0 0
      %1145 = vmatpush1.bf16.msra.mxu0 %v1122
      %1146 = vmatprep.subr.bf16.mxu0 0
      %1147 = vmatpush1.bf16.msra.mxu0 %v1121
      %1148 = vmatprep.subr.bf16.mxu0 0
      %1149 = vmatpush2.bf16.msra.mxu0 0
      %1150 = vmatprep.subr.bf16.mxu0 0
      %1151 = vmatpush2.bf16.msra.mxu0 0
      %1152 = vmatprep.subr.bf16.mxu0 0
      %1153 = vmatpush2.bf16.msra.mxu0 0
      %1154 = vmatprep.subr.bf16.mxu0 0
      %1155 = vmatpush2.bf16.msra.mxu0 0
      %1156 = vmatprep.subr.bf16.mxu0 0
      %1157 = vmatpush2.bf16.msra.mxu0 0
      %1158 = vmatprep.subr.bf16.mxu0 0
      %1159 = vmatpush2.bf16.msra.mxu0 0
      %1160 = vmatprep.subr.bf16.mxu0 0
      %1161 = vmatpush2.bf16.msra.mxu0 0
      %1162 = vmatprep.subr.bf16.mxu0 0
      %1163 = vmatpush2.bf16.msra.mxu0 0
      %1164 = vmatprep.mubr.bf16.mxu0 0
      %1165 = vmatmul.mubr.bf16.gmra.mxu0 %v1130
      %v1166 = vpop.f32.mrf.mxu0
      %v1167 = vadd.f32 0.0, %v1166
      %v1168 = vpop.f32.mrf.mxu0
      %v1169 = vpop.f32.mrf.mxu0
      %v1170 = vpop.f32.mrf.mxu0
      %1171 = vdwg.mxu0
      %v1172 = vadd.f32 %v1100, %v1167
      %v1173 = vld [vmem:[%s6] sm:$0x1]
      %v1175 = vlaneseq
      %v1176 = vshrl.u32 %v1175, 7
      %v1177 = vsub.s32 0, %v1176
      %v1178 = vrot.slane %v1173, %v1177
      %v1180 = vadd.f32 %v1172, %v1178
      %v1181 = vadd.f32 %v492, %v1180
      %v1182 = vld [vmem:[%s7] sm:$0x1]
      %v1183 = vld [vmem:[%s8] sm:$0x1]
      %1184 = vadd.xlane.f32.xlu0 %v1181
      %v1185 = vpop.xlane.xlu0 %1184
      %v1186 = vmul.f32 %v1185, %v497
      %v1187 = vsub.f32 %v1181, %v1186
      %v1188 = vmul.f32 %v1187, %v1187
      %1189 = vadd.xlane.f32.xlu0 %v1188
      %v1190 = vpop.xlane.xlu0 %1189
      %v1191 = vmul.f32 %v1190, %v497
      %v1192 = vadd.f32 %v1191, 1e-05
      %v1193 = vrsqrt.pop %v1192
      %v1194 = vmul.f32 %v1187, %v1193
      %v1196 = vlaneseq
      %v1197 = vshrl.u32 %v1196, 7
      %v1198 = vsub.s32 0, %v1197
      %v1199 = vrot.slane %v1182, %v1198
      %v1201 = vmul.f32 %v1194, %v1199
      %v1203 = vlaneseq
      %v1204 = vshrl.u32 %v1203, 7
      %v1205 = vsub.s32 0, %v1204
      %v1206 = vrot.slane %v1183, %v1205
      %v1208 = vadd.f32 %v1201, %v1206
      %v1209 = vpack.c.bf16 %v1208, %v1208
      %v1210 = vld [vmem:[%s9] sm:$0xff]
      %v1211 = vld [vmem:[%s9 + $0x8] sm:$0xff]
      %v1212 = vld [vmem:[%s9 + $0x10] sm:$0xff]
      %v1213 = vld [vmem:[%s9 + $0x18] sm:$0xff]
      %v1214 = vld [vmem:[%s9 + $0x20] sm:$0xff]
      %v1215 = vld [vmem:[%s9 + $0x28] sm:$0xff]
      %v1216 = vld [vmem:[%s9 + $0x30] sm:$0xff]
      %v1217 = vld [vmem:[%s9 + $0x38] sm:$0xff]
      %v1218 = vld [vmem:[%s9 + $0x40] sm:$0xff]
      %v1219 = vld [vmem:[%s9 + $0x48] sm:$0xff]
      %v1220 = vld [vmem:[%s9 + $0x50] sm:$0xff]
      %v1221 = vld [vmem:[%s9 + $0x58] sm:$0xff]
      %v1222 = vld [vmem:[%s9 + $0x60] sm:$0xff]
      %v1223 = vld [vmem:[%s9 + $0x68] sm:$0xff]
      %v1224 = vld [vmem:[%s9 + $0x70] sm:$0xff]
      %v1225 = vld [vmem:[%s9 + $0x78] sm:$0xff]
      %v1226 = vld [vmem:[%s9 + $0x80] sm:$0xff]
      %v1227 = vld [vmem:[%s9 + $0x88] sm:$0xff]
      %v1228 = vld [vmem:[%s9 + $0x90] sm:$0xff]
      %v1229 = vld [vmem:[%s9 + $0x98] sm:$0xff]
      %v1230 = vld [vmem:[%s9 + $0xa0] sm:$0xff]
      %v1231 = vld [vmem:[%s9 + $0xa8] sm:$0xff]
      %v1232 = vld [vmem:[%s9 + $0xb0] sm:$0xff]
      %v1233 = vld [vmem:[%s9 + $0xb8] sm:$0xff]
      %v1234 = vld [vmem:[%s9 + $0xc0] sm:$0xff]
      %v1235 = vld [vmem:[%s9 + $0xc8] sm:$0xff]
      %v1236 = vld [vmem:[%s9 + $0xd0] sm:$0xff]
      %v1237 = vld [vmem:[%s9 + $0xd8] sm:$0xff]
      %v1238 = vld [vmem:[%s9 + $0xe0] sm:$0xff]
      %v1239 = vld [vmem:[%s9 + $0xe8] sm:$0xff]
      %v1240 = vld [vmem:[%s9 + $0xf0] sm:$0xff]
      %v1241 = vld [vmem:[%s9 + $0xf8] sm:$0xff]
      %v1242 = vld [vmem:[%s10] sm:$0xf]
      %v1244 = vlaneseq
      %v1245 = vshrl.u32 %v1244, 7
      %v1246 = vsub.s32 0, %v1245
      %v1247 = vrot.slane %v1242, %v1246
      %v1248 = vlaneseq
      %v1249 = vshrl.u32 %v1248, 7
      %v1250 = vsub.s32 1, %v1249
      %v1251 = vrot.slane %v1242, %v1250
      %v1252 = vlaneseq
      %v1253 = vshrl.u32 %v1252, 7
      %v1254 = vsub.s32 2, %v1253
      %v1255 = vrot.slane %v1242, %v1254
      %v1256 = vlaneseq
      %v1257 = vshrl.u32 %v1256, 7
      %v1258 = vsub.s32 3, %v1257
      %v1259 = vrot.slane %v1242, %v1258
      %v1296 = vunpack.c.l.b16 %v1210
      %v1297 = vunpack.c.h.b16 %v1210
      %v1298 = vunpack.c.l.b16 %v1211
      %v1299 = vunpack.c.h.b16 %v1211
      %v1300 = vunpack.c.l.b16 %v1212
      %v1301 = vunpack.c.h.b16 %v1212
      %v1302 = vunpack.c.l.b16 %v1213
      %v1303 = vunpack.c.h.b16 %v1213
      %v1304 = vunpack.c.l.b16 %v1214
      %v1305 = vunpack.c.h.b16 %v1214
      %v1306 = vunpack.c.l.b16 %v1215
      %v1307 = vunpack.c.h.b16 %v1215
      %v1308 = vunpack.c.l.b16 %v1216
      %v1309 = vunpack.c.h.b16 %v1216
      %v1310 = vunpack.c.l.b16 %v1217
      %v1311 = vunpack.c.h.b16 %v1217
      %v1312 = vunpack.c.l.b16 %v1218
      %v1313 = vunpack.c.h.b16 %v1218
      %v1314 = vunpack.c.l.b16 %v1219
      %v1315 = vunpack.c.h.b16 %v1219
      %v1316 = vunpack.c.l.b16 %v1220
      %v1317 = vunpack.c.h.b16 %v1220
      %v1318 = vunpack.c.l.b16 %v1221
      %v1319 = vunpack.c.h.b16 %v1221
      %v1320 = vunpack.c.l.b16 %v1222
      %v1321 = vunpack.c.h.b16 %v1222
      %v1322 = vunpack.c.l.b16 %v1223
      %v1323 = vunpack.c.h.b16 %v1223
      %v1324 = vunpack.c.l.b16 %v1224
      %v1325 = vunpack.c.h.b16 %v1224
      %v1326 = vunpack.c.l.b16 %v1225
      %v1327 = vunpack.c.h.b16 %v1225
      %v1328 = vunpack.c.l.b16 %v1226
      %v1329 = vunpack.c.h.b16 %v1226
      %v1330 = vunpack.c.l.b16 %v1227
      %v1331 = vunpack.c.h.b16 %v1227
      %v1332 = vunpack.c.l.b16 %v1228
      %v1333 = vunpack.c.h.b16 %v1228
      %v1334 = vunpack.c.l.b16 %v1229
      %v1335 = vunpack.c.h.b16 %v1229
      %v1336 = vunpack.c.l.b16 %v1230
      %v1337 = vunpack.c.h.b16 %v1230
      %v1338 = vunpack.c.l.b16 %v1231
      %v1339 = vunpack.c.h.b16 %v1231
      %v1340 = vunpack.c.l.b16 %v1232
      %v1341 = vunpack.c.h.b16 %v1232
      %v1342 = vunpack.c.l.b16 %v1233
      %v1343 = vunpack.c.h.b16 %v1233
      %v1344 = vunpack.c.l.b16 %v1234
      %v1345 = vunpack.c.h.b16 %v1234
      %v1346 = vunpack.c.l.b16 %v1235
      %v1347 = vunpack.c.h.b16 %v1235
      %v1348 = vunpack.c.l.b16 %v1236
      %v1349 = vunpack.c.h.b16 %v1236
      %v1350 = vunpack.c.l.b16 %v1237
      %v1351 = vunpack.c.h.b16 %v1237
      %v1352 = vunpack.c.l.b16 %v1238
      %v1353 = vunpack.c.h.b16 %v1238
      %v1354 = vunpack.c.l.b16 %v1239
      %v1355 = vunpack.c.h.b16 %v1239
      %v1356 = vunpack.c.l.b16 %v1240
      %v1357 = vunpack.c.h.b16 %v1240
      %v1358 = vunpack.c.l.b16 %v1241
      %v1359 = vunpack.c.h.b16 %v1241
      %v1360 = vpack.c.b16 %v1300, %v1296
      %v1361 = vpack.c.b16 %v1301, %v1297
      %v1362 = vpack.c.b16 %v1302, %v1298
      %v1363 = vpack.c.b16 %v1303, %v1299
      %v1364 = vpack.c.b16 %v1308, %v1304
      %v1365 = vpack.c.b16 %v1309, %v1305
      %v1366 = vpack.c.b16 %v1310, %v1306
      %v1367 = vpack.c.b16 %v1311, %v1307
      %v1368 = vpack.c.b16 %v1316, %v1312
      %v1369 = vpack.c.b16 %v1317, %v1313
      %v1370 = vpack.c.b16 %v1318, %v1314
      %v1371 = vpack.c.b16 %v1319, %v1315
      %v1372 = vpack.c.b16 %v1324, %v1320
      %v1373 = vpack.c.b16 %v1325, %v1321
      %v1374 = vpack.c.b16 %v1326, %v1322
      %v1375 = vpack.c.b16 %v1327, %v1323
      %v1376 = vpack.c.b16 %v1332, %v1328
      %v1377 = vpack.c.b16 %v1333, %v1329
      %v1378 = vpack.c.b16 %v1334, %v1330
      %v1379 = vpack.c.b16 %v1335, %v1331
      %v1380 = vpack.c.b16 %v1340, %v1336
      %v1381 = vpack.c.b16 %v1341, %v1337
      %v1382 = vpack.c.b16 %v1342, %v1338
      %v1383 = vpack.c.b16 %v1343, %v1339
      %v1384 = vpack.c.b16 %v1348, %v1344
      %v1385 = vpack.c.b16 %v1349, %v1345
      %v1386 = vpack.c.b16 %v1350, %v1346
      %v1387 = vpack.c.b16 %v1351, %v1347
      %v1388 = vpack.c.b16 %v1356, %v1352
      %v1389 = vpack.c.b16 %v1357, %v1353
      %v1390 = vpack.c.b16 %v1358, %v1354
      %v1391 = vpack.c.b16 %v1359, %v1355
      %1424 = vmatprep.subr.bf16.mxu0 %v1389
      %1425 = vmatpush1.bf16.msra.mxu0 %v1388
      %1426 = vmatprep.subr.bf16.mxu0 %v1385
      %1427 = vmatpush1.bf16.msra.mxu0 %v1384
      %1428 = vmatprep.subr.bf16.mxu0 %v1381
      %1429 = vmatpush1.bf16.msra.mxu0 %v1380
      %1430 = vmatprep.subr.bf16.mxu0 %v1377
      %1431 = vmatpush1.bf16.msra.mxu0 %v1376
      %1432 = vmatprep.subr.bf16.mxu0 %v1373
      %1433 = vmatpush1.bf16.msra.mxu0 %v1372
      %1434 = vmatprep.subr.bf16.mxu0 %v1369
      %1435 = vmatpush1.bf16.msra.mxu0 %v1368
      %1436 = vmatprep.subr.bf16.mxu0 %v1365
      %1437 = vmatpush1.bf16.msra.mxu0 %v1364
      %1438 = vmatprep.subr.bf16.mxu0 %v1361
      %1439 = vmatpush1.bf16.msra.mxu0 %v1360
      %1440 = vmatprep.subr.bf16.mxu0 0
      %1441 = vmatpush2.bf16.msra.mxu0 0
      %1442 = vmatprep.subr.bf16.mxu0 0
      %1443 = vmatpush2.bf16.msra.mxu0 0
      %1444 = vmatprep.subr.bf16.mxu0 0
      %1445 = vmatpush2.bf16.msra.mxu0 0
      %1446 = vmatprep.subr.bf16.mxu0 0
      %1447 = vmatpush2.bf16.msra.mxu0 0
      %1448 = vmatprep.subr.bf16.mxu0 0
      %1449 = vmatpush2.bf16.msra.mxu0 0
      %1450 = vmatprep.subr.bf16.mxu0 0
      %1451 = vmatpush2.bf16.msra.mxu0 0
      %1452 = vmatprep.subr.bf16.mxu0 0
      %1453 = vmatpush2.bf16.msra.mxu0 0
      %1454 = vmatprep.subr.bf16.mxu0 0
      %1455 = vmatpush2.bf16.msra.mxu0 0
      %1456 = vmatprep.mubr.bf16.mxu0 0
      %1457 = vmatmul.mubr.bf16.gmra.mxu0 %v1209
      %v1458 = vpop.f32.mrf.mxu0
      %v1459 = vadd.f32 %v1247, %v1458
      %v1460 = vpop.f32.mrf.mxu0
      %v1461 = vadd.f32 %v1251, %v1460
      %v1462 = vpop.f32.mrf.mxu0
      %v1463 = vpop.f32.mrf.mxu0
      %1464 = vdwg.mxu0
      %1465 = vmatprep.subr.bf16.mxu0 %v1391
      %1466 = vmatpush1.bf16.msra.mxu0 %v1390
      %1467 = vmatprep.subr.bf16.mxu0 %v1387
      %1468 = vmatpush1.bf16.msra.mxu0 %v1386
      %1469 = vmatprep.subr.bf16.mxu0 %v1383
      %1470 = vmatpush1.bf16.msra.mxu0 %v1382
      %1471 = vmatprep.subr.bf16.mxu0 %v1379
      %1472 = vmatpush1.bf16.msra.mxu0 %v1378
      %1473 = vmatprep.subr.bf16.mxu0 %v1375
      %1474 = vmatpush1.bf16.msra.mxu0 %v1374
      %1475 = vmatprep.subr.bf16.mxu0 %v1371
      %1476 = vmatpush1.bf16.msra.mxu0 %v1370
      %1477 = vmatprep.subr.bf16.mxu0 %v1367
      %1478 = vmatpush1.bf16.msra.mxu0 %v1366
      %1479 = vmatprep.subr.bf16.mxu0 %v1363
      %1480 = vmatpush1.bf16.msra.mxu0 %v1362
      %1481 = vmatprep.subr.bf16.mxu0 0
      %1482 = vmatpush2.bf16.msra.mxu0 0
      %1483 = vmatprep.subr.bf16.mxu0 0
      %1484 = vmatpush2.bf16.msra.mxu0 0
      %1485 = vmatprep.subr.bf16.mxu0 0
      %1486 = vmatpush2.bf16.msra.mxu0 0
      %1487 = vmatprep.subr.bf16.mxu0 0
      %1488 = vmatpush2.bf16.msra.mxu0 0
      %1489 = vmatprep.subr.bf16.mxu0 0
      %1490 = vmatpush2.bf16.msra.mxu0 0
      %1491 = vmatprep.subr.bf16.mxu0 0
      %1492 = vmatpush2.bf16.msra.mxu0 0
      %1493 = vmatprep.subr.bf16.mxu0 0
      %1494 = vmatpush2.bf16.msra.mxu0 0
      %1495 = vmatprep.subr.bf16.mxu0 0
      %1496 = vmatpush2.bf16.msra.mxu0 0
      %1497 = vmatprep.mubr.bf16.mxu0 0
      %1498 = vmatmul.mubr.bf16.gmra.mxu0 %v1209
      %v1499 = vpop.f32.mrf.mxu0
      %v1500 = vadd.f32 %v1255, %v1499
      %v1501 = vpop.f32.mrf.mxu0
      %v1502 = vadd.f32 %v1259, %v1501
      %v1503 = vpop.f32.mrf.mxu0
      %v1504 = vpop.f32.mrf.mxu0
      %1505 = vdwg.mxu0
      %v1506 = vmul.f32 %v1459, 0.5
      %v1507 = vmul.f32 %v1461, 0.5
      %v1508 = vmul.f32 %v1500, 0.5
      %v1509 = vmul.f32 %v1502, 0.5
      %v1510 = vmul.f32 %v1459, 0.044715
      %v1511 = vmul.f32 %v1461, 0.044715
      %v1512 = vmul.f32 %v1500, 0.044715
      %v1513 = vmul.f32 %v1502, 0.044715
      %v1514 = vmul.f32 %v1510, %v1459
      %v1515 = vmul.f32 %v1511, %v1461
      %v1516 = vmul.f32 %v1512, %v1500
      %v1517 = vmul.f32 %v1513, %v1502
      %v1518 = vmul.f32 %v1514, %v1459
      %v1519 = vmul.f32 %v1515, %v1461
      %v1520 = vmul.f32 %v1516, %v1500
      %v1521 = vmul.f32 %v1517, %v1502
      %v1522 = vadd.f32 %v1459, %v1518
      %v1523 = vadd.f32 %v1461, %v1519
      %v1524 = vadd.f32 %v1500, %v1520
      %v1525 = vadd.f32 %v1502, %v1521
      %v1526 = vmul.f32 %v1522, 0.7978846
      %v1527 = vmul.f32 %v1523, 0.7978846
      %v1528 = vmul.f32 %v1524, 0.7978846
      %v1529 = vmul.f32 %v1525, 0.7978846
      %v1530 = vtanh.pop %v1526
      %v1531 = vtanh.pop %v1527
      %v1532 = vtanh.pop %v1528
      %v1533 = vtanh.pop %v1529
      %v1534 = vadd.f32 %v1530, 1.0
      %v1535 = vadd.f32 %v1531, 1.0
      %v1536 = vadd.f32 %v1532, 1.0
      %v1537 = vadd.f32 %v1533, 1.0
      %v1538 = vmul.f32 %v1506, %v1534
      %v1539 = vmul.f32 %v1507, %v1535
      %v1540 = vmul.f32 %v1508, %v1536
      %v1541 = vmul.f32 %v1509, %v1537
      %v1542 = vpack.c.bf16 %v1538, %v1538
      %v1543 = vpack.c.bf16 %v1539, %v1539
      %v1544 = vpack.c.bf16 %v1540, %v1540
      %v1545 = vpack.c.bf16 %v1541, %v1541
      %v1546 = vld [vmem:[%s11] sm:$0xf]
      %v1547 = vld [vmem:[%s11 + $0x4] sm:$0xf]
      %v1548 = vld [vmem:[%s11 + $0x8] sm:$0xf]
      %v1549 = vld [vmem:[%s11 + $0xc] sm:$0xf]
      %v1550 = vld [vmem:[%s11 + $0x10] sm:$0xf]
      %v1551 = vld [vmem:[%s11 + $0x14] sm:$0xf]
      %v1552 = vld [vmem:[%s11 + $0x18] sm:$0xf]
      %v1553 = vld [vmem:[%s11 + $0x1c] sm:$0xf]
      %v1554 = vld [vmem:[%s11 + $0x20] sm:$0xf]
      %v1555 = vld [vmem:[%s11 + $0x24] sm:$0xf]
      %v1556 = vld [vmem:[%s11 + $0x28] sm:$0xf]
      %v1557 = vld [vmem:[%s11 + $0x2c] sm:$0xf]
      %v1558 = vld [vmem:[%s11 + $0x30] sm:$0xf]
      %v1559 = vld [vmem:[%s11 + $0x34] sm:$0xf]
      %v1560 = vld [vmem:[%s11 + $0x38] sm:$0xf]
      %v1561 = vld [vmem:[%s11 + $0x3c] sm:$0xf]
      %v1562 = vld [vmem:[%s11 + $0x40] sm:$0xf]
      %v1563 = vld [vmem:[%s11 + $0x44] sm:$0xf]
      %v1564 = vld [vmem:[%s11 + $0x48] sm:$0xf]
      %v1565 = vld [vmem:[%s11 + $0x4c] sm:$0xf]
      %v1566 = vld [vmem:[%s11 + $0x50] sm:$0xf]
      %v1567 = vld [vmem:[%s11 + $0x54] sm:$0xf]
      %v1568 = vld [vmem:[%s11 + $0x58] sm:$0xf]
      %v1569 = vld [vmem:[%s11 + $0x5c] sm:$0xf]
      %v1570 = vld [vmem:[%s11 + $0x60] sm:$0xf]
      %v1571 = vld [vmem:[%s11 + $0x64] sm:$0xf]
      %v1572 = vld [vmem:[%s11 + $0x68] sm:$0xf]
      %v1573 = vld [vmem:[%s11 + $0x6c] sm:$0xf]
      %v1574 = vld [vmem:[%s11 + $0x70] sm:$0xf]
      %v1575 = vld [vmem:[%s11 + $0x74] sm:$0xf]
      %v1576 = vld [vmem:[%s11 + $0x78] sm:$0xf]
      %v1577 = vld [vmem:[%s11 + $0x7c] sm:$0xf]
      %v1578 = vld [vmem:[%s11 + $0x80] sm:$0xf]
      %v1579 = vld [vmem:[%s11 + $0x84] sm:$0xf]
      %v1580 = vld [vmem:[%s11 + $0x88] sm:$0xf]
      %v1581 = vld [vmem:[%s11 + $0x8c] sm:$0xf]
      %v1582 = vld [vmem:[%s11 + $0x90] sm:$0xf]
      %v1583 = vld [vmem:[%s11 + $0x94] sm:$0xf]
      %v1584 = vld [vmem:[%s11 + $0x98] sm:$0xf]
      %v1585 = vld [vmem:[%s11 + $0x9c] sm:$0xf]
      %v1586 = vld [vmem:[%s11 + $0xa0] sm:$0xf]
      %v1587 = vld [vmem:[%s11 + $0xa4] sm:$0xf]
      %v1588 = vld [vmem:[%s11 + $0xa8] sm:$0xf]
      %v1589 = vld [vmem:[%s11 + $0xac] sm:$0xf]
      %v1590 = vld [vmem:[%s11 + $0xb0] sm:$0xf]
      %v1591 = vld [vmem:[%s11 + $0xb4] sm:$0xf]
      %v1592 = vld [vmem:[%s11 + $0xb8] sm:$0xf]
      %v1593 = vld [vmem:[%s11 + $0xbc] sm:$0xf]
      %v1594 = vld [vmem:[%s11 + $0xc0] sm:$0xf]
      %v1595 = vld [vmem:[%s11 + $0xc4] sm:$0xf]
      %v1596 = vld [vmem:[%s11 + $0xc8] sm:$0xf]
      %v1597 = vld [vmem:[%s11 + $0xcc] sm:$0xf]
      %v1598 = vld [vmem:[%s11 + $0xd0] sm:$0xf]
      %v1599 = vld [vmem:[%s11 + $0xd4] sm:$0xf]
      %v1600 = vld [vmem:[%s11 + $0xd8] sm:$0xf]
      %v1601 = vld [vmem:[%s11 + $0xdc] sm:$0xf]
      %v1602 = vld [vmem:[%s11 + $0xe0] sm:$0xf]
      %v1603 = vld [vmem:[%s11 + $0xe4] sm:$0xf]
      %v1604 = vld [vmem:[%s11 + $0xe8] sm:$0xf]
      %v1605 = vld [vmem:[%s11 + $0xec] sm:$0xf]
      %v1606 = vld [vmem:[%s11 + $0xf0] sm:$0xf]
      %v1607 = vld [vmem:[%s11 + $0xf4] sm:$0xf]
      %v1608 = vld [vmem:[%s11 + $0xf8] sm:$0xf]
      %v1609 = vld [vmem:[%s11 + $0xfc] sm:$0xf]
      %v1674 = vunpack.c.l.b16 %v1546
      %v1675 = vunpack.c.l.b16 %v1547
      %v1676 = vunpack.c.l.b16 %v1548
      %v1677 = vunpack.c.l.b16 %v1549
      %v1678 = vunpack.c.l.b16 %v1550
      %v1679 = vunpack.c.l.b16 %v1551
      %v1680 = vunpack.c.l.b16 %v1552
      %v1681 = vunpack.c.l.b16 %v1553
      %v1682 = vunpack.c.l.b16 %v1554
      %v1683 = vunpack.c.l.b16 %v1555
      %v1684 = vunpack.c.l.b16 %v1556
      %v1685 = vunpack.c.l.b16 %v1557
      %v1686 = vunpack.c.l.b16 %v1558
      %v1687 = vunpack.c.l.b16 %v1559
      %v1688 = vunpack.c.l.b16 %v1560
      %v1689 = vunpack.c.l.b16 %v1561
      %v1690 = vunpack.c.l.b16 %v1562
      %v1691 = vunpack.c.l.b16 %v1563
      %v1692 = vunpack.c.l.b16 %v1564
      %v1693 = vunpack.c.l.b16 %v1565
      %v1694 = vunpack.c.l.b16 %v1566
      %v1695 = vunpack.c.l.b16 %v1567
      %v1696 = vunpack.c.l.b16 %v1568
      %v1697 = vunpack.c.l.b16 %v1569
      %v1698 = vunpack.c.l.b16 %v1570
      %v1699 = vunpack.c.l.b16 %v1571
      %v1700 = vunpack.c.l.b16 %v1572
      %v1701 = vunpack.c.l.b16 %v1573
      %v1702 = vunpack.c.l.b16 %v1574
      %v1703 = vunpack.c.l.b16 %v1575
      %v1704 = vunpack.c.l.b16 %v1576
      %v1705 = vunpack.c.l.b16 %v1577
      %v1706 = vunpack.c.l.b16 %v1578
      %v1707 = vunpack.c.l.b16 %v1579
      %v1708 = vunpack.c.l.b16 %v1580
      %v1709 = vunpack.c.l.b16 %v1581
      %v1710 = vunpack.c.l.b16 %v1582
      %v1711 = vunpack.c.l.b16 %v1583
      %v1712 = vunpack.c.l.b16 %v1584
      %v1713 = vunpack.c.l.b16 %v1585
      %v1714 = vunpack.c.l.b16 %v1586
      %v1715 = vunpack.c.l.b16 %v1587
      %v1716 = vunpack.c.l.b16 %v1588
      %v1717 = vunpack.c.l.b16 %v1589
      %v1718 = vunpack.c.l.b16 %v1590
      %v1719 = vunpack.c.l.b16 %v1591
      %v1720 = vunpack.c.l.b16 %v1592
      %v1721 = vunpack.c.l.b16 %v1593
      %v1722 = vunpack.c.l.b16 %v1594
      %v1723 = vunpack.c.l.b16 %v1595
      %v1724 = vunpack.c.l.b16 %v1596
      %v1725 = vunpack.c.l.b16 %v1597
      %v1726 = vunpack.c.l.b16 %v1598
      %v1727 = vunpack.c.l.b16 %v1599
      %v1728 = vunpack.c.l.b16 %v1600
      %v1729 = vunpack.c.l.b16 %v1601
      %v1730 = vunpack.c.l.b16 %v1602
      %v1731 = vunpack.c.l.b16 %v1603
      %v1732 = vunpack.c.l.b16 %v1604
      %v1733 = vunpack.c.l.b16 %v1605
      %v1734 = vunpack.c.l.b16 %v1606
      %v1735 = vunpack.c.l.b16 %v1607
      %v1736 = vunpack.c.l.b16 %v1608
      %v1737 = vunpack.c.l.b16 %v1609
      %v1738 = vpack.c.b16 %v1675, %v1674
      %v1739 = vpack.c.b16 %v1677, %v1676
      %v1740 = vpack.c.b16 %v1679, %v1678
      %v1741 = vpack.c.b16 %v1681, %v1680
      %v1742 = vpack.c.b16 %v1683, %v1682
      %v1743 = vpack.c.b16 %v1685, %v1684
      %v1744 = vpack.c.b16 %v1687, %v1686
      %v1745 = vpack.c.b16 %v1689, %v1688
      %v1746 = vpack.c.b16 %v1691, %v1690
      %v1747 = vpack.c.b16 %v1693, %v1692
      %v1748 = vpack.c.b16 %v1695, %v1694
      %v1749 = vpack.c.b16 %v1697, %v1696
      %v1750 = vpack.c.b16 %v1699, %v1698
      %v1751 = vpack.c.b16 %v1701, %v1700
      %v1752 = vpack.c.b16 %v1703, %v1702
      %v1753 = vpack.c.b16 %v1705, %v1704
      %v1754 = vpack.c.b16 %v1707, %v1706
      %v1755 = vpack.c.b16 %v1709, %v1708
      %v1756 = vpack.c.b16 %v1711, %v1710
      %v1757 = vpack.c.b16 %v1713, %v1712
      %v1758 = vpack.c.b16 %v1715, %v1714
      %v1759 = vpack.c.b16 %v1717, %v1716
      %v1760 = vpack.c.b16 %v1719, %v1718
      %v1761 = vpack.c.b16 %v1721, %v1720
      %v1762 = vpack.c.b16 %v1723, %v1722
      %v1763 = vpack.c.b16 %v1725, %v1724
      %v1764 = vpack.c.b16 %v1727, %v1726
      %v1765 = vpack.c.b16 %v1729, %v1728
      %v1766 = vpack.c.b16 %v1731, %v1730
      %v1767 = vpack.c.b16 %v1733, %v1732
      %v1768 = vpack.c.b16 %v1735, %v1734
      %v1769 = vpack.c.b16 %v1737, %v1736
      %1802 = vmatprep.subr.bf16.mxu0 0
      %1803 = vmatpush1.bf16.msra.mxu0 %v1745
      %1804 = vmatprep.subr.bf16.mxu0 0
      %1805 = vmatpush1.bf16.msra.mxu0 %v1744
      %1806 = vmatprep.subr.bf16.mxu0 0
      %1807 = vmatpush1.bf16.msra.mxu0 %v1743
      %1808 = vmatprep.subr.bf16.mxu0 0
      %1809 = vmatpush1.bf16.msra.mxu0 %v1742
      %1810 = vmatprep.subr.bf16.mxu0 0
      %1811 = vmatpush1.bf16.msra.mxu0 %v1741
      %1812 = vmatprep.subr.bf16.mxu0 0
      %1813 = vmatpush1.bf16.msra.mxu0 %v1740
      %1814 = vmatprep.subr.bf16.mxu0 0
      %1815 = vmatpush1.bf16.msra.mxu0 %v1739
      %1816 = vmatprep.subr.bf16.mxu0 0
      %1817 = vmatpush1.bf16.msra.mxu0 %v1738
      %1818 = vmatprep.subr.bf16.mxu0 0
      %1819 = vmatpush2.bf16.msra.mxu0 %v1753
      %1820 = vmatprep.subr.bf16.mxu0 0
      %1821 = vmatpush2.bf16.msra.mxu0 %v1752
      %1822 = vmatprep.subr.bf16.mxu0 0
      %1823 = vmatpush2.bf16.msra.mxu0 %v1751
      %1824 = vmatprep.subr.bf16.mxu0 0
      %1825 = vmatpush2.bf16.msra.mxu0 %v1750
      %1826 = vmatprep.subr.bf16.mxu0 0
      %1827 = vmatpush2.bf16.msra.mxu0 %v1749
      %1828 = vmatprep.subr.bf16.mxu0 0
      %1829 = vmatpush2.bf16.msra.mxu0 %v1748
      %1830 = vmatprep.subr.bf16.mxu0 0
      %1831 = vmatpush2.bf16.msra.mxu0 %v1747
      %1832 = vmatprep.subr.bf16.mxu0 0
      %1833 = vmatpush2.bf16.msra.mxu0 %v1746
      %1834 = vmatprep.mubr.bf16.mxu0 %v1543
      %1835 = vmatmul.mubr.bf16.gmra.mxu0 %v1542
      %v1836 = vpop.f32.mrf.mxu0
      %v1837 = vadd.f32 0.0, %v1836
      %v1838 = vpop.f32.mrf.mxu0
      %v1839 = vpop.f32.mrf.mxu0
      %v1840 = vpop.f32.mrf.mxu0
      %1841 = vdwg.mxu0
      %1842 = vmatprep.subr.bf16.mxu0 0
      %1843 = vmatpush1.bf16.msra.mxu0 %v1761
      %1844 = vmatprep.subr.bf16.mxu0 0
      %1845 = vmatpush1.bf16.msra.mxu0 %v1760
      %1846 = vmatprep.subr.bf16.mxu0 0
      %1847 = vmatpush1.bf16.msra.mxu0 %v1759
      %1848 = vmatprep.subr.bf16.mxu0 0
      %1849 = vmatpush1.bf16.msra.mxu0 %v1758
      %1850 = vmatprep.subr.bf16.mxu0 0
      %1851 = vmatpush1.bf16.msra.mxu0 %v1757
      %1852 = vmatprep.subr.bf16.mxu0 0
      %1853 = vmatpush1.bf16.msra.mxu0 %v1756
      %1854 = vmatprep.subr.bf16.mxu0 0
      %1855 = vmatpush1.bf16.msra.mxu0 %v1755
      %1856 = vmatprep.subr.bf16.mxu0 0
      %1857 = vmatpush1.bf16.msra.mxu0 %v1754
      %1858 = vmatprep.subr.bf16.mxu0 0
      %1859 = vmatpush2.bf16.msra.mxu0 %v1769
      %1860 = vmatprep.subr.bf16.mxu0 0
      %1861 = vmatpush2.bf16.msra.mxu0 %v1768
      %1862 = vmatprep.subr.bf16.mxu0 0
      %1863 = vmatpush2.bf16.msra.mxu0 %v1767
      %1864 = vmatprep.subr.bf16.mxu0 0
      %1865 = vmatpush2.bf16.msra.mxu0 %v1766
      %1866 = vmatprep.subr.bf16.mxu0 0
      %1867 = vmatpush2.bf16.msra.mxu0 %v1765
      %1868 = vmatprep.subr.bf16.mxu0 0
      %1869 = vmatpush2.bf16.msra.mxu0 %v1764
      %1870 = vmatprep.subr.bf16.mxu0 0
      %1871 = vmatpush2.bf16.msra.mxu0 %v1763
      %1872 = vmatprep.subr.bf16.mxu0 0
      %1873 = vmatpush2.bf16.msra.mxu0 %v1762
      %1874 = vmatprep.mubr.bf16.mxu0 %v1545
      %1875 = vmatmul.mubr.bf16.gmra.mxu0 %v1544
      %v1876 = vpop.f32.mrf.mxu0
      %v1877 = vadd.f32 %v1837, %v1876
      %v1878 = vpop.f32.mrf.mxu0
      %v1879 = vpop.f32.mrf.mxu0
      %v1880 = vpop.f32.mrf.mxu0
      %1881 = vdwg.mxu0
      %v1882 = vadd.f32 %v1181, %v1877
      %v1883 = vld [vmem:[%s12] sm:$0x1]
      %v1885 = vlaneseq
      %v1886 = vshrl.u32 %v1885, 7
      %v1887 = vsub.s32 0, %v1886
      %v1888 = vrot.slane %v1883, %v1887
      %v1890 = vadd.f32 %v1882, %v1888
      %v1891 = vld [vmem:[%s13] sm:$0x1]
      %v1892 = vld [vmem:[%s14] sm:$0x1]
      %1893 = vadd.xlane.f32.xlu0 %v1890
      %v1894 = vpop.xlane.xlu0 %1893
      %v1895 = vmul.f32 %v1894, %v497
      %v1896 = vsub.f32 %v1890, %v1895
      %v1897 = vmul.f32 %v1896, %v1896
      %1898 = vadd.xlane.f32.xlu0 %v1897
      %v1899 = vpop.xlane.xlu0 %1898
      %v1900 = vmul.f32 %v1899, %v497
      %v1901 = vadd.f32 %v1900, 1e-05
      %v1902 = vrsqrt.pop %v1901
      %v1903 = vmul.f32 %v1896, %v1902
      %v1905 = vlaneseq
      %v1906 = vshrl.u32 %v1905, 7
      %v1907 = vsub.s32 0, %v1906
      %v1908 = vrot.slane %v1891, %v1907
      %v1910 = vmul.f32 %v1903, %v1908
      %v1912 = vlaneseq
      %v1913 = vshrl.u32 %v1912, 7
      %v1914 = vsub.s32 0, %v1913
      %v1915 = vrot.slane %v1892, %v1914
      %v1917 = vadd.f32 %v1910, %v1915
      %v1918 = vpack.c.bf16 %v1917, %v1917
      %1919 = vst [vmem:[%s489] sm:$0xf] %v1918
      %p1920 = scmp.lt.s32.totalorder %s26, 1
      %s1921 = scalar_select %p1920, %s26, 1
      %s1922 = smul.addr %s1921, 4
      %s1923 = scalar_lea.vmem %s15, %s1922
      // Predicated region
      $region81: #{_lambda_.4} parent=79 // pred_check
        %p1924 = pneg %p364
      $region82: #{_lambda_.4} parent=79 // pred_check_branch
        %1926 = sbr.rel (%p1924) target = $region84
      $region83: #{_lambda_.4} parent=79 // pred_region
        _
      $region84: #{_lambda_.4} parent=79 // pred_fallthru
        _
    $region80: #{_lambda_.4} parent=5 // pred_fallthru
      _
    %p1927 = scmp.le.s32.totalorder 2, %s21
    // Predicated region
    $region85: #{_lambda_.4} parent=5 // pred_check
      %p1928 = pneg %p1927
    $region86: #{_lambda_.4} parent=5 // pred_check_branch
      %1930 = sbr.rel (%p1928) target = $region88
    $region87: #{_lambda_.4} parent=5 // pred_region
      %s1931 = ssub.s32 %s21, 2
      // Predicated region
      $region89: #{_lambda_.4} parent=87 // pred_check
        %p1932 = pneg %p370
      $region90: #{_lambda_.4} parent=87 // pred_check_branch
        %1934 = sbr.rel (%p1932) target = $region92
      $region91: #{_lambda_.4} parent=87 // pred_region
        %p1935 = scmp.lt.s32.totalorder %s27, 1
        %s1936 = scalar_select %p1935, %s27, 1
        %s1937 = smul.addr %s1936, 4
        %s1938 = scalar_lea.vmem %s15, %s1937
      $region92: #{_lambda_.4} parent=87 // pred_fallthru
        _
    $region88: #{_lambda_.4} parent=5 // pred_fallthru
      _
  $region6: #{_lambda_.4} parent=0 // loop_footer
    %s25 = sadd.s32 1, %s21
  $region7: #{_lambda_.4} parent=0 // loop_footer_branch
    %20 = sbr.rel target = $region3
  $region8: #{_lambda_.4} parent=0 // loop_exit
    _

// kernel: _lambda_.3
$region0: #{_lambda_.3}
  #allocation0 [shape = 'u32[]', space=smem, size = 0x4, offset = 0x4, fixed_abs, tag = 'smem constant byte address 0x4 - core index']
  #allocation1 [shape = 'u32[144,128]{1,0:T(1,128)}', space=vmem, size = 0x12000, scoped, tag = 'internal scratch']
  %s0 = inlined_call_operand.vmem [shape: bf16[2,8,128], index: 0, kind: input, shape index: {}]
  %s1 = inlined_call_operand.vmem [shape: f32[1,128], index: 1, kind: input, shape index: {}]
  %s2 = inlined_call_operand.vmem [shape: f32[1,128], index: 2, kind: input, shape index: {}]
  %s3 = inlined_call_operand.vmem [shape: bf16[128,384], index: 3, kind: input, shape index: {}]
  %s4 = inlined_call_operand.vmem [shape: f32[1,384], index: 4, kind: input, shape index: {}]
  %s5 = inlined_call_operand.hbm [shape: bf16[2,64,128], index: 5, kind: input, shape index: {}]
  %s6 = inlined_call_operand.vmem [shape: f32[1,128], index: 6, kind: input, shape index: {}]
  %s7 = inlined_call_operand.vmem [shape: f32[1,128], index: 7, kind: input, shape index: {}]
  %s8 = inlined_call_operand.vmem [shape: f32[1,128], index: 8, kind: input, shape index: {}]
  %s9 = inlined_call_operand.hbm [shape: bf16[128,512], index: 9, kind: input, shape index: {}]
  %s10 = inlined_call_operand.vmem [shape: f32[1,512], index: 10, kind: input, shape index: {}]
  %s11 = inlined_call_operand.hbm [shape: bf16[512,128], index: 11, kind: input, shape index: {}]
  %s12 = inlined_call_operand.vmem [shape: f32[1,128], index: 12, kind: input, shape index: {}]
  %s13 = inlined_call_operand.vmem [shape: f32[1,128], index: 13, kind: input, shape index: {}]
  %s14 = inlined_call_operand.vmem [shape: f32[1,128], index: 14, kind: input, shape index: {}]
  %s15 = inlined_call_operand.vmem [shape: bf16[2,8,128], index: 15, kind: output, shape index: {}]
  %s16 = sld [smem:[#allocation0]]
  $region105: #{_lambda_.3} parent=0
    _
  %s18 = ssub.s32 1, %s16
  %s19 = scalar_select 0, %s18, %s16
  $region1: #{_lambda_.3} parent=0
    #allocation2 [shape = 'u8[32768]{0}', space=vmem, size = 0x8000, scoped, tag = 'input window, operand 5, single buffered']
    #allocation3 [shape = 's32[2]{0}', space=sflag, size = 0x8, scoped, tag = 'scoped memory for _lambda_.3']
    #allocation4 [shape = 'u8[131072]{0}', space=vmem, size = 0x20000, scoped, tag = 'input window, operand 9, single buffered']
    #allocation5 [shape = 's32[1]{0}', space=sflag, size = 0x4, scoped, tag = 'scoped memory for _lambda_.3']
    #allocation6 [shape = 'u8[131072]{0}', space=vmem, size = 0x20000, scoped, tag = 'input window, operand 11, single buffered']
    %20 = vsyncpa [#allocation3], 0
    %21 = vsyncpa [#allocation5], 0
    loop: start=0, step=1, limit=4
    $region2: #{_lambda_.3} parent=1 // loop_pre_header
      _
    $region3: #{_lambda_.3} parent=1 // loop_header
      %s23 = sphi 0, %s27
      %p24 = scmp.ge.s32.totalorder %s23, 4
      %s33 = sphi 0, %s35
      %s36 = sphi 0, %s33
      %s37 = sphi 0, %s36
      %s53 = sphi 0, %s37
      %s57 = sphi 0, %s57
      %s59 = sphi 0, %s57
      %s60 = sphi 0, %s59
      %s74 = sphi 0, %s60
      %s78 = sphi 0, %s78
      %s80 = sphi 0, %s78
      %s81 = sphi 0, %s80
      %s95 = sphi 0, %s81
      %s99 = sphi 0, %s99
      %s101 = sphi 0, %s99
      %s102 = sphi 0, %s101
      %s116 = sphi 0, %s102
      %s120 = sphi 0, %s120
      %s122 = sphi 0, %s120
      %s123 = sphi 0, %s122
      %s137 = sphi 0, %s123
      %s141 = sphi 0, %s141
      %s143 = sphi 0, %s141
      %s144 = sphi 0, %s143
      %s158 = sphi 0, %s144
      %s162 = sphi 0, %s162
      %s164 = sphi 0, %s162
      %s165 = sphi 0, %s164
      %s179 = sphi 0, %s165
      %s183 = sphi 0, %s183
      %s185 = sphi 0, %s183
      %s186 = sphi 0, %s185
      %s200 = sphi 0, %s186
      %s204 = sphi 0, %s204
      %s206 = sphi 0, %s204
      %s207 = sphi 0, %s206
      %s221 = sphi 0, %s207
      %s225 = sphi 0, %s225
      %s227 = sphi 0, %s225
      %s228 = sphi 0, %s227
      %s242 = sphi 0, %s228
      %s246 = sphi 0, %s246
      %s248 = sphi 0, %s246
      %s249 = sphi 0, %s248
      %s263 = sphi 0, %s249
      %s267 = sphi 0, %s267
      %s269 = sphi 0, %s267
      %s270 = sphi 0, %s269
      %s284 = sphi 0, %s270
      %s288 = sphi 0, %s288
      %s290 = sphi 0, %s288
      %s291 = sphi 0, %s290
      %s305 = sphi 0, %s291
      %s309 = sphi 0, %s309
      %s311 = sphi 0, %s309
      %s312 = sphi 0, %s311
      %s326 = sphi 0, %s312
      %s330 = sphi 0, %s330
      %s332 = sphi 0, %s330
      %s333 = sphi 0, %s332
      %s347 = sphi 0, %s333
      %s353 = sphi 0, %s355
      %s356 = sphi 0, %s353
      %s357 = sphi 0, %s356
      %s373 = sphi 0, %s357
    $region4: #{_lambda_.3} parent=1 // loop_header_branch
      %26 = sbr.rel (%p24) target = $region8
    $region5: #{_lambda_.3} parent=1 // loop_body
      %s28 = ssub.s32 %s23, 1
      %s29 = ssub.s32 %s23, 2
      %s30 = sadd.s32 %s23, 1
      %s31 = ssub.s32 %s23, %s30
      %p32 = scmp.eq.s32.totalorder %s31, 0
      %s34 = sadd.s32 %s33, 1
      %s35 = scalar_select %p32, %s33, %s34
      %p38 = pneg %p32
      %p39 = scmp.eq.s32.totalorder %s23, 1
      %p40 = por %p38, %p39
      %p41 = scmp.ne.s32.totalorder %s33, %s36
      %p42 = scmp.eq.s32.totalorder %s23, 0
      %p43 = por %p41, %p42
      %p44 = scmp.ne.s32.totalorder %s33, %s36
      %p45 = scmp.eq.s32.totalorder %s28, 1
      %p46 = por %p44, %p45
      %p47 = scmp.ne.s32.totalorder %s36, %s37
      %p48 = scmp.eq.s32.totalorder %s28, 0
      %p49 = por %p47, %p48
      %p50 = scmp.ne.s32.totalorder %s36, %s37
      %p51 = scmp.eq.s32.totalorder %s29, 1
      %p52 = por %p50, %p51
      %p54 = scmp.ne.s32.totalorder %s37, %s53
      %p55 = scmp.eq.s32.totalorder %s29, 0
      %p56 = por %p54, %p55
      %s58 = sadd.s32 %s57, 1
      %p61 = scmp.eq.s32.totalorder %s23, 1
      %p62 = scmp.ne.s32.totalorder %s57, %s59
      %p63 = scmp.eq.s32.totalorder %s23, 0
      %p64 = por %p62, %p63
      %p65 = scmp.ne.s32.totalorder %s57, %s59
      %p66 = scmp.eq.s32.totalorder %s28, 1
      %p67 = por %p65, %p66
      %p68 = scmp.ne.s32.totalorder %s59, %s60
      %p69 = scmp.eq.s32.totalorder %s28, 0
      %p70 = por %p68, %p69
      %p71 = scmp.ne.s32.totalorder %s59, %s60
      %p72 = scmp.eq.s32.totalorder %s29, 1
      %p73 = por %p71, %p72
      %p75 = scmp.ne.s32.totalorder %s60, %s74
      %p76 = scmp.eq.s32.totalorder %s29, 0
      %p77 = por %p75, %p76
      %s79 = sadd.s32 %s78, 1
      %p82 = scmp.eq.s32.totalorder %s23, 1
      %p83 = scmp.ne.s32.totalorder %s78, %s80
      %p84 = scmp.eq.s32.totalorder %s23, 0
      %p85 = por %p83, %p84
      %p86 = scmp.ne.s32.totalorder %s78, %s80
      %p87 = scmp.eq.s32.totalorder %s28, 1
      %p88 = por %p86, %p87
      %p89 = scmp.ne.s32.totalorder %s80, %s81
      %p90 = scmp.eq.s32.totalorder %s28, 0
      %p91 = por %p89, %p90
      %p92 = scmp.ne.s32.totalorder %s80, %s81
      %p93 = scmp.eq.s32.totalorder %s29, 1
      %p94 = por %p92, %p93
      %p96 = scmp.ne.s32.totalorder %s81, %s95
      %p97 = scmp.eq.s32.totalorder %s29, 0
      %p98 = por %p96, %p97
      %s100 = sadd.s32 %s99, 1
      %p103 = scmp.eq.s32.totalorder %s23, 1
      %p104 = scmp.ne.s32.totalorder %s99, %s101
      %p105 = scmp.eq.s32.totalorder %s23, 0
      %p106 = por %p104, %p105
      %p107 = scmp.ne.s32.totalorder %s99, %s101
      %p108 = scmp.eq.s32.totalorder %s28, 1
      %p109 = por %p107, %p108
      %p110 = scmp.ne.s32.totalorder %s101, %s102
      %p111 = scmp.eq.s32.totalorder %s28, 0
      %p112 = por %p110, %p111
      %p113 = scmp.ne.s32.totalorder %s101, %s102
      %p114 = scmp.eq.s32.totalorder %s29, 1
      %p115 = por %p113, %p114
      %p117 = scmp.ne.s32.totalorder %s102, %s116
      %p118 = scmp.eq.s32.totalorder %s29, 0
      %p119 = por %p117, %p118
      %s121 = sadd.s32 %s120, 1
      %p124 = scmp.eq.s32.totalorder %s23, 1
      %p125 = scmp.ne.s32.totalorder %s120, %s122
      %p126 = scmp.eq.s32.totalorder %s23, 0
      %p127 = por %p125, %p126
      %p128 = scmp.ne.s32.totalorder %s120, %s122
      %p129 = scmp.eq.s32.totalorder %s28, 1
      %p130 = por %p128, %p129
      %p131 = scmp.ne.s32.totalorder %s122, %s123
      %p132 = scmp.eq.s32.totalorder %s28, 0
      %p133 = por %p131, %p132
      %p134 = scmp.ne.s32.totalorder %s122, %s123
      %p135 = scmp.eq.s32.totalorder %s29, 1
      %p136 = por %p134, %p135
      %p138 = scmp.ne.s32.totalorder %s123, %s137
      %p139 = scmp.eq.s32.totalorder %s29, 0
      %p140 = por %p138, %p139
      %s142 = sadd.s32 %s141, 1
      %p145 = scmp.eq.s32.totalorder %s23, 1
      %p146 = scmp.ne.s32.totalorder %s141, %s143
      %p147 = scmp.eq.s32.totalorder %s23, 0
      %p148 = por %p146, %p147
      %p149 = scmp.ne.s32.totalorder %s141, %s143
      %p150 = scmp.eq.s32.totalorder %s28, 1
      %p151 = por %p149, %p150
      %p152 = scmp.ne.s32.totalorder %s143, %s144
      %p153 = scmp.eq.s32.totalorder %s28, 0
      %p154 = por %p152, %p153
      %p155 = scmp.ne.s32.totalorder %s143, %s144
      %p156 = scmp.eq.s32.totalorder %s29, 1
      %p157 = por %p155, %p156
      %p159 = scmp.ne.s32.totalorder %s144, %s158
      %p160 = scmp.eq.s32.totalorder %s29, 0
      %p161 = por %p159, %p160
      %s163 = sadd.s32 %s162, 1
      %p166 = scmp.eq.s32.totalorder %s23, 1
      %p167 = scmp.ne.s32.totalorder %s162, %s164
      %p168 = scmp.eq.s32.totalorder %s23, 0
      %p169 = por %p167, %p168
      %p170 = scmp.ne.s32.totalorder %s162, %s164
      %p171 = scmp.eq.s32.totalorder %s28, 1
      %p172 = por %p170, %p171
      %p173 = scmp.ne.s32.totalorder %s164, %s165
      %p174 = scmp.eq.s32.totalorder %s28, 0
      %p175 = por %p173, %p174
      %p176 = scmp.ne.s32.totalorder %s164, %s165
      %p177 = scmp.eq.s32.totalorder %s29, 1
      %p178 = por %p176, %p177
      %p180 = scmp.ne.s32.totalorder %s165, %s179
      %p181 = scmp.eq.s32.totalorder %s29, 0
      %p182 = por %p180, %p181
      %s184 = sadd.s32 %s183, 1
      %p187 = scmp.eq.s32.totalorder %s23, 1
      %p188 = scmp.ne.s32.totalorder %s183, %s185
      %p189 = scmp.eq.s32.totalorder %s23, 0
      %p190 = por %p188, %p189
      %p191 = scmp.ne.s32.totalorder %s183, %s185
      %p192 = scmp.eq.s32.totalorder %s28, 1
      %p193 = por %p191, %p192
      %p194 = scmp.ne.s32.totalorder %s185, %s186
      %p195 = scmp.eq.s32.totalorder %s28, 0
      %p196 = por %p194, %p195
      %p197 = scmp.ne.s32.totalorder %s185, %s186
      %p198 = scmp.eq.s32.totalorder %s29, 1
      %p199 = por %p197, %p198
      %p201 = scmp.ne.s32.totalorder %s186, %s200
      %p202 = scmp.eq.s32.totalorder %s29, 0
      %p203 = por %p201, %p202
      %s205 = sadd.s32 %s204, 1
      %p208 = scmp.eq.s32.totalorder %s23, 1
      %p209 = scmp.ne.s32.totalorder %s204, %s206
      %p210 = scmp.eq.s32.totalorder %s23, 0
      %p211 = por %p209, %p210
      %p212 = scmp.ne.s32.totalorder %s204, %s206
      %p213 = scmp.eq.s32.totalorder %s28, 1
      %p214 = por %p212, %p213
      %p215 = scmp.ne.s32.totalorder %s206, %s207
      %p216 = scmp.eq.s32.totalorder %s28, 0
      %p217 = por %p215, %p216
      %p218 = scmp.ne.s32.totalorder %s206, %s207
      %p219 = scmp.eq.s32.totalorder %s29, 1
      %p220 = por %p218, %p219
      %p222 = scmp.ne.s32.totalorder %s207, %s221
      %p223 = scmp.eq.s32.totalorder %s29, 0
      %p224 = por %p222, %p223
      %s226 = sadd.s32 %s225, 1
      %p229 = scmp.eq.s32.totalorder %s23, 1
      %p230 = scmp.ne.s32.totalorder %s225, %s227
      %p231 = scmp.eq.s32.totalorder %s23, 0
      %p232 = por %p230, %p231
      %p233 = scmp.ne.s32.totalorder %s225, %s227
      %p234 = scmp.eq.s32.totalorder %s28, 1
      %p235 = por %p233, %p234
      %p236 = scmp.ne.s32.totalorder %s227, %s228
      %p237 = scmp.eq.s32.totalorder %s28, 0
      %p238 = por %p236, %p237
      %p239 = scmp.ne.s32.totalorder %s227, %s228
      %p240 = scmp.eq.s32.totalorder %s29, 1
      %p241 = por %p239, %p240
      %p243 = scmp.ne.s32.totalorder %s228, %s242
      %p244 = scmp.eq.s32.totalorder %s29, 0
      %p245 = por %p243, %p244
      %s247 = sadd.s32 %s246, 1
      %p250 = scmp.eq.s32.totalorder %s23, 1
      %p251 = scmp.ne.s32.totalorder %s246, %s248
      %p252 = scmp.eq.s32.totalorder %s23, 0
      %p253 = por %p251, %p252
      %p254 = scmp.ne.s32.totalorder %s246, %s248
      %p255 = scmp.eq.s32.totalorder %s28, 1
      %p256 = por %p254, %p255
      %p257 = scmp.ne.s32.totalorder %s248, %s249
      %p258 = scmp.eq.s32.totalorder %s28, 0
      %p259 = por %p257, %p258
      %p260 = scmp.ne.s32.totalorder %s248, %s249
      %p261 = scmp.eq.s32.totalorder %s29, 1
      %p262 = por %p260, %p261
      %p264 = scmp.ne.s32.totalorder %s249, %s263
      %p265 = scmp.eq.s32.totalorder %s29, 0
      %p266 = por %p264, %p265
      %s268 = sadd.s32 %s267, 1
      %p271 = scmp.eq.s32.totalorder %s23, 1
      %p272 = scmp.ne.s32.totalorder %s267, %s269
      %p273 = scmp.eq.s32.totalorder %s23, 0
      %p274 = por %p272, %p273
      %p275 = scmp.ne.s32.totalorder %s267, %s269
      %p276 = scmp.eq.s32.totalorder %s28, 1
      %p277 = por %p275, %p276
      %p278 = scmp.ne.s32.totalorder %s269, %s270
      %p279 = scmp.eq.s32.totalorder %s28, 0
      %p280 = por %p278, %p279
      %p281 = scmp.ne.s32.totalorder %s269, %s270
      %p282 = scmp.eq.s32.totalorder %s29, 1
      %p283 = por %p281, %p282
      %p285 = scmp.ne.s32.totalorder %s270, %s284
      %p286 = scmp.eq.s32.totalorder %s29, 0
      %p287 = por %p285, %p286
      %s289 = sadd.s32 %s288, 1
      %p292 = scmp.eq.s32.totalorder %s23, 1
      %p293 = scmp.ne.s32.totalorder %s288, %s290
      %p294 = scmp.eq.s32.totalorder %s23, 0
      %p295 = por %p293, %p294
      %p296 = scmp.ne.s32.totalorder %s288, %s290
      %p297 = scmp.eq.s32.totalorder %s28, 1
      %p298 = por %p296, %p297
      %p299 = scmp.ne.s32.totalorder %s290, %s291
      %p300 = scmp.eq.s32.totalorder %s28, 0
      %p301 = por %p299, %p300
      %p302 = scmp.ne.s32.totalorder %s290, %s291
      %p303 = scmp.eq.s32.totalorder %s29, 1
      %p304 = por %p302, %p303
      %p306 = scmp.ne.s32.totalorder %s291, %s305
      %p307 = scmp.eq.s32.totalorder %s29, 0
      %p308 = por %p306, %p307
      %s310 = sadd.s32 %s309, 1
      %p313 = scmp.eq.s32.totalorder %s23, 1
      %p314 = scmp.ne.s32.totalorder %s309, %s311
      %p315 = scmp.eq.s32.totalorder %s23, 0
      %p316 = por %p314, %p315
      %p317 = scmp.ne.s32.totalorder %s309, %s311
      %p318 = scmp.eq.s32.totalorder %s28, 1
      %p319 = por %p317, %p318
      %p320 = scmp.ne.s32.totalorder %s311, %s312
      %p321 = scmp.eq.s32.totalorder %s28, 0
      %p322 = por %p320, %p321
      %p323 = scmp.ne.s32.totalorder %s311, %s312
      %p324 = scmp.eq.s32.totalorder %s29, 1
      %p325 = por %p323, %p324
      %p327 = scmp.ne.s32.totalorder %s312, %s326
      %p328 = scmp.eq.s32.totalorder %s29, 0
      %p329 = por %p327, %p328
      %s331 = sadd.s32 %s330, 1
      %p334 = scmp.eq.s32.totalorder %s23, 1
      %p335 = scmp.ne.s32.totalorder %s330, %s332
      %p336 = scmp.eq.s32.totalorder %s23, 0
      %p337 = por %p335, %p336
      %p338 = scmp.ne.s32.totalorder %s330, %s332
      %p339 = scmp.eq.s32.totalorder %s28, 1
      %p340 = por %p338, %p339
      %p341 = scmp.ne.s32.totalorder %s332, %s333
      %p342 = scmp.eq.s32.totalorder %s28, 0
      %p343 = por %p341, %p342
      %p344 = scmp.ne.s32.totalorder %s332, %s333
      %p345 = scmp.eq.s32.totalorder %s29, 1
      %p346 = por %p344, %p345
      %p348 = scmp.ne.s32.totalorder %s333, %s347
      %p349 = scmp.eq.s32.totalorder %s29, 0
      %p350 = por %p348, %p349
      %s351 = ssub.s32 %s23, %s30
      %p352 = scmp.eq.s32.totalorder %s351, 0
      %s354 = sadd.s32 %s353, 1
      %s355 = scalar_select %p352, %s353, %s354
      %p358 = pneg %p352
      %p359 = scmp.eq.s32.totalorder %s23, 1
      %p360 = por %p358, %p359
      %p361 = scmp.ne.s32.totalorder %s353, %s356
      %p362 = scmp.eq.s32.totalorder %s23, 0
      %p363 = por %p361, %p362
      %p364 = scmp.ne.s32.totalorder %s353, %s356
      %p365 = scmp.eq.s32.totalorder %s28, 1
      %p366 = por %p364, %p365
      %p367 = scmp.ne.s32.totalorder %s356, %s357
      %p368 = scmp.eq.s32.totalorder %s28, 0
      %p369 = por %p367, %p368
      %p370 = scmp.ne.s32.totalorder %s356, %s357
      %p371 = scmp.eq.s32.totalorder %s29, 1
      %p372 = por %p370, %p371
      %p374 = scmp.ne.s32.totalorder %s357, %s373
      %p375 = scmp.eq.s32.totalorder %s29, 0
      %p376 = por %p374, %p375
      %p377 = scmp.le.s32.totalorder 1, %s23
      %p378 = scmp.lt.s32.totalorder %s23, 3
      %p379 = pnand %p377, %p378
      %p380 = pneg %p379
      // Predicated region
      $region9: #{_lambda_.3} parent=5 // pred_check
        _
      $region10: #{_lambda_.3} parent=5 // pred_check_branch
        %382 = sbr.rel (%p379) target = $region12
      $region11: #{_lambda_.3} parent=5 // pred_region
        %s383 = ssub.s32 %s23, 1
        // Predicated region
        $region13: #{_lambda_.3} parent=11 // pred_check
          %p384 = pneg %p70
        $region14: #{_lambda_.3} parent=11 // pred_check_branch
          %386 = sbr.rel (%p384) target = $region16
        $region15: #{_lambda_.3} parent=11 // pred_region
          _
        $region16: #{_lambda_.3} parent=11 // pred_fallthru
          _
        // Predicated region
        $region17: #{_lambda_.3} parent=11 // pred_check
          %p387 = pneg %p91
        $region18: #{_lambda_.3} parent=11 // pred_check_branch
          %389 = sbr.rel (%p387) target = $region20
        $region19: #{_lambda_.3} parent=11 // pred_region
          _
        $region20: #{_lambda_.3} parent=11 // pred_fallthru
          _
        // Predicated region
        $region21: #{_lambda_.3} parent=11 // pred_check
          %p390 = pneg %p112
        $region22: #{_lambda_.3} parent=11 // pred_check_branch
          %392 = sbr.rel (%p390) target = $region24
        $region23: #{_lambda_.3} parent=11 // pred_region
          _
        $region24: #{_lambda_.3} parent=11 // pred_fallthru
          _
        // Predicated region
        $region25: #{_lambda_.3} parent=11 // pred_check
          %p393 = pneg %p133
        $region26: #{_lambda_.3} parent=11 // pred_check_branch
          %395 = sbr.rel (%p393) target = $region28
        $region27: #{_lambda_.3} parent=11 // pred_region
          _
        $region28: #{_lambda_.3} parent=11 // pred_fallthru
          _
        // Predicated region
        $region29: #{_lambda_.3} parent=11 // pred_check
          %p396 = pneg %p154
        $region30: #{_lambda_.3} parent=11 // pred_check_branch
          %398 = sbr.rel (%p396) target = $region32
        $region31: #{_lambda_.3} parent=11 // pred_region
          %s400 = ssub.s32 1024, 1024
          %401 = vsyncadd [#allocation3], %s400
          %s402 = sshll.u32 [#allocation2], 4
          %s403 = int_to_ptr.vmem [resolvable:$true] %s402
          %408 = dma.hbm_to_vmem [thread:$0]  %s5, 1024, %s403, [#allocation3], 64, 64, 4
        $region32: #{_lambda_.3} parent=11 // pred_fallthru
          _
        // Predicated region
        $region33: #{_lambda_.3} parent=11 // pred_check
          %p409 = pneg %p175
        $region34: #{_lambda_.3} parent=11 // pred_check_branch
          %411 = sbr.rel (%p409) target = $region36
        $region35: #{_lambda_.3} parent=11 // pred_region
          _
        $region36: #{_lambda_.3} parent=11 // pred_fallthru
          _
        // Predicated region
        $region37: #{_lambda_.3} parent=11 // pred_check
          %p412 = pneg %p196
        $region38: #{_lambda_.3} parent=11 // pred_check_branch
          %414 = sbr.rel (%p412) target = $region40
        $region39: #{_lambda_.3} parent=11 // pred_region
          _
        $region40: #{_lambda_.3} parent=11 // pred_fallthru
          _
        // Predicated region
        $region41: #{_lambda_.3} parent=11 // pred_check
          %p415 = pneg %p217
        $region42: #{_lambda_.3} parent=11 // pred_check_branch
          %417 = sbr.rel (%p415) target = $region44
        $region43: #{_lambda_.3} parent=11 // pred_region
          _
        $region44: #{_lambda_.3} parent=11 // pred_fallthru
          _
        // Predicated region
        $region45: #{_lambda_.3} parent=11 // pred_check
          %p418 = pneg %p238
        $region46: #{_lambda_.3} parent=11 // pred_check_branch
          %420 = sbr.rel (%p418) target = $region48
        $region47: #{_lambda_.3} parent=11 // pred_region
          %s422 = ssub.s32 4096, 4096
          %423 = vsyncadd [#allocation5], %s422
          %s424 = sshll.u32 [#allocation4], 4
          %s425 = int_to_ptr.vmem [resolvable:$true] %s424
          %430 = dma.hbm_to_vmem [thread:$0]  %s9, 4096, %s425, [#allocation5], 256, 256, 16
        $region48: #{_lambda_.3} parent=11 // pred_fallthru
          _
        // Predicated region
        $region49: #{_lambda_.3} parent=11 // pred_check
          %p431 = pneg %p259
        $region50: #{_lambda_.3} parent=11 // pred_check_branch
          %433 = sbr.rel (%p431) target = $region52
        $region51: #{_lambda_.3} parent=11 // pred_region
          _
        $region52: #{_lambda_.3} parent=11 // pred_fallthru
          _
        // Predicated region
        $region53: #{_lambda_.3} parent=11 // pred_check
          %p434 = pneg %p280
        $region54: #{_lambda_.3} parent=11 // pred_check_branch
          %436 = sbr.rel (%p434) target = $region56
        $region55: #{_lambda_.3} parent=11 // pred_region
          %s438 = ssub.s32 4096, 4096
          %439 = vsyncadd [#allocation5], %s438
          %s440 = sshll.u32 [#allocation6], 4
          %s441 = int_to_ptr.vmem [resolvable:$true] %s440
          %446 = dma.hbm_to_vmem [thread:$0]  %s11, 4096, %s441, [#allocation5], 64, 64, 4
        $region56: #{_lambda_.3} parent=11 // pred_fallthru
          _
        // Predicated region
        $region57: #{_lambda_.3} parent=11 // pred_check
          %p447 = pneg %p301
        $region58: #{_lambda_.3} parent=11 // pred_check_branch
          %449 = sbr.rel (%p447) target = $region60
        $region59: #{_lambda_.3} parent=11 // pred_region
          _
        $region60: #{_lambda_.3} parent=11 // pred_fallthru
          _
        // Predicated region
        $region61: #{_lambda_.3} parent=11 // pred_check
          %p450 = pneg %p322
        $region62: #{_lambda_.3} parent=11 // pred_check_branch
          %452 = sbr.rel (%p450) target = $region64
        $region63: #{_lambda_.3} parent=11 // pred_region
          _
        $region64: #{_lambda_.3} parent=11 // pred_fallthru
          _
        // Predicated region
        $region65: #{_lambda_.3} parent=11 // pred_check
          %p453 = pneg %p343
        $region66: #{_lambda_.3} parent=11 // pred_check_branch
          %455 = sbr.rel (%p453) target = $region68
        $region67: #{_lambda_.3} parent=11 // pred_region
          _
        $region68: #{_lambda_.3} parent=11 // pred_fallthru
          _
      $region12: #{_lambda_.3} parent=5 // pred_fallthru
        _
      %p456 = scmp.lt.s32.totalorder %s23, 2
      // Predicated region
      $region69: #{_lambda_.3} parent=5 // pred_check
        %p457 = pneg %p456
      $region70: #{_lambda_.3} parent=5 // pred_check_branch
        %459 = sbr.rel (%p457) target = $region72
      $region71: #{_lambda_.3} parent=5 // pred_region
        // Predicated region
        $region73: #{_lambda_.3} parent=71 // pred_check
          %p460 = pneg %p43
        $region74: #{_lambda_.3} parent=71 // pred_check_branch
          %462 = sbr.rel (%p460) target = $region76
        $region75: #{_lambda_.3} parent=71 // pred_region
          %p463 = scmp.lt.s32.totalorder %s23, 1
          %s464 = scalar_select %p463, %s23, 1
          %s465 = smul.addr %s464, 4
          %s466 = scalar_lea.vmem %s0, %s465
        $region76: #{_lambda_.3} parent=71 // pred_fallthru
          _
      $region72: #{_lambda_.3} parent=5 // pred_fallthru
        _
      %p467 = scmp.le.s32.totalorder 1, %s23
      %p468 = scmp.lt.s32.totalorder %s23, 3
      %p469 = pnand %p467, %p468
      %p470 = pneg %p469
      // Predicated region
      $region77: #{_lambda_.3} parent=5 // pred_check
        _
      $region78: #{_lambda_.3} parent=5 // pred_check_branch
        %472 = sbr.rel (%p469) target = $region80
      $region79: #{_lambda_.3} parent=5 // pred_region
        %s473 = ssub.s32 %s23, 1
        // Predicated region
        $region81: #{_lambda_.3} parent=79 // pred_check
          %p474 = pneg %p154
        $region82: #{_lambda_.3} parent=79 // pred_check_branch
          %476 = sbr.rel (%p474) target = $region84
        $region83: #{_lambda_.3} parent=79 // pred_region
          %477 = dma.done [#allocation3], 1024
        $region84: #{_lambda_.3} parent=79 // pred_fallthru
          _
        // Predicated region
        $region85: #{_lambda_.3} parent=79 // pred_check
          %p478 = pneg %p238
        $region86: #{_lambda_.3} parent=79 // pred_check_branch
          %480 = sbr.rel (%p478) target = $region88
        $region87: #{_lambda_.3} parent=79 // pred_region
          %481 = dma.done [#allocation5], 4096
        $region88: #{_lambda_.3} parent=79 // pred_fallthru
          _
        // Predicated region
        $region89: #{_lambda_.3} parent=79 // pred_check
          %p482 = pneg %p280
        $region90: #{_lambda_.3} parent=79 // pred_check_branch
          %484 = sbr.rel (%p482) target = $region92
        $region91: #{_lambda_.3} parent=79 // pred_region
          %485 = dma.done [#allocation5], 4096
        $region92: #{_lambda_.3} parent=79 // pred_fallthru
          _
        %p486 = scmp.lt.s32.totalorder %s28, 1
        %s487 = scalar_select %p486, %s28, 1
        %s488 = smul.addr %s487, 4
        %s489 = scalar_lea.vmem %s0, %s488
        %p490 = pneg %p49
        %p491 = pneg %p46
        %p492 = pneg %p70
        %p493 = pneg %p67
        %p494 = pneg %p91
        %p495 = pneg %p88
        %p496 = pneg %p112
        %p497 = pneg %p109
        %p498 = pneg %p133
        %p499 = pneg %p130
        %p500 = pneg %p154
        %p501 = pneg %p151
        %p502 = pneg %p175
        %p503 = pneg %p172
        %p504 = pneg %p196
        %p505 = pneg %p193
        %p506 = pneg %p217
        %p507 = pneg %p214
        %p508 = pneg %p238
        %p509 = pneg %p235
        %p510 = pneg %p259
        %p511 = pneg %p256
        %p512 = pneg %p280
        %p513 = pneg %p277
        %p514 = pneg %p301
        %p515 = pneg %p298
        %p516 = pneg %p322
        %p517 = pneg %p319
        %p518 = pneg %p343
        %p519 = pneg %p340
        %p520 = pneg %p369
        %p521 = pneg %p366
        %p522 = scmp.lt.s32.totalorder %s28, 1
        %s523 = scalar_select %p522, %s28, 1
        %s524 = smul.addr %s523, 4
        %s525 = scalar_lea.vmem %s15, %s524
        %p526 = scmp.lt.s32.totalorder %s28, 1
        %s527 = scalar_select %p526, %s28, 1
        %s528 = smul.addr %s527, 4
        %s529 = scalar_lea.vmem %s0, %s528
        %p530 = scmp.lt.s32.totalorder %s28, 1
        %s531 = scalar_select %p530, %s28, 1
        %s532 = smul.addr %s531, 4
        %s533 = scalar_lea.vmem %s15, %s532
        %v535 = vld [vmem:[%s529] sm:$0xf]
        %v536 = vunpack.c.l.bf16 %v535
        %v537 = vld [vmem:[%s1] sm:$0x1]
        %v538 = vld [vmem:[%s2] sm:$0x1]
        %539 = vadd.xlane.f32.xlu0 %v536
        %v540 = vpop.xlane.xlu0 %539
        %v541 = vrcp.pop 128.0
        %v542 = vmul.f32 %v540, %v541
        %v543 = vsub.f32 %v536, %v542
        %v544 = vmul.f32 %v543, %v543
        %545 = vadd.xlane.f32.xlu0 %v544
        %v546 = vpop.xlane.xlu0 %545
        %v547 = vmul.f32 %v546, %v541
        %v548 = vadd.f32 %v547, 1e-05
        %v549 = vrsqrt.pop %v548
        %v550 = vmul.f32 %v543, %v549
        %v552 = vlaneseq
        %v553 = vshrl.u32 %v552, 7
        %v554 = vsub.s32 0, %v553
        %v555 = vrot.slane %v537, %v554
        %v557 = vmul.f32 %v550, %v555
        %v559 = vlaneseq
        %v560 = vshrl.u32 %v559, 7
        %v561 = vsub.s32 0, %v560
        %v562 = vrot.slane %v538, %v561
        %v564 = vadd.f32 %v557, %v562
        %v565 = vpack.c.bf16 %v564, %v564
        %v566 = vld [vmem:[%s3] sm:$0xff]
        %v567 = vld [vmem:[%s3 + $0x8] sm:$0xf]
        %v568 = vld [vmem:[%s3 + $0xc] sm:$0xff]
        %v569 = vld [vmem:[%s3 + $0x14] sm:$0xf]
        %v570 = vld [vmem:[%s3 + $0x18] sm:$0xff]
        %v571 = vld [vmem:[%s3 + $0x20] sm:$0xf]
        %v572 = vld [vmem:[%s3 + $0x24] sm:$0xff]
        %v573 = vld [vmem:[%s3 + $0x2c] sm:$0xf]
        %v574 = vld [vmem:[%s3 + $0x30] sm:$0xff]
        %v575 = vld [vmem:[%s3 + $0x38] sm:$0xf]
        %v576 = vld [vmem:[%s3 + $0x3c] sm:$0xff]
        %v577 = vld [vmem:[%s3 + $0x44] sm:$0xf]
        %v578 = vld [vmem:[%s3 + $0x48] sm:$0xff]
        %v579 = vld [vmem:[%s3 + $0x50] sm:$0xf]
        %v580 = vld [vmem:[%s3 + $0x54] sm:$0xff]
        %v581 = vld [vmem:[%s3 + $0x5c] sm:$0xf]
        %v582 = vld [vmem:[%s3 + $0x60] sm:$0xff]
        %v583 = vld [vmem:[%s3 + $0x68] sm:$0xf]
        %v584 = vld [vmem:[%s3 + $0x6c] sm:$0xff]
        %v585 = vld [vmem:[%s3 + $0x74] sm:$0xf]
        %v586 = vld [vmem:[%s3 + $0x78] sm:$0xff]
        %v587 = vld [vmem:[%s3 + $0x80] sm:$0xf]
        %v588 = vld [vmem:[%s3 + $0x84] sm:$0xff]
        %v589 = vld [vmem:[%s3 + $0x8c] sm:$0xf]
        %v590 = vld [vmem:[%s3 + $0x90] sm:$0xff]
        %v591 = vld [vmem:[%s3 + $0x98] sm:$0xf]
        %v592 = vld [vmem:[%s3 + $0x9c] sm:$0xff]
        %v593 = vld [vmem:[%s3 + $0xa4] sm:$0xf]
        %v594 = vld [vmem:[%s3 + $0xa8] sm:$0xff]
        %v595 = vld [vmem:[%s3 + $0xb0] sm:$0xf]
        %v596 = vld [vmem:[%s3 + $0xb4] sm:$0xff]
        %v597 = vld [vmem:[%s3 + $0xbc] sm:$0xf]
        %v598 = vld [vmem:[%s4] sm:$0x7]
        %v600 = vlaneseq
        %v601 = vshrl.u32 %v600, 7
        %v602 = vsub.s32 0, %v601
        %v603 = vrot.slane %v598, %v602
        %v604 = vlaneseq
        %v605 = vshrl.u32 %v604, 7
        %v606 = vsub.s32 1, %v605
        %v607 = vrot.slane %v598, %v606
        %v608 = vlaneseq
        %v609 = vshrl.u32 %v608, 7
        %v610 = vsub.s32 2, %v609
        %v611 = vrot.slane %v598, %v610
        %v647 = vunpack.c.l.b16 %v566
        %v648 = vunpack.c.h.b16 %v566
        %v649 = vunpack.c.l.b16 %v567
        %v650 = vunpack.c.l.b16 %v568
        %v651 = vunpack.c.h.b16 %v568
        %v652 = vunpack.c.l.b16 %v569
        %v653 = vunpack.c.l.b16 %v570
        %v654 = vunpack.c.h.b16 %v570
        %v655 = vunpack.c.l.b16 %v571
        %v656 = vunpack.c.l.b16 %v572
        %v657 = vunpack.c.h.b16 %v572
        %v658 = vunpack.c.l.b16 %v573
        %v659 = vunpack.c.l.b16 %v574
        %v660 = vunpack.c.h.b16 %v574
        %v661 = vunpack.c.l.b16 %v575
        %v662 = vunpack.c.l.b16 %v576
        %v663 = vunpack.c.h.b16 %v576
        %v664 = vunpack.c.l.b16 %v577
        %v665 = vunpack.c.l.b16 %v578
        %v666 = vunpack.c.h.b16 %v578
        %v667 = vunpack.c.l.b16 %v579
        %v668 = vunpack.c.l.b16 %v580
        %v669 = vunpack.c.h.b16 %v580
        %v670 = vunpack.c.l.b16 %v581
        %v671 = vunpack.c.l.b16 %v582
        %v672 = vunpack.c.h.b16 %v582
        %v673 = vunpack.c.l.b16 %v583
        %v674 = vunpack.c.l.b16 %v584
        %v675 = vunpack.c.h.b16 %v584
        %v676 = vunpack.c.l.b16 %v585
        %v677 = vunpack.c.l.b16 %v586
        %v678 = vunpack.c.h.b16 %v586
        %v679 = vunpack.c.l.b16 %v587
        %v680 = vunpack.c.l.b16 %v588
        %v681 = vunpack.c.h.b16 %v588
        %v682 = vunpack.c.l.b16 %v589
        %v683 = vunpack.c.l.b16 %v590
        %v684 = vunpack.c.h.b16 %v590
        %v685 = vunpack.c.l.b16 %v591
        %v686 = vunpack.c.l.b16 %v592
        %v687 = vunpack.c.h.b16 %v592
        %v688 = vunpack.c.l.b16 %v593
        %v689 = vunpack.c.l.b16 %v594
        %v690 = vunpack.c.h.b16 %v594
        %v691 = vunpack.c.l.b16 %v595
        %v692 = vunpack.c.l.b16 %v596
        %v693 = vunpack.c.h.b16 %v596
        %v694 = vunpack.c.l.b16 %v597
        %v695 = vpack.c.b16 %v650, %v647
        %v696 = vpack.c.b16 %v651, %v648
        %v697 = vpack.c.b16 %v652, %v649
        %v698 = vpack.c.b16 %v656, %v653
        %v699 = vpack.c.b16 %v657, %v654
        %v700 = vpack.c.b16 %v658, %v655
        %v701 = vpack.c.b16 %v662, %v659
        %v702 = vpack.c.b16 %v663, %v660
        %v703 = vpack.c.b16 %v664, %v661
        %v704 = vpack.c.b16 %v668, %v665
        %v705 = vpack.c.b16 %v669, %v666
        %v706 = vpack.c.b16 %v670, %v667
        %v707 = vpack.c.b16 %v674, %v671
        %v708 = vpack.c.b16 %v675, %v672
        %v709 = vpack.c.b16 %v676, %v673
        %v710 = vpack.c.b16 %v680, %v677
        %v711 = vpack.c.b16 %v681, %v678
        %v712 = vpack.c.b16 %v682, %v679
        %v713 = vpack.c.b16 %v686, %v683
        %v714 = vpack.c.b16 %v687, %v684
        %v715 = vpack.c.b16 %v688, %v685
        %v716 = vpack.c.b16 %v692, %v689
        %v717 = vpack.c.b16 %v693, %v690
        %v718 = vpack.c.b16 %v694, %v691
        %743 = vmatprep.subr.bf16.mxu0 %v717
        %744 = vmatpush1.bf16.msra.mxu0 %v716
        %745 = vmatprep.subr.bf16.mxu0 %v714
        %746 = vmatpush1.bf16.msra.mxu0 %v713
        %747 = vmatprep.subr.bf16.mxu0 %v711
        %748 = vmatpush1.bf16.msra.mxu0 %v710
        %749 = vmatprep.subr.bf16.mxu0 %v708
        %750 = vmatpush1.bf16.msra.mxu0 %v707
        %751 = vmatprep.subr.bf16.mxu0 %v705
        %752 = vmatpush1.bf16.msra.mxu0 %v704
        %753 = vmatprep.subr.bf16.mxu0 %v702
        %754 = vmatpush1.bf16.msra.mxu0 %v701
        %755 = vmatprep.subr.bf16.mxu0 %v699
        %756 = vmatpush1.bf16.msra.mxu0 %v698
        %757 = vmatprep.subr.bf16.mxu0 %v696
        %758 = vmatpush1.bf16.msra.mxu0 %v695
        %759 = vmatprep.subr.bf16.mxu0 0
        %760 = vmatpush2.bf16.msra.mxu0 0
        %761 = vmatprep.subr.bf16.mxu0 0
        %762 = vmatpush2.bf16.msra.mxu0 0
        %763 = vmatprep.subr.bf16.mxu0 0
        %764 = vmatpush2.bf16.msra.mxu0 0
        %765 = vmatprep.subr.bf16.mxu0 0
        %766 = vmatpush2.bf16.msra.mxu0 0
        %767 = vmatprep.subr.bf16.mxu0 0
        %768 = vmatpush2.bf16.msra.mxu0 0
        %769 = vmatprep.subr.bf16.mxu0 0
        %770 = vmatpush2.bf16.msra.mxu0 0
        %771 = vmatprep.subr.bf16.mxu0 0
        %772 = vmatpush2.bf16.msra.mxu0 0
        %773 = vmatprep.subr.bf16.mxu0 0
        %774 = vmatpush2.bf16.msra.mxu0 0
        %775 = vmatprep.mubr.bf16.mxu0 0
        %776 = vmatmul.mubr.bf16.gmra.mxu0 %v565
        %v777 = vpop.f32.mrf.mxu0
        %v778 = vadd.f32 %v603, %v777
        %v779 = vpop.f32.mrf.mxu0
        %v780 = vadd.f32 %v607, %v779
        %v781 = vpop.f32.mrf.mxu0
        %v782 = vpop.f32.mrf.mxu0
        %783 = vdwg.mxu0
        %784 = vmatprep.subr.bf16.mxu0 0
        %785 = vmatpush1.bf16.msra.mxu0 %v718
        %786 = vmatprep.subr.bf16.mxu0 0
        %787 = vmatpush1.bf16.msra.mxu0 %v715
        %788 = vmatprep.subr.bf16.mxu0 0
        %789 = vmatpush1.bf16.msra.mxu0 %v712
        %790 = vmatprep.subr.bf16.mxu0 0
        %791 = vmatpush1.bf16.msra.mxu0 %v709
        %792 = vmatprep.subr.bf16.mxu0 0
        %793 = vmatpush1.bf16.msra.mxu0 %v706
        %794 = vmatprep.subr.bf16.mxu0 0
        %795 = vmatpush1.bf16.msra.mxu0 %v703
        %796 = vmatprep.subr.bf16.mxu0 0
        %797 = vmatpush1.bf16.msra.mxu0 %v700
        %798 = vmatprep.subr.bf16.mxu0 0
        %799 = vmatpush1.bf16.msra.mxu0 %v697
        %800 = vmatprep.subr.bf16.mxu0 0
        %801 = vmatpush2.bf16.msra.mxu0 0
        %802 = vmatprep.subr.bf16.mxu0 0
        %803 = vmatpush2.bf16.msra.mxu0 0
        %804 = vmatprep.subr.bf16.mxu0 0
        %805 = vmatpush2.bf16.msra.mxu0 0
        %806 = vmatprep.subr.bf16.mxu0 0
        %807 = vmatpush2.bf16.msra.mxu0 0
        %808 = vmatprep.subr.bf16.mxu0 0
        %809 = vmatpush2.bf16.msra.mxu0 0
        %810 = vmatprep.subr.bf16.mxu0 0
        %811 = vmatpush2.bf16.msra.mxu0 0
        %812 = vmatprep.subr.bf16.mxu0 0
        %813 = vmatpush2.bf16.msra.mxu0 0
        %814 = vmatprep.subr.bf16.mxu0 0
        %815 = vmatpush2.bf16.msra.mxu0 0
        %816 = vmatprep.mubr.bf16.mxu0 0
        %817 = vmatmul.mubr.bf16.gmra.mxu0 %v565
        %v818 = vpop.f32.mrf.mxu0
        %v819 = vadd.f32 %v611, %v818
        %v820 = vpop.f32.mrf.mxu0
        %v821 = vpop.f32.mrf.mxu0
        %v822 = vpop.f32.mrf.mxu0
        %823 = vdwg.mxu0
        %825 = vrot.lane.b32.xlu0 %v778, 64
        %v826 = vpop.permute.xlu0 %825
        %v828 = vpack.c.bf16 %v778, %v778
        %v829 = vpack.c.bf16 %v826, %v826
        %831 = vrot.lane.b32.xlu0 %v780, 64
        %v832 = vpop.permute.xlu0 %831
        %v834 = vpack.c.bf16 %v780, %v780
        %v835 = vpack.c.bf16 %v832, %v832
        %837 = vrot.lane.b32.xlu0 %v819, 64
        %v838 = vpop.permute.xlu0 %837
        %v840 = vpack.c.bf16 %v819, %v819
        %v841 = vpack.c.bf16 %v838, %v838
        %v842 = vlaneseq
        %v843 = vshrl.u32 %v842, 7
        %v844 = vlaneseq
        %v845 = vand.u32 %v844, 127
        %vm846 = vcmp.le.s32.totalorder %v845, %v843
        %vm847 = vcmask 523264
        %v849 = vsel %vm847, %v828, 0
        %v852 = vsel %vm847, %v834, 0
        %854 = vmatprep.subr.bf16.mxu0 0
        %855 = vmatpush1.bf16.xpose.msra.mxu0 0
        %856 = vmatprep.subr.bf16.mxu0 0
        %857 = vmatpush1.bf16.xpose.msra.mxu0 0
        %858 = vmatprep.subr.bf16.mxu0 0
        %859 = vmatpush1.bf16.xpose.msra.mxu0 0
        %860 = vmatprep.subr.bf16.mxu0 0
        %861 = vmatpush1.bf16.xpose.msra.mxu0 0
        %862 = vmatprep.subr.bf16.mxu0 0
        %863 = vmatpush1.bf16.xpose.msra.mxu0 0
        %864 = vmatprep.subr.bf16.mxu0 0
        %865 = vmatpush1.bf16.xpose.msra.mxu0 0
        %866 = vmatprep.subr.bf16.mxu0 0
        %867 = vmatpush1.bf16.xpose.msra.mxu0 0
        %868 = vmatprep.subr.bf16.mxu0 0
        %869 = vmatpush1.bf16.xpose.msra.mxu0 %v852
        %870 = vmatprep.subr.bf16.mxu0 0
        %871 = vmatpush2.bf16.xpose.msra.mxu0 0
        %872 = vmatprep.subr.bf16.mxu0 0
        %873 = vmatpush2.bf16.xpose.msra.mxu0 0
        %874 = vmatprep.subr.bf16.mxu0 0
        %875 = vmatpush2.bf16.xpose.msra.mxu0 0
        %876 = vmatprep.subr.bf16.mxu0 0
        %877 = vmatpush2.bf16.xpose.msra.mxu0 0
        %878 = vmatprep.subr.bf16.mxu0 0
        %879 = vmatpush2.bf16.xpose.msra.mxu0 0
        %880 = vmatprep.subr.bf16.mxu0 0
        %881 = vmatpush2.bf16.xpose.msra.mxu0 0
        %882 = vmatprep.subr.bf16.mxu0 0
        %883 = vmatpush2.bf16.xpose.msra.mxu0 0
        %884 = vmatprep.subr.bf16.mxu0 0
        %885 = vmatpush2.bf16.xpose.msra.mxu0 0
        %886 = vmatprep.mubr.bf16.mxu0 0
        %887 = vmatmul.mubr.bf16.gmra.mxu0 %v849
        %v888 = vpop.f32.mrf.mxu0
        %v889 = vadd.f32 0.0, %v888
        %v890 = vpop.f32.mrf.mxu0
        %v891 = vpop.f32.mrf.mxu0
        %v892 = vpop.f32.mrf.mxu0
        %893 = vdwg.mxu0
        %v895 = vsel %vm847, %v829, 0
        %v898 = vsel %vm847, %v835, 0
        %900 = vmatprep.subr.bf16.mxu0 0
        %901 = vmatpush1.bf16.xpose.msra.mxu0 0
        %902 = vmatprep.subr.bf16.mxu0 0
        %903 = vmatpush1.bf16.xpose.msra.mxu0 0
        %904 = vmatprep.subr.bf16.mxu0 0
        %905 = vmatpush1.bf16.xpose.msra.mxu0 0
        %906 = vmatprep.subr.bf16.mxu0 0
        %907 = vmatpush1.bf16.xpose.msra.mxu0 0
        %908 = vmatprep.subr.bf16.mxu0 0
        %909 = vmatpush1.bf16.xpose.msra.mxu0 0
        %910 = vmatprep.subr.bf16.mxu0 0
        %911 = vmatpush1.bf16.xpose.msra.mxu0 0
        %912 = vmatprep.subr.bf16.mxu0 0
        %913 = vmatpush1.bf16.xpose.msra.mxu0 0
        %914 = vmatprep.subr.bf16.mxu0 0
        %915 = vmatpush1.bf16.xpose.msra.mxu0 %v898
        %916 = vmatprep.subr.bf16.mxu0 0
        %917 = vmatpush2.bf16.xpose.msra.mxu0 0
        %918 = vmatprep.subr.bf16.mxu0 0
        %919 = vmatpush2.bf16.xpose.msra.mxu0 0
        %920 = vmatprep.subr.bf16.mxu0 0
        %921 = vmatpush2.bf16.xpose.msra.mxu0 0
        %922 = vmatprep.subr.bf16.mxu0 0
        %923 = vmatpush2.bf16.xpose.msra.mxu0 0
        %924 = vmatprep.subr.bf16.mxu0 0
        %925 = vmatpush2.bf16.xpose.msra.mxu0 0
        %926 = vmatprep.subr.bf16.mxu0 0
        %927 = vmatpush2.bf16.xpose.msra.mxu0 0
        %928 = vmatprep.subr.bf16.mxu0 0
        %929 = vmatpush2.bf16.xpose.msra.mxu0 0
        %930 = vmatprep.subr.bf16.mxu0 0
        %931 = vmatpush2.bf16.xpose.msra.mxu0 0
        %932 = vmatprep.mubr.bf16.mxu0 0
        %933 = vmatmul.mubr.bf16.gmra.mxu0 %v895
        %v934 = vpop.f32.mrf.mxu0
        %v935 = vadd.f32 0.0, %v934
        %v936 = vpop.f32.mrf.mxu0
        %v937 = vpop.f32.mrf.mxu0
        %v938 = vpop.f32.mrf.mxu0
        %939 = vdwg.mxu0
        %v940 = vmul.f32 %v889, 0.125
        %v941 = vmul.f32 %v935, 0.125
        %v942 = vsel %vm846, 1, 0
        %vm943 = vcmp.eq.s32.totalorder %v942, 1
        %v944 = vsel %vm943, %v940, -1e+09
        %v945 = vsel %vm943, %v941, -1e+09
        %vm946 = vcmask 64512
        %v947 = vsel %vm946, %v944, -inf
        %948 = vmax.xlane.f32.xlu0 %v947
        %v949 = vpop.xlane.xlu0 %948
        %v950 = vsel %vm946, %v945, -inf
        %951 = vmax.xlane.f32.xlu0 %v950
        %v952 = vpop.xlane.xlu0 %951
        %v953 = vsub.f32 %v944, %v949
        %v954 = vsub.f32 %v945, %v952
        %v955 = vmul.f32 %v953, 1.442695
        %v956 = vpow.pop %v955
        %v957 = vmul.f32 %v954, 1.442695
        %v958 = vpow.pop %v957
        %v959 = vsel %vm946, %v956, 0.0
        %960 = vadd.xlane.f32.xlu0 %v959
        %v961 = vpop.xlane.xlu0 %960
        %v962 = vsel %vm946, %v958, 0.0
        %963 = vadd.xlane.f32.xlu0 %v962
        %v964 = vpop.xlane.xlu0 %963
        %v965 = vrcp.pop %v961
        %v966 = vrcp.pop %v964
        %v967 = vmul.f32 %v956, %v965
        %v968 = vmul.f32 %v958, %v966
        %v969 = vpack.c.bf16 %v967, %v967
        %v970 = vpack.c.bf16 %v968, %v968
        %v972 = vsel %vm946, %v969, 0
        %vm974 = vcmask 1043456
        %v976 = vsel %vm974, %v840, 0
        %978 = vmatprep.subr.bf16.mxu0 0
        %979 = vmatpush1.bf16.msra.mxu0 0
        %980 = vmatprep.subr.bf16.mxu0 0
        %981 = vmatpush1.bf16.msra.mxu0 0
        %982 = vmatprep.subr.bf16.mxu0 0
        %983 = vmatpush1.bf16.msra.mxu0 0
        %984 = vmatprep.subr.bf16.mxu0 0
        %985 = vmatpush1.bf16.msra.mxu0 0
        %986 = vmatprep.subr.bf16.mxu0 0
        %987 = vmatpush1.bf16.msra.mxu0 0
        %988 = vmatprep.subr.bf16.mxu0 0
        %989 = vmatpush1.bf16.msra.mxu0 0
        %990 = vmatprep.subr.bf16.mxu0 0
        %991 = vmatpush1.bf16.msra.mxu0 0
        %992 = vmatprep.subr.bf16.mxu0 0
        %993 = vmatpush1.bf16.msra.mxu0 %v976
        %994 = vmatprep.subr.bf16.mxu0 0
        %995 = vmatpush2.bf16.msra.mxu0 0
        %996 = vmatprep.subr.bf16.mxu0 0
        %997 = vmatpush2.bf16.msra.mxu0 0
        %998 = vmatprep.subr.bf16.mxu0 0
        %999 = vmatpush2.bf16.msra.mxu0 0
        %1000 = vmatprep.subr.bf16.mxu0 0
        %1001 = vmatpush2.bf16.msra.mxu0 0
        %1002 = vmatprep.subr.bf16.mxu0 0
        %1003 = vmatpush2.bf16.msra.mxu0 0
        %1004 = vmatprep.subr.bf16.mxu0 0
        %1005 = vmatpush2.bf16.msra.mxu0 0
        %1006 = vmatprep.subr.bf16.mxu0 0
        %1007 = vmatpush2.bf16.msra.mxu0 0
        %1008 = vmatprep.subr.bf16.mxu0 0
        %1009 = vmatpush2.bf16.msra.mxu0 0
        %1010 = vmatprep.mubr.bf16.mxu0 0
        %1011 = vmatmul.mubr.bf16.gmra.mxu0 %v972
        %v1012 = vpop.f32.mrf.mxu0
        %v1013 = vadd.f32 0.0, %v1012
        %v1014 = vpop.f32.mrf.mxu0
        %v1015 = vpop.f32.mrf.mxu0
        %v1016 = vpop.f32.mrf.mxu0
        %1017 = vdwg.mxu0
        %v1019 = vsel %vm946, %v970, 0
        %v1022 = vsel %vm974, %v841, 0
        %1024 = vmatprep.subr.bf16.mxu0 0
        %1025 = vmatpush1.bf16.msra.mxu0 0
        %1026 = vmatprep.subr.bf16.mxu0 0
        %1027 = vmatpush1.bf16.msra.mxu0 0
        %1028 = vmatprep.subr.bf16.mxu0 0
        %1029 = vmatpush1.bf16.msra.mxu0 0
        %1030 = vmatprep.subr.bf16.mxu0 0
        %1031 = vmatpush1.bf16.msra.mxu0 0
        %1032 = vmatprep.subr.bf16.mxu0 0
        %1033 = vmatpush1.bf16.msra.mxu0 0
        %1034 = vmatprep.subr.bf16.mxu0 0
        %1035 = vmatpush1.bf16.msra.mxu0 0
        %1036 = vmatprep.subr.bf16.mxu0 0
        %1037 = vmatpush1.bf16.msra.mxu0 0
        %1038 = vmatprep.subr.bf16.mxu0 0
        %1039 = vmatpush1.bf16.msra.mxu0 %v1022
        %1040 = vmatprep.subr.bf16.mxu0 0
        %1041 = vmatpush2.bf16.msra.mxu0 0
        %1042 = vmatprep.subr.bf16.mxu0 0
        %1043 = vmatpush2.bf16.msra.mxu0 0
        %1044 = vmatprep.subr.bf16.mxu0 0
        %1045 = vmatpush2.bf16.msra.mxu0 0
        %1046 = vmatprep.subr.bf16.mxu0 0
        %1047 = vmatpush2.bf16.msra.mxu0 0
        %1048 = vmatprep.subr.bf16.mxu0 0
        %1049 = vmatpush2.bf16.msra.mxu0 0
        %1050 = vmatprep.subr.bf16.mxu0 0
        %1051 = vmatpush2.bf16.msra.mxu0 0
        %1052 = vmatprep.subr.bf16.mxu0 0
        %1053 = vmatpush2.bf16.msra.mxu0 0
        %1054 = vmatprep.subr.bf16.mxu0 0
        %1055 = vmatpush2.bf16.msra.mxu0 0
        %1056 = vmatprep.mubr.bf16.mxu0 0
        %1057 = vmatmul.mubr.bf16.gmra.mxu0 %v1019
        %v1058 = vpop.f32.mrf.mxu0
        %v1059 = vadd.f32 0.0, %v1058
        %v1060 = vpop.f32.mrf.mxu0
        %v1061 = vpop.f32.mrf.mxu0
        %v1062 = vpop.f32.mrf.mxu0
        %1063 = vdwg.mxu0
        %v1064 = vpack.c.bf16 %v1013, %v1013
        %v1065 = vpack.c.bf16 %v1059, %v1059
        %v1066 = vld [vmem:[#allocation2] sm:$0xf]
        %v1067 = vld [vmem:[#allocation2 + $0x4] sm:$0xf]
        %v1068 = vld [vmem:[#allocation2 + $0x8] sm:$0xf]
        %v1069 = vld [vmem:[#allocation2 + $0xc] sm:$0xf]
        %v1070 = vld [vmem:[#allocation2 + $0x10] sm:$0xf]
        %v1071 = vld [vmem:[#allocation2 + $0x14] sm:$0xf]
        %v1072 = vld [vmem:[#allocation2 + $0x18] sm:$0xf]
        %v1073 = vld [vmem:[#allocation2 + $0x1c] sm:$0xf]
        %v1074 = vld [vmem:[#allocation2 + $0x20] sm:$0xf]
        %v1075 = vld [vmem:[#allocation2 + $0x24] sm:$0xf]
        %v1076 = vld [vmem:[#allocation2 + $0x28] sm:$0xf]
        %v1077 = vld [vmem:[#allocation2 + $0x2c] sm:$0xf]
        %v1078 = vld [vmem:[#allocation2 + $0x30] sm:$0xf]
        %v1079 = vld [vmem:[#allocation2 + $0x34] sm:$0xf]
        %v1080 = vld [vmem:[#allocation2 + $0x38] sm:$0xf]
        %v1081 = vld [vmem:[#allocation2 + $0x3c] sm:$0xf]
        %v1090 = vunpack.c.l.b16 %v1066
        %v1091 = vunpack.c.l.b16 %v1067
        %v1092 = vunpack.c.l.b16 %v1068
        %v1093 = vunpack.c.l.b16 %v1069
        %v1094 = vunpack.c.l.b16 %v1070
        %v1095 = vunpack.c.l.b16 %v1071
        %v1096 = vunpack.c.l.b16 %v1072
        %v1097 = vunpack.c.l.b16 %v1073
        %v1098 = vpack.c.b16 %v1091, %v1090
        %v1099 = vpack.c.b16 %v1093, %v1092
        %v1100 = vpack.c.b16 %v1095, %v1094
        %v1101 = vpack.c.b16 %v1097, %v1096
        %v1107 = vsel %vm847, %v1064, 0
        %1109 = vmatprep.subr.bf16.mxu0 0
        %1110 = vmatpush1.bf16.msra.mxu0 0
        %1111 = vmatprep.subr.bf16.mxu0 0
        %1112 = vmatpush1.bf16.msra.mxu0 0
        %1113 = vmatprep.subr.bf16.mxu0 0
        %1114 = vmatpush1.bf16.msra.mxu0 0
        %1115 = vmatprep.subr.bf16.mxu0 0
        %1116 = vmatpush1.bf16.msra.mxu0 0
        %1117 = vmatprep.subr.bf16.mxu0 0
        %1118 = vmatpush1.bf16.msra.mxu0 %v1101
        %1119 = vmatprep.subr.bf16.mxu0 0
        %1120 = vmatpush1.bf16.msra.mxu0 %v1100
        %1121 = vmatprep.subr.bf16.mxu0 0
        %1122 = vmatpush1.bf16.msra.mxu0 %v1099
        %1123 = vmatprep.subr.bf16.mxu0 0
        %1124 = vmatpush1.bf16.msra.mxu0 %v1098
        %1125 = vmatprep.subr.bf16.mxu0 0
        %1126 = vmatpush2.bf16.msra.mxu0 0
        %1127 = vmatprep.subr.bf16.mxu0 0
        %1128 = vmatpush2.bf16.msra.mxu0 0
        %1129 = vmatprep.subr.bf16.mxu0 0
        %1130 = vmatpush2.bf16.msra.mxu0 0
        %1131 = vmatprep.subr.bf16.mxu0 0
        %1132 = vmatpush2.bf16.msra.mxu0 0
        %1133 = vmatprep.subr.bf16.mxu0 0
        %1134 = vmatpush2.bf16.msra.mxu0 0
        %1135 = vmatprep.subr.bf16.mxu0 0
        %1136 = vmatpush2.bf16.msra.mxu0 0
        %1137 = vmatprep.subr.bf16.mxu0 0
        %1138 = vmatpush2.bf16.msra.mxu0 0
        %1139 = vmatprep.subr.bf16.mxu0 0
        %1140 = vmatpush2.bf16.msra.mxu0 0
        %1141 = vmatprep.mubr.bf16.mxu0 0
        %1142 = vmatmul.mubr.bf16.gmra.mxu0 %v1107
        %v1143 = vpop.f32.mrf.mxu0
        %v1144 = vadd.f32 0.0, %v1143
        %v1145 = vpop.f32.mrf.mxu0
        %v1146 = vpop.f32.mrf.mxu0
        %v1147 = vpop.f32.mrf.mxu0
        %1148 = vdwg.mxu0
        %v1157 = vunpack.c.l.b16 %v1074
        %v1158 = vunpack.c.l.b16 %v1075
        %v1159 = vunpack.c.l.b16 %v1076
        %v1160 = vunpack.c.l.b16 %v1077
        %v1161 = vunpack.c.l.b16 %v1078
        %v1162 = vunpack.c.l.b16 %v1079
        %v1163 = vunpack.c.l.b16 %v1080
        %v1164 = vunpack.c.l.b16 %v1081
        %v1165 = vpack.c.b16 %v1158, %v1157
        %v1166 = vpack.c.b16 %v1160, %v1159
        %v1167 = vpack.c.b16 %v1162, %v1161
        %v1168 = vpack.c.b16 %v1164, %v1163
        %v1174 = vsel %vm847, %v1065, 0
        %1176 = vmatprep.subr.bf16.mxu0 0
        %1177 = vmatpush1.bf16.msra.mxu0 0
        %1178 = vmatprep.subr.bf16.mxu0 0
        %1179 = vmatpush1.bf16.msra.mxu0 0
        %1180 = vmatprep.subr.bf16.mxu0 0
        %1181 = vmatpush1.bf16.msra.mxu0 0
        %1182 = vmatprep.subr.bf16.mxu0 0
        %1183 = vmatpush1.bf16.msra.mxu0 0
        %1184 = vmatprep.subr.bf16.mxu0 0
        %1185 = vmatpush1.bf16.msra.mxu0 %v1168
        %1186 = vmatprep.subr.bf16.mxu0 0
        %1187 = vmatpush1.bf16.msra.mxu0 %v1167
        %1188 = vmatprep.subr.bf16.mxu0 0
        %1189 = vmatpush1.bf16.msra.mxu0 %v1166
        %1190 = vmatprep.subr.bf16.mxu0 0
        %1191 = vmatpush1.bf16.msra.mxu0 %v1165
        %1192 = vmatprep.subr.bf16.mxu0 0
        %1193 = vmatpush2.bf16.msra.mxu0 0
        %1194 = vmatprep.subr.bf16.mxu0 0
        %1195 = vmatpush2.bf16.msra.mxu0 0
        %1196 = vmatprep.subr.bf16.mxu0 0
        %1197 = vmatpush2.bf16.msra.mxu0 0
        %1198 = vmatprep.subr.bf16.mxu0 0
        %1199 = vmatpush2.bf16.msra.mxu0 0
        %1200 = vmatprep.subr.bf16.mxu0 0
        %1201 = vmatpush2.bf16.msra.mxu0 0
        %1202 = vmatprep.subr.bf16.mxu0 0
        %1203 = vmatpush2.bf16.msra.mxu0 0
        %1204 = vmatprep.subr.bf16.mxu0 0
        %1205 = vmatpush2.bf16.msra.mxu0 0
        %1206 = vmatprep.subr.bf16.mxu0 0
        %1207 = vmatpush2.bf16.msra.mxu0 0
        %1208 = vmatprep.mubr.bf16.mxu0 0
        %1209 = vmatmul.mubr.bf16.gmra.mxu0 %v1174
        %v1210 = vpop.f32.mrf.mxu0
        %v1211 = vadd.f32 0.0, %v1210
        %v1212 = vpop.f32.mrf.mxu0
        %v1213 = vpop.f32.mrf.mxu0
        %v1214 = vpop.f32.mrf.mxu0
        %1215 = vdwg.mxu0
        %v1216 = vadd.f32 %v1144, %v1211
        %v1217 = vld [vmem:[%s6] sm:$0x1]
        %v1219 = vlaneseq
        %v1220 = vshrl.u32 %v1219, 7
        %v1221 = vsub.s32 0, %v1220
        %v1222 = vrot.slane %v1217, %v1221
        %v1224 = vadd.f32 %v1216, %v1222
        %v1225 = vadd.f32 %v536, %v1224
        %v1226 = vld [vmem:[%s7] sm:$0x1]
        %v1227 = vld [vmem:[%s8] sm:$0x1]
        %1228 = vadd.xlane.f32.xlu0 %v1225
        %v1229 = vpop.xlane.xlu0 %1228
        %v1230 = vmul.f32 %v1229, %v541
        %v1231 = vsub.f32 %v1225, %v1230
        %v1232 = vmul.f32 %v1231, %v1231
        %1233 = vadd.xlane.f32.xlu0 %v1232
        %v1234 = vpop.xlane.xlu0 %1233
        %v1235 = vmul.f32 %v1234, %v541
        %v1236 = vadd.f32 %v1235, 1e-05
        %v1237 = vrsqrt.pop %v1236
        %v1238 = vmul.f32 %v1231, %v1237
        %v1240 = vlaneseq
        %v1241 = vshrl.u32 %v1240, 7
        %v1242 = vsub.s32 0, %v1241
        %v1243 = vrot.slane %v1226, %v1242
        %v1245 = vmul.f32 %v1238, %v1243
        %v1247 = vlaneseq
        %v1248 = vshrl.u32 %v1247, 7
        %v1249 = vsub.s32 0, %v1248
        %v1250 = vrot.slane %v1227, %v1249
        %v1252 = vadd.f32 %v1245, %v1250
        %v1253 = vpack.c.bf16 %v1252, %v1252
        %v1254 = vld [vmem:[#allocation4] sm:$0xff]
        %v1255 = vld [vmem:[#allocation4 + $0x8] sm:$0xff]
        %v1256 = vld [vmem:[#allocation4 + $0x10] sm:$0xff]
        %v1257 = vld [vmem:[#allocation4 + $0x18] sm:$0xff]
        %v1258 = vld [vmem:[#allocation4 + $0x20] sm:$0xff]
        %v1259 = vld [vmem:[#allocation4 + $0x28] sm:$0xff]
        %v1260 = vld [vmem:[#allocation4 + $0x30] sm:$0xff]
        %v1261 = vld [vmem:[#allocation4 + $0x38] sm:$0xff]
        %v1262 = vld [vmem:[#allocation4 + $0x40] sm:$0xff]
        %v1263 = vld [vmem:[#allocation4 + $0x48] sm:$0xff]
        %v1264 = vld [vmem:[#allocation4 + $0x50] sm:$0xff]
        %v1265 = vld [vmem:[#allocation4 + $0x58] sm:$0xff]
        %v1266 = vld [vmem:[#allocation4 + $0x60] sm:$0xff]
        %v1267 = vld [vmem:[#allocation4 + $0x68] sm:$0xff]
        %v1268 = vld [vmem:[#allocation4 + $0x70] sm:$0xff]
        %v1269 = vld [vmem:[#allocation4 + $0x78] sm:$0xff]
        %v1270 = vld [vmem:[#allocation4 + $0x80] sm:$0xff]
        %v1271 = vld [vmem:[#allocation4 + $0x88] sm:$0xff]
        %v1272 = vld [vmem:[#allocation4 + $0x90] sm:$0xff]
        %v1273 = vld [vmem:[#allocation4 + $0x98] sm:$0xff]
        %v1274 = vld [vmem:[#allocation4 + $0xa0] sm:$0xff]
        %v1275 = vld [vmem:[#allocation4 + $0xa8] sm:$0xff]
        %v1276 = vld [vmem:[#allocation4 + $0xb0] sm:$0xff]
        %v1277 = vld [vmem:[#allocation4 + $0xb8] sm:$0xff]
        %v1278 = vld [vmem:[#allocation4 + $0xc0] sm:$0xff]
        %v1279 = vld [vmem:[#allocation4 + $0xc8] sm:$0xff]
        %v1280 = vld [vmem:[#allocation4 + $0xd0] sm:$0xff]
        %v1281 = vld [vmem:[#allocation4 + $0xd8] sm:$0xff]
        %v1282 = vld [vmem:[#allocation4 + $0xe0] sm:$0xff]
        %v1283 = vld [vmem:[#allocation4 + $0xe8] sm:$0xff]
        %v1284 = vld [vmem:[#allocation4 + $0xf0] sm:$0xff]
        %v1285 = vld [vmem:[#allocation4 + $0xf8] sm:$0xff]
        %v1286 = vld [vmem:[%s10] sm:$0xf]
        %v1288 = vlaneseq
        %v1289 = vshrl.u32 %v1288, 7
        %v1290 = vsub.s32 0, %v1289
        %v1291 = vrot.slane %v1286, %v1290
        %v1292 = vlaneseq
        %v1293 = vshrl.u32 %v1292, 7
        %v1294 = vsub.s32 1, %v1293
        %v1295 = vrot.slane %v1286, %v1294
        %v1296 = vlaneseq
        %v1297 = vshrl.u32 %v1296, 7
        %v1298 = vsub.s32 2, %v1297
        %v1299 = vrot.slane %v1286, %v1298
        %v1300 = vlaneseq
        %v1301 = vshrl.u32 %v1300, 7
        %v1302 = vsub.s32 3, %v1301
        %v1303 = vrot.slane %v1286, %v1302
        %v1340 = vunpack.c.l.b16 %v1254
        %v1341 = vunpack.c.h.b16 %v1254
        %v1342 = vunpack.c.l.b16 %v1255
        %v1343 = vunpack.c.h.b16 %v1255
        %v1344 = vunpack.c.l.b16 %v1256
        %v1345 = vunpack.c.h.b16 %v1256
        %v1346 = vunpack.c.l.b16 %v1257
        %v1347 = vunpack.c.h.b16 %v1257
        %v1348 = vunpack.c.l.b16 %v1258
        %v1349 = vunpack.c.h.b16 %v1258
        %v1350 = vunpack.c.l.b16 %v1259
        %v1351 = vunpack.c.h.b16 %v1259
        %v1352 = vunpack.c.l.b16 %v1260
        %v1353 = vunpack.c.h.b16 %v1260
        %v1354 = vunpack.c.l.b16 %v1261
        %v1355 = vunpack.c.h.b16 %v1261
        %v1356 = vunpack.c.l.b16 %v1262
        %v1357 = vunpack.c.h.b16 %v1262
        %v1358 = vunpack.c.l.b16 %v1263
        %v1359 = vunpack.c.h.b16 %v1263
        %v1360 = vunpack.c.l.b16 %v1264
        %v1361 = vunpack.c.h.b16 %v1264
        %v1362 = vunpack.c.l.b16 %v1265
        %v1363 = vunpack.c.h.b16 %v1265
        %v1364 = vunpack.c.l.b16 %v1266
        %v1365 = vunpack.c.h.b16 %v1266
        %v1366 = vunpack.c.l.b16 %v1267
        %v1367 = vunpack.c.h.b16 %v1267
        %v1368 = vunpack.c.l.b16 %v1268
        %v1369 = vunpack.c.h.b16 %v1268
        %v1370 = vunpack.c.l.b16 %v1269
        %v1371 = vunpack.c.h.b16 %v1269
        %v1372 = vunpack.c.l.b16 %v1270
        %v1373 = vunpack.c.h.b16 %v1270
        %v1374 = vunpack.c.l.b16 %v1271
        %v1375 = vunpack.c.h.b16 %v1271
        %v1376 = vunpack.c.l.b16 %v1272
        %v1377 = vunpack.c.h.b16 %v1272
        %v1378 = vunpack.c.l.b16 %v1273
        %v1379 = vunpack.c.h.b16 %v1273
        %v1380 = vunpack.c.l.b16 %v1274
        %v1381 = vunpack.c.h.b16 %v1274
        %v1382 = vunpack.c.l.b16 %v1275
        %v1383 = vunpack.c.h.b16 %v1275
        %v1384 = vunpack.c.l.b16 %v1276
        %v1385 = vunpack.c.h.b16 %v1276
        %v1386 = vunpack.c.l.b16 %v1277
        %v1387 = vunpack.c.h.b16 %v1277
        %v1388 = vunpack.c.l.b16 %v1278
        %v1389 = vunpack.c.h.b16 %v1278
        %v1390 = vunpack.c.l.b16 %v1279
        %v1391 = vunpack.c.h.b16 %v1279
        %v1392 = vunpack.c.l.b16 %v1280
        %v1393 = vunpack.c.h.b16 %v1280
        %v1394 = vunpack.c.l.b16 %v1281
        %v1395 = vunpack.c.h.b16 %v1281
        %v1396 = vunpack.c.l.b16 %v1282
        %v1397 = vunpack.c.h.b16 %v1282
        %v1398 = vunpack.c.l.b16 %v1283
        %v1399 = vunpack.c.h.b16 %v1283
        %v1400 = vunpack.c.l.b16 %v1284
        %v1401 = vunpack.c.h.b16 %v1284
        %v1402 = vunpack.c.l.b16 %v1285
        %v1403 = vunpack.c.h.b16 %v1285
        %v1404 = vpack.c.b16 %v1344, %v1340
        %v1405 = vpack.c.b16 %v1345, %v1341
        %v1406 = vpack.c.b16 %v1346, %v1342
        %v1407 = vpack.c.b16 %v1347, %v1343
        %v1408 = vpack.c.b16 %v1352, %v1348
        %v1409 = vpack.c.b16 %v1353, %v1349
        %v1410 = vpack.c.b16 %v1354, %v1350
        %v1411 = vpack.c.b16 %v1355, %v1351
        %v1412 = vpack.c.b16 %v1360, %v1356
        %v1413 = vpack.c.b16 %v1361, %v1357
        %v1414 = vpack.c.b16 %v1362, %v1358
        %v1415 = vpack.c.b16 %v1363, %v1359
        %v1416 = vpack.c.b16 %v1368, %v1364
        %v1417 = vpack.c.b16 %v1369, %v1365
        %v1418 = vpack.c.b16 %v1370, %v1366
        %v1419 = vpack.c.b16 %v1371, %v1367
        %v1420 = vpack.c.b16 %v1376, %v1372
        %v1421 = vpack.c.b16 %v1377, %v1373
        %v1422 = vpack.c.b16 %v1378, %v1374
        %v1423 = vpack.c.b16 %v1379, %v1375
        %v1424 = vpack.c.b16 %v1384, %v1380
        %v1425 = vpack.c.b16 %v1385, %v1381
        %v1426 = vpack.c.b16 %v1386, %v1382
        %v1427 = vpack.c.b16 %v1387, %v1383
        %v1428 = vpack.c.b16 %v1392, %v1388
        %v1429 = vpack.c.b16 %v1393, %v1389
        %v1430 = vpack.c.b16 %v1394, %v1390
        %v1431 = vpack.c.b16 %v1395, %v1391
        %v1432 = vpack.c.b16 %v1400, %v1396
        %v1433 = vpack.c.b16 %v1401, %v1397
        %v1434 = vpack.c.b16 %v1402, %v1398
        %v1435 = vpack.c.b16 %v1403, %v1399
        %1468 = vmatprep.subr.bf16.mxu0 %v1433
        %1469 = vmatpush1.bf16.msra.mxu0 %v1432
        %1470 = vmatprep.subr.bf16.mxu0 %v1429
        %1471 = vmatpush1.bf16.msra.mxu0 %v1428
        %1472 = vmatprep.subr.bf16.mxu0 %v1425
        %1473 = vmatpush1.bf16.msra.mxu0 %v1424
        %1474 = vmatprep.subr.bf16.mxu0 %v1421
        %1475 = vmatpush1.bf16.msra.mxu0 %v1420
        %1476 = vmatprep.subr.bf16.mxu0 %v1417
        %1477 = vmatpush1.bf16.msra.mxu0 %v1416
        %1478 = vmatprep.subr.bf16.mxu0 %v1413
        %1479 = vmatpush1.bf16.msra.mxu0 %v1412
        %1480 = vmatprep.subr.bf16.mxu0 %v1409
        %1481 = vmatpush1.bf16.msra.mxu0 %v1408
        %1482 = vmatprep.subr.bf16.mxu0 %v1405
        %1483 = vmatpush1.bf16.msra.mxu0 %v1404
        %1484 = vmatprep.subr.bf16.mxu0 0
        %1485 = vmatpush2.bf16.msra.mxu0 0
        %1486 = vmatprep.subr.bf16.mxu0 0
        %1487 = vmatpush2.bf16.msra.mxu0 0
        %1488 = vmatprep.subr.bf16.mxu0 0
        %1489 = vmatpush2.bf16.msra.mxu0 0
        %1490 = vmatprep.subr.bf16.mxu0 0
        %1491 = vmatpush2.bf16.msra.mxu0 0
        %1492 = vmatprep.subr.bf16.mxu0 0
        %1493 = vmatpush2.bf16.msra.mxu0 0
        %1494 = vmatprep.subr.bf16.mxu0 0
        %1495 = vmatpush2.bf16.msra.mxu0 0
        %1496 = vmatprep.subr.bf16.mxu0 0
        %1497 = vmatpush2.bf16.msra.mxu0 0
        %1498 = vmatprep.subr.bf16.mxu0 0
        %1499 = vmatpush2.bf16.msra.mxu0 0
        %1500 = vmatprep.mubr.bf16.mxu0 0
        %1501 = vmatmul.mubr.bf16.gmra.mxu0 %v1253
        %v1502 = vpop.f32.mrf.mxu0
        %v1503 = vadd.f32 %v1291, %v1502
        %v1504 = vpop.f32.mrf.mxu0
        %v1505 = vadd.f32 %v1295, %v1504
        %v1506 = vpop.f32.mrf.mxu0
        %v1507 = vpop.f32.mrf.mxu0
        %1508 = vdwg.mxu0
        %1509 = vmatprep.subr.bf16.mxu0 %v1435
        %1510 = vmatpush1.bf16.msra.mxu0 %v1434
        %1511 = vmatprep.subr.bf16.mxu0 %v1431
        %1512 = vmatpush1.bf16.msra.mxu0 %v1430
        %1513 = vmatprep.subr.bf16.mxu0 %v1427
        %1514 = vmatpush1.bf16.msra.mxu0 %v1426
        %1515 = vmatprep.subr.bf16.mxu0 %v1423
        %1516 = vmatpush1.bf16.msra.mxu0 %v1422
        %1517 = vmatprep.subr.bf16.mxu0 %v1419
        %1518 = vmatpush1.bf16.msra.mxu0 %v1418
        %1519 = vmatprep.subr.bf16.mxu0 %v1415
        %1520 = vmatpush1.bf16.msra.mxu0 %v1414
        %1521 = vmatprep.subr.bf16.mxu0 %v1411
        %1522 = vmatpush1.bf16.msra.mxu0 %v1410
        %1523 = vmatprep.subr.bf16.mxu0 %v1407
        %1524 = vmatpush1.bf16.msra.mxu0 %v1406
        %1525 = vmatprep.subr.bf16.mxu0 0
        %1526 = vmatpush2.bf16.msra.mxu0 0
        %1527 = vmatprep.subr.bf16.mxu0 0
        %1528 = vmatpush2.bf16.msra.mxu0 0
        %1529 = vmatprep.subr.bf16.mxu0 0
        %1530 = vmatpush2.bf16.msra.mxu0 0
        %1531 = vmatprep.subr.bf16.mxu0 0
        %1532 = vmatpush2.bf16.msra.mxu0 0
        %1533 = vmatprep.subr.bf16.mxu0 0
        %1534 = vmatpush2.bf16.msra.mxu0 0
        %1535 = vmatprep.subr.bf16.mxu0 0
        %1536 = vmatpush2.bf16.msra.mxu0 0
        %1537 = vmatprep.subr.bf16.mxu0 0
        %1538 = vmatpush2.bf16.msra.mxu0 0
        %1539 = vmatprep.subr.bf16.mxu0 0
        %1540 = vmatpush2.bf16.msra.mxu0 0
        %1541 = vmatprep.mubr.bf16.mxu0 0
        %1542 = vmatmul.mubr.bf16.gmra.mxu0 %v1253
        %v1543 = vpop.f32.mrf.mxu0
        %v1544 = vadd.f32 %v1299, %v1543
        %v1545 = vpop.f32.mrf.mxu0
        %v1546 = vadd.f32 %v1303, %v1545
        %v1547 = vpop.f32.mrf.mxu0
        %v1548 = vpop.f32.mrf.mxu0
        %1549 = vdwg.mxu0
        %v1550 = vmul.f32 %v1503, 0.5
        %v1551 = vmul.f32 %v1505, 0.5
        %v1552 = vmul.f32 %v1544, 0.5
        %v1553 = vmul.f32 %v1546, 0.5
        %v1554 = vmul.f32 %v1503, 0.044715
        %v1555 = vmul.f32 %v1505, 0.044715
        %v1556 = vmul.f32 %v1544, 0.044715
        %v1557 = vmul.f32 %v1546, 0.044715
        %v1558 = vmul.f32 %v1554, %v1503
        %v1559 = vmul.f32 %v1555, %v1505
        %v1560 = vmul.f32 %v1556, %v1544
        %v1561 = vmul.f32 %v1557, %v1546
        %v1562 = vmul.f32 %v1558, %v1503
        %v1563 = vmul.f32 %v1559, %v1505
        %v1564 = vmul.f32 %v1560, %v1544
        %v1565 = vmul.f32 %v1561, %v1546
        %v1566 = vadd.f32 %v1503, %v1562
        %v1567 = vadd.f32 %v1505, %v1563
        %v1568 = vadd.f32 %v1544, %v1564
        %v1569 = vadd.f32 %v1546, %v1565
        %v1570 = vmul.f32 %v1566, 0.7978846
        %v1571 = vmul.f32 %v1567, 0.7978846
        %v1572 = vmul.f32 %v1568, 0.7978846
        %v1573 = vmul.f32 %v1569, 0.7978846
        %v1574 = vtanh.pop %v1570
        %v1575 = vtanh.pop %v1571
        %v1576 = vtanh.pop %v1572
        %v1577 = vtanh.pop %v1573
        %v1578 = vadd.f32 %v1574, 1.0
        %v1579 = vadd.f32 %v1575, 1.0
        %v1580 = vadd.f32 %v1576, 1.0
        %v1581 = vadd.f32 %v1577, 1.0
        %v1582 = vmul.f32 %v1550, %v1578
        %v1583 = vmul.f32 %v1551, %v1579
        %v1584 = vmul.f32 %v1552, %v1580
        %v1585 = vmul.f32 %v1553, %v1581
        %v1586 = vpack.c.bf16 %v1582, %v1582
        %v1587 = vpack.c.bf16 %v1583, %v1583
        %v1588 = vpack.c.bf16 %v1584, %v1584
        %v1589 = vpack.c.bf16 %v1585, %v1585
        %v1590 = vld [vmem:[#allocation6] sm:$0xf]
        %v1591 = vld [vmem:[#allocation6 + $0x4] sm:$0xf]
        %v1592 = vld [vmem:[#allocation6 + $0x8] sm:$0xf]
        %v1593 = vld [vmem:[#allocation6 + $0xc] sm:$0xf]
        %v1594 = vld [vmem:[#allocation6 + $0x10] sm:$0xf]
        %v1595 = vld [vmem:[#allocation6 + $0x14] sm:$0xf]
        %v1596 = vld [vmem:[#allocation6 + $0x18] sm:$0xf]
        %v1597 = vld [vmem:[#allocation6 + $0x1c] sm:$0xf]
        %v1598 = vld [vmem:[#allocation6 + $0x20] sm:$0xf]
        %v1599 = vld [vmem:[#allocation6 + $0x24] sm:$0xf]
        %v1600 = vld [vmem:[#allocation6 + $0x28] sm:$0xf]
        %v1601 = vld [vmem:[#allocation6 + $0x2c] sm:$0xf]
        %v1602 = vld [vmem:[#allocation6 + $0x30] sm:$0xf]
        %v1603 = vld [vmem:[#allocation6 + $0x34] sm:$0xf]
        %v1604 = vld [vmem:[#allocation6 + $0x38] sm:$0xf]
        %v1605 = vld [vmem:[#allocation6 + $0x3c] sm:$0xf]
        %v1606 = vld [vmem:[#allocation6 + $0x40] sm:$0xf]
        %v1607 = vld [vmem:[#allocation6 + $0x44] sm:$0xf]
        %v1608 = vld [vmem:[#allocation6 + $0x48] sm:$0xf]
        %v1609 = vld [vmem:[#allocation6 + $0x4c] sm:$0xf]
        %v1610 = vld [vmem:[#allocation6 + $0x50] sm:$0xf]
        %v1611 = vld [vmem:[#allocation6 + $0x54] sm:$0xf]
        %v1612 = vld [vmem:[#allocation6 + $0x58] sm:$0xf]
        %v1613 = vld [vmem:[#allocation6 + $0x5c] sm:$0xf]
        %v1614 = vld [vmem:[#allocation6 + $0x60] sm:$0xf]
        %v1615 = vld [vmem:[#allocation6 + $0x64] sm:$0xf]
        %v1616 = vld [vmem:[#allocation6 + $0x68] sm:$0xf]
        %v1617 = vld [vmem:[#allocation6 + $0x6c] sm:$0xf]
        %v1618 = vld [vmem:[#allocation6 + $0x70] sm:$0xf]
        %v1619 = vld [vmem:[#allocation6 + $0x74] sm:$0xf]
        %v1620 = vld [vmem:[#allocation6 + $0x78] sm:$0xf]
        %v1621 = vld [vmem:[#allocation6 + $0x7c] sm:$0xf]
        %v1622 = vld [vmem:[#allocation6 + $0x80] sm:$0xf]
        %v1623 = vld [vmem:[#allocation6 + $0x84] sm:$0xf]
        %v1624 = vld [vmem:[#allocation6 + $0x88] sm:$0xf]
        %v1625 = vld [vmem:[#allocation6 + $0x8c] sm:$0xf]
        %v1626 = vld [vmem:[#allocation6 + $0x90] sm:$0xf]
        %v1627 = vld [vmem:[#allocation6 + $0x94] sm:$0xf]
        %v1628 = vld [vmem:[#allocation6 + $0x98] sm:$0xf]
        %v1629 = vld [vmem:[#allocation6 + $0x9c] sm:$0xf]
        %v1630 = vld [vmem:[#allocation6 + $0xa0] sm:$0xf]
        %v1631 = vld [vmem:[#allocation6 + $0xa4] sm:$0xf]
        %v1632 = vld [vmem:[#allocation6 + $0xa8] sm:$0xf]
        %v1633 = vld [vmem:[#allocation6 + $0xac] sm:$0xf]
        %v1634 = vld [vmem:[#allocation6 + $0xb0] sm:$0xf]
        %v1635 = vld [vmem:[#allocation6 + $0xb4] sm:$0xf]
        %v1636 = vld [vmem:[#allocation6 + $0xb8] sm:$0xf]
        %v1637 = vld [vmem:[#allocation6 + $0xbc] sm:$0xf]
        %v1638 = vld [vmem:[#allocation6 + $0xc0] sm:$0xf]
        %v1639 = vld [vmem:[#allocation6 + $0xc4] sm:$0xf]
        %v1640 = vld [vmem:[#allocation6 + $0xc8] sm:$0xf]
        %v1641 = vld [vmem:[#allocation6 + $0xcc] sm:$0xf]
        %v1642 = vld [vmem:[#allocation6 + $0xd0] sm:$0xf]
        %v1643 = vld [vmem:[#allocation6 + $0xd4] sm:$0xf]
        %v1644 = vld [vmem:[#allocation6 + $0xd8] sm:$0xf]
        %v1645 = vld [vmem:[#allocation6 + $0xdc] sm:$0xf]
        %v1646 = vld [vmem:[#allocation6 + $0xe0] sm:$0xf]
        %v1647 = vld [vmem:[#allocation6 + $0xe4] sm:$0xf]
        %v1648 = vld [vmem:[#allocation6 + $0xe8] sm:$0xf]
        %v1649 = vld [vmem:[#allocation6 + $0xec] sm:$0xf]
        %v1650 = vld [vmem:[#allocation6 + $0xf0] sm:$0xf]
        %v1651 = vld [vmem:[#allocation6 + $0xf4] sm:$0xf]
        %v1652 = vld [vmem:[#allocation6 + $0xf8] sm:$0xf]
        %v1653 = vld [vmem:[#allocation6 + $0xfc] sm:$0xf]
        %v1718 = vunpack.c.l.b16 %v1590
        %v1719 = vunpack.c.l.b16 %v1591
        %v1720 = vunpack.c.l.b16 %v1592
        %v1721 = vunpack.c.l.b16 %v1593
        %v1722 = vunpack.c.l.b16 %v1594
        %v1723 = vunpack.c.l.b16 %v1595
        %v1724 = vunpack.c.l.b16 %v1596
        %v1725 = vunpack.c.l.b16 %v1597
        %v1726 = vunpack.c.l.b16 %v1598
        %v1727 = vunpack.c.l.b16 %v1599
        %v1728 = vunpack.c.l.b16 %v1600
        %v1729 = vunpack.c.l.b16 %v1601
        %v1730 = vunpack.c.l.b16 %v1602
        %v1731 = vunpack.c.l.b16 %v1603
        %v1732 = vunpack.c.l.b16 %v1604
        %v1733 = vunpack.c.l.b16 %v1605
        %v1734 = vunpack.c.l.b16 %v1606
        %v1735 = vunpack.c.l.b16 %v1607
        %v1736 = vunpack.c.l.b16 %v1608
        %v1737 = vunpack.c.l.b16 %v1609
        %v1738 = vunpack.c.l.b16 %v1610
        %v1739 = vunpack.c.l.b16 %v1611
        %v1740 = vunpack.c.l.b16 %v1612
        %v1741 = vunpack.c.l.b16 %v1613
        %v1742 = vunpack.c.l.b16 %v1614
        %v1743 = vunpack.c.l.b16 %v1615
        %v1744 = vunpack.c.l.b16 %v1616
        %v1745 = vunpack.c.l.b16 %v1617
        %v1746 = vunpack.c.l.b16 %v1618
        %v1747 = vunpack.c.l.b16 %v1619
        %v1748 = vunpack.c.l.b16 %v1620
        %v1749 = vunpack.c.l.b16 %v1621
        %v1750 = vunpack.c.l.b16 %v1622
        %v1751 = vunpack.c.l.b16 %v1623
        %v1752 = vunpack.c.l.b16 %v1624
        %v1753 = vunpack.c.l.b16 %v1625
        %v1754 = vunpack.c.l.b16 %v1626
        %v1755 = vunpack.c.l.b16 %v1627
        %v1756 = vunpack.c.l.b16 %v1628
        %v1757 = vunpack.c.l.b16 %v1629
        %v1758 = vunpack.c.l.b16 %v1630
        %v1759 = vunpack.c.l.b16 %v1631
        %v1760 = vunpack.c.l.b16 %v1632
        %v1761 = vunpack.c.l.b16 %v1633
        %v1762 = vunpack.c.l.b16 %v1634
        %v1763 = vunpack.c.l.b16 %v1635
        %v1764 = vunpack.c.l.b16 %v1636
        %v1765 = vunpack.c.l.b16 %v1637
        %v1766 = vunpack.c.l.b16 %v1638
        %v1767 = vunpack.c.l.b16 %v1639
        %v1768 = vunpack.c.l.b16 %v1640
        %v1769 = vunpack.c.l.b16 %v1641
        %v1770 = vunpack.c.l.b16 %v1642
        %v1771 = vunpack.c.l.b16 %v1643
        %v1772 = vunpack.c.l.b16 %v1644
        %v1773 = vunpack.c.l.b16 %v1645
        %v1774 = vunpack.c.l.b16 %v1646
        %v1775 = vunpack.c.l.b16 %v1647
        %v1776 = vunpack.c.l.b16 %v1648
        %v1777 = vunpack.c.l.b16 %v1649
        %v1778 = vunpack.c.l.b16 %v1650
        %v1779 = vunpack.c.l.b16 %v1651
        %v1780 = vunpack.c.l.b16 %v1652
        %v1781 = vunpack.c.l.b16 %v1653
        %v1782 = vpack.c.b16 %v1719, %v1718
        %v1783 = vpack.c.b16 %v1721, %v1720
        %v1784 = vpack.c.b16 %v1723, %v1722
        %v1785 = vpack.c.b16 %v1725, %v1724
        %v1786 = vpack.c.b16 %v1727, %v1726
        %v1787 = vpack.c.b16 %v1729, %v1728
        %v1788 = vpack.c.b16 %v1731, %v1730
        %v1789 = vpack.c.b16 %v1733, %v1732
        %v1790 = vpack.c.b16 %v1735, %v1734
        %v1791 = vpack.c.b16 %v1737, %v1736
        %v1792 = vpack.c.b16 %v1739, %v1738
        %v1793 = vpack.c.b16 %v1741, %v1740
        %v1794 = vpack.c.b16 %v1743, %v1742
        %v1795 = vpack.c.b16 %v1745, %v1744
        %v1796 = vpack.c.b16 %v1747, %v1746
        %v1797 = vpack.c.b16 %v1749, %v1748
        %v1798 = vpack.c.b16 %v1751, %v1750
        %v1799 = vpack.c.b16 %v1753, %v1752
        %v1800 = vpack.c.b16 %v1755, %v1754
        %v1801 = vpack.c.b16 %v1757, %v1756
        %v1802 = vpack.c.b16 %v1759, %v1758
        %v1803 = vpack.c.b16 %v1761, %v1760
        %v1804 = vpack.c.b16 %v1763, %v1762
        %v1805 = vpack.c.b16 %v1765, %v1764
        %v1806 = vpack.c.b16 %v1767, %v1766
        %v1807 = vpack.c.b16 %v1769, %v1768
        %v1808 = vpack.c.b16 %v1771, %v1770
        %v1809 = vpack.c.b16 %v1773, %v1772
        %v1810 = vpack.c.b16 %v1775, %v1774
        %v1811 = vpack.c.b16 %v1777, %v1776
        %v1812 = vpack.c.b16 %v1779, %v1778
        %v1813 = vpack.c.b16 %v1781, %v1780
        %1846 = vmatprep.subr.bf16.mxu0 0
        %1847 = vmatpush1.bf16.msra.mxu0 %v1789
        %1848 = vmatprep.subr.bf16.mxu0 0
        %1849 = vmatpush1.bf16.msra.mxu0 %v1788
        %1850 = vmatprep.subr.bf16.mxu0 0
        %1851 = vmatpush1.bf16.msra.mxu0 %v1787
        %1852 = vmatprep.subr.bf16.mxu0 0
        %1853 = vmatpush1.bf16.msra.mxu0 %v1786
        %1854 = vmatprep.subr.bf16.mxu0 0
        %1855 = vmatpush1.bf16.msra.mxu0 %v1785
        %1856 = vmatprep.subr.bf16.mxu0 0
        %1857 = vmatpush1.bf16.msra.mxu0 %v1784
        %1858 = vmatprep.subr.bf16.mxu0 0
        %1859 = vmatpush1.bf16.msra.mxu0 %v1783
        %1860 = vmatprep.subr.bf16.mxu0 0
        %1861 = vmatpush1.bf16.msra.mxu0 %v1782
        %1862 = vmatprep.subr.bf16.mxu0 0
        %1863 = vmatpush2.bf16.msra.mxu0 %v1797
        %1864 = vmatprep.subr.bf16.mxu0 0
        %1865 = vmatpush2.bf16.msra.mxu0 %v1796
        %1866 = vmatprep.subr.bf16.mxu0 0
        %1867 = vmatpush2.bf16.msra.mxu0 %v1795
        %1868 = vmatprep.subr.bf16.mxu0 0
        %1869 = vmatpush2.bf16.msra.mxu0 %v1794
        %1870 = vmatprep.subr.bf16.mxu0 0
        %1871 = vmatpush2.bf16.msra.mxu0 %v1793
        %1872 = vmatprep.subr.bf16.mxu0 0
        %1873 = vmatpush2.bf16.msra.mxu0 %v1792
        %1874 = vmatprep.subr.bf16.mxu0 0
        %1875 = vmatpush2.bf16.msra.mxu0 %v1791
        %1876 = vmatprep.subr.bf16.mxu0 0
        %1877 = vmatpush2.bf16.msra.mxu0 %v1790
        %1878 = vmatprep.mubr.bf16.mxu0 %v1587
        %1879 = vmatmul.mubr.bf16.gmra.mxu0 %v1586
        %v1880 = vpop.f32.mrf.mxu0
        %v1881 = vadd.f32 0.0, %v1880
        %v1882 = vpop.f32.mrf.mxu0
        %v1883 = vpop.f32.mrf.mxu0
        %v1884 = vpop.f32.mrf.mxu0
        %1885 = vdwg.mxu0
        %1886 = vmatprep.subr.bf16.mxu0 0
        %1887 = vmatpush1.bf16.msra.mxu0 %v1805
        %1888 = vmatprep.subr.bf16.mxu0 0
        %1889 = vmatpush1.bf16.msra.mxu0 %v1804
        %1890 = vmatprep.subr.bf16.mxu0 0
        %1891 = vmatpush1.bf16.msra.mxu0 %v1803
        %1892 = vmatprep.subr.bf16.mxu0 0
        %1893 = vmatpush1.bf16.msra.mxu0 %v1802
        %1894 = vmatprep.subr.bf16.mxu0 0
        %1895 = vmatpush1.bf16.msra.mxu0 %v1801
        %1896 = vmatprep.subr.bf16.mxu0 0
        %1897 = vmatpush1.bf16.msra.mxu0 %v1800
        %1898 = vmatprep.subr.bf16.mxu0 0
        %1899 = vmatpush1.bf16.msra.mxu0 %v1799
        %1900 = vmatprep.subr.bf16.mxu0 0
        %1901 = vmatpush1.bf16.msra.mxu0 %v1798
        %1902 = vmatprep.subr.bf16.mxu0 0
        %1903 = vmatpush2.bf16.msra.mxu0 %v1813
        %1904 = vmatprep.subr.bf16.mxu0 0
        %1905 = vmatpush2.bf16.msra.mxu0 %v1812
        %1906 = vmatprep.subr.bf16.mxu0 0
        %1907 = vmatpush2.bf16.msra.mxu0 %v1811
        %1908 = vmatprep.subr.bf16.mxu0 0
        %1909 = vmatpush2.bf16.msra.mxu0 %v1810
        %1910 = vmatprep.subr.bf16.mxu0 0
        %1911 = vmatpush2.bf16.msra.mxu0 %v1809
        %1912 = vmatprep.subr.bf16.mxu0 0
        %1913 = vmatpush2.bf16.msra.mxu0 %v1808
        %1914 = vmatprep.subr.bf16.mxu0 0
        %1915 = vmatpush2.bf16.msra.mxu0 %v1807
        %1916 = vmatprep.subr.bf16.mxu0 0
        %1917 = vmatpush2.bf16.msra.mxu0 %v1806
        %1918 = vmatprep.mubr.bf16.mxu0 %v1589
        %1919 = vmatmul.mubr.bf16.gmra.mxu0 %v1588
        %v1920 = vpop.f32.mrf.mxu0
        %v1921 = vadd.f32 %v1881, %v1920
        %v1922 = vpop.f32.mrf.mxu0
        %v1923 = vpop.f32.mrf.mxu0
        %v1924 = vpop.f32.mrf.mxu0
        %1925 = vdwg.mxu0
        %v1926 = vadd.f32 %v1225, %v1921
        %v1927 = vld [vmem:[%s12] sm:$0x1]
        %v1929 = vlaneseq
        %v1930 = vshrl.u32 %v1929, 7
        %v1931 = vsub.s32 0, %v1930
        %v1932 = vrot.slane %v1927, %v1931
        %v1934 = vadd.f32 %v1926, %v1932
        %v1935 = vpack.c.bf16 %v1934, %v1934
        %1936 = vst [vmem:[%s533] sm:$0xf] %v1935
        %p1937 = scmp.lt.s32.totalorder %s28, 1
        %s1938 = scalar_select %p1937, %s28, 1
        %s1939 = smul.addr %s1938, 4
        %s1940 = scalar_lea.vmem %s15, %s1939
        // Predicated region
        $region93: #{_lambda_.3} parent=79 // pred_check
          %p1941 = pneg %p366
        $region94: #{_lambda_.3} parent=79 // pred_check_branch
          %1943 = sbr.rel (%p1941) target = $region96
        $region95: #{_lambda_.3} parent=79 // pred_region
          _
        $region96: #{_lambda_.3} parent=79 // pred_fallthru
          _
      $region80: #{_lambda_.3} parent=5 // pred_fallthru
        _
      %p1944 = scmp.le.s32.totalorder 2, %s23
      // Predicated region
      $region97: #{_lambda_.3} parent=5 // pred_check
        %p1945 = pneg %p1944
      $region98: #{_lambda_.3} parent=5 // pred_check_branch
        %1947 = sbr.rel (%p1945) target = $region100
      $region99: #{_lambda_.3} parent=5 // pred_region
        %s1948 = ssub.s32 %s23, 2
        // Predicated region
        $region101: #{_lambda_.3} parent=99 // pred_check
          %p1949 = pneg %p372
        $region102: #{_lambda_.3} parent=99 // pred_check_branch
          %1951 = sbr.rel (%p1949) target = $region104
        $region103: #{_lambda_.3} parent=99 // pred_region
          %p1952 = scmp.lt.s32.totalorder %s29, 1
          %s1953 = scalar_select %p1952, %s29, 1
          %s1954 = smul.addr %s1953, 4
          %s1955 = scalar_lea.vmem %s15, %s1954
        $region104: #{_lambda_.3} parent=99 // pred_fallthru
          _
      $region100: #{_lambda_.3} parent=5 // pred_fallthru
        _
    $region6: #{_lambda_.3} parent=1 // loop_footer
      %s27 = sadd.s32 1, %s23
    $region7: #{_lambda_.3} parent=1 // loop_footer_branch
      %22 = sbr.rel target = $region3
    $region8: #{_lambda_.3} parent=1 // loop_exit
      _
    %1956 = vsyncpa [#allocation3], 1
    %s1957 = scalar_lea.sflag [#allocation3], 1
    %1958 = vsyncpa %s1957, 1
    %1959 = vsyncpa [#allocation5], 1

</llo_original>
